<compile_context>
chip_gen: v7x
topology: tpu7x:2x2x1
jax: 0.10.0
libtpu: 0.0.40
codegen_flags: <defaults>
</compile_context>

<pallas_src>
import functools

import jax
import jax.numpy as jnp
from jax.experimental import pallas as pl
from jax.experimental.pallas import tpu as pltpu


# Network dimensions implied by the PyTorch module (fc1 expects 32*7*7 -> 28x28 input).
_H = _W = 28
_C_IN = 3
_C1 = 16
_C2 = 32
_D1, _D2, _D3 = 32, 16, 4


# ---------------------------------------------------------------------------
# In-kernel fused Conv3x3('same') + bias + ReLU + MaxPool2x2 on a VMEM tile
# ---------------------------------------------------------------------------
def _conv_relu_pool(x3, wb_ref, brow_ref, bt, hh, ww, cin, cout):
    """x3: (bt, hh, ww*cin) bf16 channel-minor rows.
    wb_ref: (3, ww*cin, ww*cout) bf16 banded weight, output columns permuted as
            [dw, w2, cout] so horizontal pooling is a half-split max.
    brow_ref: (1, ww*cout) f32 bias tiled over ww (same column permutation).
    returns (bt, hh//2, (ww//2)*cout) f32."""
    f32 = jnp.float32
    K = ww * cin
    N = ww * cout
    half = (ww // 2) * cout

    # Vertical 'same' padding: one zero row per image on the narrow Cin-side
    # slab (horizontal padding is already folded into the banded weight).
    zrow = jnp.zeros((bt, 1, K), x3.dtype)
    xp = jnp.concatenate([zrow, x3, zrow], axis=1)            # (bt, hh+2, K)

    acc = jnp.zeros((bt * hh, N), f32)
    for kh in range(3):                                       # 3 accumulated MXU dots
        lhs = xp[:, kh:kh + hh, :].reshape(bt * hh, K)
        acc = acc + jnp.dot(lhs, wb_ref[kh], preferred_element_type=f32)
    acc = jnp.maximum(acc + brow_ref[...], 0.0)               # bias + ReLU in f32

    # 2x2 / stride-2 max pool: dw = max of the two permuted halves, dh = max of
    # row pairs (leading-dim reshapes only -> cheap relayouts).
    hp = jnp.maximum(acc[:, :half], acc[:, half:])            # (bt*hh, half)
    hp = hp.reshape(bt * (hh // 2), 2, half)
    pooled = jnp.maximum(hp[:, 0, :], hp[:, 1, :])            # (bt*(hh//2), half)
    return pooled.reshape(bt, hh // 2, half)


# ---------------------------------------------------------------------------
# Single fused kernel: conv1+pool1 -> conv2+pool2 -> fc1 -> fc2 -> fc3
# ---------------------------------------------------------------------------
def _fused_forward_kernel(x_ref, wb1_ref, b1_ref, wb2_ref, b2_ref,
                          w1_ref, c1_ref, w2_ref, c2_ref, w3_ref, c3_ref,
                          o_ref, *, bt):
    f32 = jnp.float32
    bf16 = jnp.bfloat16

    # Stage 1: (bt, 28, 28*3) -> (bt, 14, 14*16)
    a1 = _conv_relu_pool(x_ref[...], wb1_ref, b1_ref, bt, _H, _W, _C_IN, _C1)
    # Stage 2: (bt, 14, 14*16) -> (bt, 7, 7*32)
    a2 = _conv_relu_pool(a1.astype(bf16), wb2_ref, b2_ref,
                         bt, _H // 2, _W // 2, _C1, _C2)

    # Classifier.  fc1 consumes the (h, w, c)-ordered features by accumulating
    # over the 7 pooled rows against pre-split row blocks of its weight, so no
    # lane-merging flatten reshape is needed in-kernel.
    h = jnp.zeros((bt, _D1), f32)
    for r in range(_H // 4):
        h = h + jnp.dot(a2[:, r, :].astype(bf16), w1_ref[r],
                        preferred_element_type=f32)
    h = jnp.maximum(h + c1_ref[...], 0.0)
    # Dropout(p=0.3): identity at inference.
    # TODO(synk): training-mode stochastic dropout not implemented.
    h = jnp.dot(h.astype(bf16), w2_ref[...], preferred_element_type=f32)
    h = jnp.maximum(h + c2_ref[...], 0.0)
    # Dropout(p=0.3): identity at inference.
    h = jnp.dot(h.astype(bf16), w3_ref[...], preferred_element_type=f32)
    o_ref[0] = (h + c3_ref[...]).astype(o_ref.dtype)


def _pick_batch_tile(batch):
    """Batch tile: large enough to fill MXU rows (Bt*28 rows), but keep >= 2
    grid steps whenever batch >= 2 so both v7x TensorCores get work."""
    if batch <= 1:
        return 1
    return max(1, min(8, batch // 2))


def forward(kp, x_nchw):
    """x_nchw: (B, 3, 28, 28) float32 -> logits (B, 4) float32."""
    B, C, H, W = x_nchw.shape
    assert (C, H, W) == (_C_IN, _H, _W), (C, H, W)

    # NCHW -> channel-minor slab (B, H, W*C) in bf16: the only op outside the
    # single fused pallas_call (tiny: ~9 KB per image).
    x = jnp.transpose(x_nchw, (0, 2, 3, 1)).reshape(B, H, W * C).astype(jnp.bfloat16)

    bt = _pick_batch_tile(B)
    bp = pl.cdiv(B, bt) * bt
    if bp != B:
        x = jnp.pad(x, ((0, bp - B), (0, 0), (0, 0)))
    n_steps = bp // bt

    wb1, b1 = kp["conv1_wb"], kp["conv1_brow"]
    wb2, b2 = kp["conv2_wb"], kp["conv2_brow"]
    w1, c1 = kp["fc1_w"], kp["fc1_b"]
    w2, c2 = kp["fc2_w"], kp["fc2_b"]
    w3, c3 = kp["fc3_w"], kp["fc3_b"]

    def const_spec(arr):
        nd = arr.ndim
        return pl.BlockSpec(arr.shape, lambda n, _nd=nd: (0,) * _nd)

    flops = 2 * bp * (3 * H * (W * C) * (W * _C1)
                      + 3 * (H // 2) * ((W // 2) * _C1) * ((W // 2) * _C2)
                      + (H // 4) * (W // 4) * _C2 * _D1 + _D1 * _D2 + _D2 * _D3)
    bytes_accessed = (2 * (x.size + wb1.size + wb2.size + w1.size + w2.size + w3.size)
                      + 4 * (b1.size + b2.size + c1.size + c2.size + c3.size)
                      + 4 * bp * _D3)

    out = pl.pallas_call(
        functools.partial(_fused_forward_kernel, bt=bt),
        grid=(n_steps,),
        in_specs=[
            pl.BlockSpec((bt, H, W * C), lambda n: (n, 0, 0)),
            const_spec(wb1), const_spec(b1),
            const_spec(wb2), const_spec(b2),
            const_spec(w1), const_spec(c1),
            const_spec(w2), const_spec(c2),
            const_spec(w3), const_spec(c3),
        ],
        out_specs=pl.BlockSpec((1, bt, _D3), lambda n: (n, 0, 0)),
        out_shape=jax.ShapeDtypeStruct((n_steps, bt, _D3), jnp.float32),
        compiler_params=pltpu.CompilerParams(dimension_semantics=("parallel",)),
        cost_estimate=pl.CostEstimate(flops=flops, transcendentals=0,
                                      bytes_accessed=bytes_accessed),
    )(x, wb1, b1, wb2, b2, w1, c1, w2, c2, w3, c3)
    return out.reshape(bp, _D3)[:B]


# ---------------------------------------------------------------------------
# Parameters: synthetic PyTorch-layout init + one-time kernel-layout prep
# ---------------------------------------------------------------------------
def init_params(key):
    """Synthetic params in PyTorch layouts (Conv: OIHW; Linear stored as (in, out) = W^T)."""
    ks = jax.random.split(key, 10)

    def rnd(k, shape, scale):
        return jax.random.normal(k, shape, jnp.float32) * scale

    return {
        "conv1_w": rnd(ks[0], (_C1, _C_IN, 3, 3), 0.15),
        "conv1_b": rnd(ks[1], (_C1,), 0.05),
        "conv2_w": rnd(ks[2], (_C2, _C1, 3, 3), 0.08),
        "conv2_b": rnd(ks[3], (_C2,), 0.05),
        "fc1_w": rnd(ks[4], (_C2 * 7 * 7, _D1), 0.05),   # rows in PyTorch (C,H,W) flatten order
        "fc1_b": rnd(ks[5], (_D1,), 0.05),
        "fc2_w": rnd(ks[6], (_D1, _D2), 0.2),
        "fc2_b": rnd(ks[7], (_D2,), 0.05),
        "fc3_w": rnd(ks[8], (_D2, _D3), 0.5),
        "fc3_b": rnd(ks[9], (_D3,), 0.05),
    }


def _banded_conv_weight(w_oihw, width):
    """Fold the 3x3 window + horizontal 'same' padding into per-kh banded matrices.

    wb[kh, wsrc*Cin + ci, col(wdst, co)] = w_oihw[co, ci, kh, wsrc - wdst + 1]
    for |wsrc - wdst| <= 1, with pool-friendly output column order
    col(w, co) = (w % 2) * (width//2 * Cout) + (w // 2) * Cout + co.
    Out-of-range taps are absent (== zero padding)."""
    Cout, Cin, KH, _ = w_oihw.shape
    W2 = width // 2
    k = jnp.transpose(w_oihw, (2, 3, 1, 0))                  # (KH, KW, Cin, Cout)
    wb = jnp.zeros((KH, width * Cin, width * Cout), w_oihw.dtype)
    for w in range(width):
        w2, dw = w // 2, w % 2
        col0 = dw * (W2 * Cout) + w2 * Cout
        lo, hi = max(w - 1, 0), min(w + 1, width - 1)        # in-range input columns
        blk = k[:, lo - w + 1:hi - w + 2].reshape(KH, (hi - lo + 1) * Cin, Cout)
        wb = wb.at[:, lo * Cin:(hi + 1) * Cin, col0:col0 + Cout].set(blk)
    return wb


def prepare_params(p):
    """One-time re-layout + bf16 cast of the PyTorch-format parameters."""
    bf16, f32 = jnp.bfloat16, jnp.float32
    h2, h4 = _H // 2, _H // 4
    # fc1 rows: PyTorch flattens NCHW -> (C, H, W); the kernel's features are
    # (H, W, C).  Re-permute and pre-split into per-pooled-row blocks.
    fc1 = p["fc1_w"].reshape(_C2, h4, h4, _D1)
    fc1 = jnp.transpose(fc1, (1, 2, 0, 3)).reshape(h4, h4 * _C2, _D1)
    return {
        "conv1_wb": _banded_conv_weight(p["conv1_w"], _W).astype(bf16),
        "conv1_brow": jnp.tile(p["conv1_b"], _W).reshape(1, -1).astype(f32),
        "conv2_wb": _banded_conv_weight(p["conv2_w"], h2).astype(bf16),
        "conv2_brow": jnp.tile(p["conv2_b"], h2).reshape(1, -1).astype(f32),
        "fc1_w": fc1.astype(bf16),
        "fc1_b": p["fc1_b"].reshape(1, -1).astype(f32),
        "fc2_w": p["fc2_w"].astype(bf16),
        "fc2_b": p["fc2_b"].reshape(1, -1).astype(f32),
        "fc3_w": p["fc3_w"].astype(bf16),
        "fc3_b": p["fc3_b"].reshape(1, -1).astype(f32),
    }


# ---------------------------------------------------------------------------
# Pure-JAX reference (same bf16 operands / f32 accumulation) for self-check
# ---------------------------------------------------------------------------
def reference_forward(p, x_nchw):
    f32, bf16 = jnp.float32, jnp.bfloat16

    def conv_relu_pool(x_nhwc, w_oihw, b):
        w_hwio = jnp.transpose(w_oihw, (2, 3, 1, 0)).astype(bf16)
        y = jax.lax.conv_general_dilated(
            x_nhwc.astype(bf16), w_hwio, window_strides=(1, 1), padding="SAME",
            dimension_numbers=("NHWC", "HWIO", "NHWC"),
            preferred_element_type=f32)
        y = jnp.maximum(y + b.astype(f32), 0.0)
        n, hh, ww, cc = y.shape
        return y.reshape(n, hh // 2, 2, ww // 2, 2, cc).max(axis=(2, 4))

    x = jnp.transpose(x_nchw, (0, 2, 3, 1))
    h = conv_relu_pool(x, p["conv1_w"], p["conv1_b"])
    h = conv_relu_pool(h, p["conv2_w"], p["conv2_b"])
    feat = jnp.transpose(h, (0, 3, 1, 2)).reshape(h.shape[0], -1)   # PyTorch NCHW flatten
    h = jnp.maximum(jnp.dot(feat.astype(bf16), p["fc1_w"].astype(bf16),
                            preferred_element_type=f32) + p["fc1_b"], 0.0)
    h = jnp.maximum(jnp.dot(h.astype(bf16), p["fc2_w"].astype(bf16),
                            preferred_element_type=f32) + p["fc2_b"], 0.0)
    return jnp.dot(h.astype(bf16), p["fc3_w"].astype(bf16),
                   preferred_element_type=f32) + p["fc3_b"]


if __name__ == "__main__":
    key = jax.random.PRNGKey(0)
    pkey, xkey = jax.random.split(key)
    params = init_params(pkey)
    kparams = prepare_params(params)

    # Input consistent with the module: 3 channels, 28x28 (-> 32*7*7 after two 2x2 pools).
    x = jax.random.normal(xkey, (2, _C_IN, _H, _W), jnp.float32)

    out = jax.block_until_ready(jax.jit(forward)(kparams, x))
    assert out.shape == (2, _D3), out.shape
    assert bool(jnp.all(jnp.isfinite(out)))

    ref = jax.block_until_ready(jax.jit(reference_forward)(params, x))
    max_err = float(jnp.max(jnp.abs(out - ref)))
    assert max_err < 5e-3, f"kernel/reference mismatch: max abs err = {max_err}"

    print("KERNEL_OK")
</pallas_src>

<mosaic_0001>
module attributes {stable_mosaic.version = 11 : i64} {
  func.func @_fused_forward_kernel(%arg0: i32, %arg1: memref<1x28x84xbf16, #tpu.memory_space<vmem>>, %arg2: memref<3x84x448xbf16, #tpu.memory_space<vmem>>, %arg3: memref<1x448xf32, #tpu.memory_space<vmem>>, %arg4: memref<3x224x448xbf16, #tpu.memory_space<vmem>>, %arg5: memref<1x448xf32, #tpu.memory_space<vmem>>, %arg6: memref<7x224x32xbf16, #tpu.memory_space<vmem>>, %arg7: memref<1x32xf32, #tpu.memory_space<vmem>>, %arg8: memref<32x16xbf16, #tpu.memory_space<vmem>>, %arg9: memref<1x16xf32, #tpu.memory_space<vmem>>, %arg10: memref<16x4xbf16, #tpu.memory_space<vmem>>, %arg11: memref<1x4xf32, #tpu.memory_space<vmem>>, %arg12: memref<1x1x4xf32, #tpu.memory_space<vmem>>) attributes {dimension_semantics = [#tpu.dimension_semantics<parallel>], iteration_bounds = array<i64: 2>, scalar_prefetch = 0 : i64, scratch_operands = 0 : i64, tpu.core_type = #tpu.core_type<tc>, window_params = [{transform_indices = @transform_0, window_bounds = array<i64: 1, 28, 84>}, {pipeline_mode = #tpu.pipeline_mode<synchronous>, transform_indices = @transform_1, window_bounds = array<i64: 3, 84, 448>}, {pipeline_mode = #tpu.pipeline_mode<synchronous>, transform_indices = @transform_2, window_bounds = array<i64: 1, 448>}, {pipeline_mode = #tpu.pipeline_mode<synchronous>, transform_indices = @transform_3, window_bounds = array<i64: 3, 224, 448>}, {pipeline_mode = #tpu.pipeline_mode<synchronous>, transform_indices = @transform_4, window_bounds = array<i64: 1, 448>}, {pipeline_mode = #tpu.pipeline_mode<synchronous>, transform_indices = @transform_5, window_bounds = array<i64: 7, 224, 32>}, {pipeline_mode = #tpu.pipeline_mode<synchronous>, transform_indices = @transform_6, window_bounds = array<i64: 1, 32>}, {pipeline_mode = #tpu.pipeline_mode<synchronous>, transform_indices = @transform_7, window_bounds = array<i64: 32, 16>}, {pipeline_mode = #tpu.pipeline_mode<synchronous>, transform_indices = @transform_8, window_bounds = array<i64: 1, 16>}, {pipeline_mode = #tpu.pipeline_mode<synchronous>, transform_indices = @transform_9, window_bounds = array<i64: 16, 4>}, {pipeline_mode = #tpu.pipeline_mode<synchronous>, transform_indices = @transform_10, window_bounds = array<i64: 1, 4>}, {transform_indices = @transform_11, window_bounds = array<i64: 1, 1, 4>}]} {
    %c0 = arith.constant 0 : index
    %c0_0 = arith.constant 0 : index
    %c0_1 = arith.constant 0 : index
    %0 = vector.load %arg1[%c0, %c0_0, %c0_1] : memref<1x28x84xbf16, #tpu.memory_space<vmem>>, vector<1x28x84xbf16>
    %cst = arith.constant 0.000000e+00 : bf16
    %1 = vector.broadcast %cst : bf16 to vector<1x1x84xbf16>
    %2 = tpu.concatenate %1, %0, %1 in 1 : vector<1x1x84xbf16>, vector<1x28x84xbf16>, vector<1x1x84xbf16> -> vector<1x30x84xbf16>
    %cst_2 = arith.constant 0.000000e+00 : f32
    %3 = vector.broadcast %cst_2 : f32 to vector<28x448xf32>
    %4 = vector.extract_strided_slice %2 {offsets = [0, 0, 0], sizes = [1, 28, 84], strides = [1, 1, 1]} : vector<1x30x84xbf16> to vector<1x28x84xbf16>
    %5 = vector.shape_cast %4 : vector<1x28x84xbf16> to vector<28x84xbf16>
    %c0_3 = arith.constant 0 : index
    %c0_4 = arith.constant 0 : index
    %c0_5 = arith.constant 0 : index
    %6 = vector.load %arg2[%c0_3, %c0_4, %c0_5] : memref<3x84x448xbf16, #tpu.memory_space<vmem>>, vector<1x84x448xbf16>
    %7 = vector.shape_cast %6 : vector<1x84x448xbf16> to vector<84x448xbf16>
    %cst_6 = arith.constant dense<0.000000e+00> : vector<28x448xf32>
    %8 = tpu.matmul %5, %7, %cst_6 {dimension_numbers = #tpu.dot_dimension_numbers<[1], [0], [0], [1], [0, 0, 1, 1], [], []>} : vector<28x84xbf16>, vector<84x448xbf16>, vector<28x448xf32> -> vector<28x448xf32>
    %9 = arith.addf %3, %8 : vector<28x448xf32>
    %10 = vector.extract_strided_slice %2 {offsets = [0, 1, 0], sizes = [1, 28, 84], strides = [1, 1, 1]} : vector<1x30x84xbf16> to vector<1x28x84xbf16>
    %11 = vector.shape_cast %10 : vector<1x28x84xbf16> to vector<28x84xbf16>
    %c1 = arith.constant 1 : index
    %c0_7 = arith.constant 0 : index
    %c0_8 = arith.constant 0 : index
    %12 = vector.load %arg2[%c1, %c0_7, %c0_8] : memref<3x84x448xbf16, #tpu.memory_space<vmem>>, vector<1x84x448xbf16>
    %13 = vector.shape_cast %12 : vector<1x84x448xbf16> to vector<84x448xbf16>
    %cst_9 = arith.constant dense<0.000000e+00> : vector<28x448xf32>
    %14 = tpu.matmul %11, %13, %cst_9 {dimension_numbers = #tpu.dot_dimension_numbers<[1], [0], [0], [1], [0, 0, 1, 1], [], []>} : vector<28x84xbf16>, vector<84x448xbf16>, vector<28x448xf32> -> vector<28x448xf32>
    %15 = arith.addf %9, %14 : vector<28x448xf32>
    %16 = vector.extract_strided_slice %2 {offsets = [0, 2, 0], sizes = [1, 28, 84], strides = [1, 1, 1]} : vector<1x30x84xbf16> to vector<1x28x84xbf16>
    %17 = vector.shape_cast %16 : vector<1x28x84xbf16> to vector<28x84xbf16>
    %c2 = arith.constant 2 : index
    %c0_10 = arith.constant 0 : index
    %c0_11 = arith.constant 0 : index
    %18 = vector.load %arg2[%c2, %c0_10, %c0_11] : memref<3x84x448xbf16, #tpu.memory_space<vmem>>, vector<1x84x448xbf16>
    %19 = vector.shape_cast %18 : vector<1x84x448xbf16> to vector<84x448xbf16>
    %cst_12 = arith.constant dense<0.000000e+00> : vector<28x448xf32>
    %20 = tpu.matmul %17, %19, %cst_12 {dimension_numbers = #tpu.dot_dimension_numbers<[1], [0], [0], [1], [0, 0, 1, 1], [], []>} : vector<28x84xbf16>, vector<84x448xbf16>, vector<28x448xf32> -> vector<28x448xf32>
    %21 = arith.addf %15, %20 : vector<28x448xf32>
    %c0_13 = arith.constant 0 : index
    %c0_14 = arith.constant 0 : index
    %22 = vector.load %arg3[%c0_13, %c0_14] : memref<1x448xf32, #tpu.memory_space<vmem>>, vector<1x448xf32>
    %23 = vector.broadcast %22 : vector<1x448xf32> to vector<28x448xf32>
    %24 = arith.addf %21, %23 : vector<28x448xf32>
    %cst_15 = arith.constant 0.000000e+00 : f32
    %25 = vector.broadcast %cst_15 : f32 to vector<28x448xf32>
    %26 = arith.maximumf %24, %25 : vector<28x448xf32>
    %27 = vector.extract_strided_slice %26 {offsets = [0, 0], sizes = [28, 224], strides = [1, 1]} : vector<28x448xf32> to vector<28x224xf32>
    %28 = vector.extract_strided_slice %26 {offsets = [0, 224], sizes = [28, 224], strides = [1, 1]} : vector<28x448xf32> to vector<28x224xf32>
    %29 = arith.maximumf %27, %28 : vector<28x224xf32>
    %30 = vector.shape_cast %29 : vector<28x224xf32> to vector<14x2x224xf32>
    %31 = vector.extract_strided_slice %30 {offsets = [0, 0, 0], sizes = [14, 1, 224], strides = [1, 1, 1]} : vector<14x2x224xf32> to vector<14x1x224xf32>
    %32 = vector.shape_cast %31 : vector<14x1x224xf32> to vector<14x224xf32>
    %33 = vector.extract_strided_slice %30 {offsets = [0, 1, 0], sizes = [14, 1, 224], strides = [1, 1, 1]} : vector<14x2x224xf32> to vector<14x1x224xf32>
    %34 = vector.shape_cast %33 : vector<14x1x224xf32> to vector<14x224xf32>
    %35 = arith.maximumf %32, %34 : vector<14x224xf32>
    %36 = vector.shape_cast %35 : vector<14x224xf32> to vector<1x14x224xf32>
    %37 = arith.truncf %36 : vector<1x14x224xf32> to vector<1x14x224xbf16>
    %cst_16 = arith.constant 0.000000e+00 : bf16
    %38 = vector.broadcast %cst_16 : bf16 to vector<1x1x224xbf16>
    %39 = tpu.concatenate %38, %37, %38 in 1 : vector<1x1x224xbf16>, vector<1x14x224xbf16>, vector<1x1x224xbf16> -> vector<1x16x224xbf16>
    %cst_17 = arith.constant 0.000000e+00 : f32
    %40 = vector.broadcast %cst_17 : f32 to vector<14x448xf32>
    %41 = vector.extract_strided_slice %39 {offsets = [0, 0, 0], sizes = [1, 14, 224], strides = [1, 1, 1]} : vector<1x16x224xbf16> to vector<1x14x224xbf16>
    %42 = vector.shape_cast %41 : vector<1x14x224xbf16> to vector<14x224xbf16>
    %c0_18 = arith.constant 0 : index
    %c0_19 = arith.constant 0 : index
    %c0_20 = arith.constant 0 : index
    %43 = vector.load %arg4[%c0_18, %c0_19, %c0_20] : memref<3x224x448xbf16, #tpu.memory_space<vmem>>, vector<1x224x448xbf16>
    %44 = vector.shape_cast %43 : vector<1x224x448xbf16> to vector<224x448xbf16>
    %cst_21 = arith.constant dense<0.000000e+00> : vector<14x448xf32>
    %45 = tpu.matmul %42, %44, %cst_21 {dimension_numbers = #tpu.dot_dimension_numbers<[1], [0], [0], [1], [0, 0, 1, 1], [], []>} : vector<14x224xbf16>, vector<224x448xbf16>, vector<14x448xf32> -> vector<14x448xf32>
    %46 = arith.addf %40, %45 : vector<14x448xf32>
    %47 = vector.extract_strided_slice %39 {offsets = [0, 1, 0], sizes = [1, 14, 224], strides = [1, 1, 1]} : vector<1x16x224xbf16> to vector<1x14x224xbf16>
    %48 = vector.shape_cast %47 : vector<1x14x224xbf16> to vector<14x224xbf16>
    %c1_22 = arith.constant 1 : index
    %c0_23 = arith.constant 0 : index
    %c0_24 = arith.constant 0 : index
    %49 = vector.load %arg4[%c1_22, %c0_23, %c0_24] : memref<3x224x448xbf16, #tpu.memory_space<vmem>>, vector<1x224x448xbf16>
    %50 = vector.shape_cast %49 : vector<1x224x448xbf16> to vector<224x448xbf16>
    %cst_25 = arith.constant dense<0.000000e+00> : vector<14x448xf32>
    %51 = tpu.matmul %48, %50, %cst_25 {dimension_numbers = #tpu.dot_dimension_numbers<[1], [0], [0], [1], [0, 0, 1, 1], [], []>} : vector<14x224xbf16>, vector<224x448xbf16>, vector<14x448xf32> -> vector<14x448xf32>
    %52 = arith.addf %46, %51 : vector<14x448xf32>
    %53 = vector.extract_strided_slice %39 {offsets = [0, 2, 0], sizes = [1, 14, 224], strides = [1, 1, 1]} : vector<1x16x224xbf16> to vector<1x14x224xbf16>
    %54 = vector.shape_cast %53 : vector<1x14x224xbf16> to vector<14x224xbf16>
    %c2_26 = arith.constant 2 : index
    %c0_27 = arith.constant 0 : index
    %c0_28 = arith.constant 0 : index
    %55 = vector.load %arg4[%c2_26, %c0_27, %c0_28] : memref<3x224x448xbf16, #tpu.memory_space<vmem>>, vector<1x224x448xbf16>
    %56 = vector.shape_cast %55 : vector<1x224x448xbf16> to vector<224x448xbf16>
    %cst_29 = arith.constant dense<0.000000e+00> : vector<14x448xf32>
    %57 = tpu.matmul %54, %56, %cst_29 {dimension_numbers = #tpu.dot_dimension_numbers<[1], [0], [0], [1], [0, 0, 1, 1], [], []>} : vector<14x224xbf16>, vector<224x448xbf16>, vector<14x448xf32> -> vector<14x448xf32>
    %58 = arith.addf %52, %57 : vector<14x448xf32>
    %c0_30 = arith.constant 0 : index
    %c0_31 = arith.constant 0 : index
    %59 = vector.load %arg5[%c0_30, %c0_31] : memref<1x448xf32, #tpu.memory_space<vmem>>, vector<1x448xf32>
    %60 = vector.broadcast %59 : vector<1x448xf32> to vector<14x448xf32>
    %61 = arith.addf %58, %60 : vector<14x448xf32>
    %cst_32 = arith.constant 0.000000e+00 : f32
    %62 = vector.broadcast %cst_32 : f32 to vector<14x448xf32>
    %63 = arith.maximumf %61, %62 : vector<14x448xf32>
    %64 = vector.extract_strided_slice %63 {offsets = [0, 0], sizes = [14, 224], strides = [1, 1]} : vector<14x448xf32> to vector<14x224xf32>
    %65 = vector.extract_strided_slice %63 {offsets = [0, 224], sizes = [14, 224], strides = [1, 1]} : vector<14x448xf32> to vector<14x224xf32>
    %66 = arith.maximumf %64, %65 : vector<14x224xf32>
    %67 = vector.shape_cast %66 : vector<14x224xf32> to vector<7x2x224xf32>
    %68 = vector.extract_strided_slice %67 {offsets = [0, 0, 0], sizes = [7, 1, 224], strides = [1, 1, 1]} : vector<7x2x224xf32> to vector<7x1x224xf32>
    %69 = vector.shape_cast %68 : vector<7x1x224xf32> to vector<7x224xf32>
    %70 = vector.extract_strided_slice %67 {offsets = [0, 1, 0], sizes = [7, 1, 224], strides = [1, 1, 1]} : vector<7x2x224xf32> to vector<7x1x224xf32>
    %71 = vector.shape_cast %70 : vector<7x1x224xf32> to vector<7x224xf32>
    %72 = arith.maximumf %69, %71 : vector<7x224xf32>
    %73 = vector.shape_cast %72 : vector<7x224xf32> to vector<1x7x224xf32>
    %cst_33 = arith.constant 0.000000e+00 : f32
    %74 = vector.broadcast %cst_33 : f32 to vector<1x32xf32>
    %75 = vector.extract_strided_slice %73 {offsets = [0, 0, 0], sizes = [1, 1, 224], strides = [1, 1, 1]} : vector<1x7x224xf32> to vector<1x1x224xf32>
    %76 = vector.shape_cast %75 : vector<1x1x224xf32> to vector<1x224xf32>
    %77 = arith.truncf %76 : vector<1x224xf32> to vector<1x224xbf16>
    %c0_34 = arith.constant 0 : index
    %c0_35 = arith.constant 0 : index
    %c0_36 = arith.constant 0 : index
    %78 = vector.load %arg6[%c0_34, %c0_35, %c0_36] : memref<7x224x32xbf16, #tpu.memory_space<vmem>>, vector<1x224x32xbf16>
    %79 = vector.shape_cast %78 : vector<1x224x32xbf16> to vector<224x32xbf16>
    %cst_37 = arith.constant dense<0.000000e+00> : vector<1x32xf32>
    %80 = tpu.matmul %77, %79, %cst_37 {dimension_numbers = #tpu.dot_dimension_numbers<[1], [0], [0], [1], [0, 0, 1, 1], [], []>} : vector<1x224xbf16>, vector<224x32xbf16>, vector<1x32xf32> -> vector<1x32xf32>
    %81 = arith.addf %74, %80 : vector<1x32xf32>
    %82 = vector.extract_strided_slice %73 {offsets = [0, 1, 0], sizes = [1, 1, 224], strides = [1, 1, 1]} : vector<1x7x224xf32> to vector<1x1x224xf32>
    %83 = vector.shape_cast %82 : vector<1x1x224xf32> to vector<1x224xf32>
    %84 = arith.truncf %83 : vector<1x224xf32> to vector<1x224xbf16>
    %c1_38 = arith.constant 1 : index
    %c0_39 = arith.constant 0 : index
    %c0_40 = arith.constant 0 : index
    %85 = vector.load %arg6[%c1_38, %c0_39, %c0_40] : memref<7x224x32xbf16, #tpu.memory_space<vmem>>, vector<1x224x32xbf16>
    %86 = vector.shape_cast %85 : vector<1x224x32xbf16> to vector<224x32xbf16>
    %cst_41 = arith.constant dense<0.000000e+00> : vector<1x32xf32>
    %87 = tpu.matmul %84, %86, %cst_41 {dimension_numbers = #tpu.dot_dimension_numbers<[1], [0], [0], [1], [0, 0, 1, 1], [], []>} : vector<1x224xbf16>, vector<224x32xbf16>, vector<1x32xf32> -> vector<1x32xf32>
    %88 = arith.addf %81, %87 : vector<1x32xf32>
    %89 = vector.extract_strided_slice %73 {offsets = [0, 2, 0], sizes = [1, 1, 224], strides = [1, 1, 1]} : vector<1x7x224xf32> to vector<1x1x224xf32>
    %90 = vector.shape_cast %89 : vector<1x1x224xf32> to vector<1x224xf32>
    %91 = arith.truncf %90 : vector<1x224xf32> to vector<1x224xbf16>
    %c2_42 = arith.constant 2 : index
    %c0_43 = arith.constant 0 : index
    %c0_44 = arith.constant 0 : index
    %92 = vector.load %arg6[%c2_42, %c0_43, %c0_44] : memref<7x224x32xbf16, #tpu.memory_space<vmem>>, vector<1x224x32xbf16>
    %93 = vector.shape_cast %92 : vector<1x224x32xbf16> to vector<224x32xbf16>
    %cst_45 = arith.constant dense<0.000000e+00> : vector<1x32xf32>
    %94 = tpu.matmul %91, %93, %cst_45 {dimension_numbers = #tpu.dot_dimension_numbers<[1], [0], [0], [1], [0, 0, 1, 1], [], []>} : vector<1x224xbf16>, vector<224x32xbf16>, vector<1x32xf32> -> vector<1x32xf32>
    %95 = arith.addf %88, %94 : vector<1x32xf32>
    %96 = vector.extract_strided_slice %73 {offsets = [0, 3, 0], sizes = [1, 1, 224], strides = [1, 1, 1]} : vector<1x7x224xf32> to vector<1x1x224xf32>
    %97 = vector.shape_cast %96 : vector<1x1x224xf32> to vector<1x224xf32>
    %98 = arith.truncf %97 : vector<1x224xf32> to vector<1x224xbf16>
    %c3 = arith.constant 3 : index
    %c0_46 = arith.constant 0 : index
    %c0_47 = arith.constant 0 : index
    %99 = vector.load %arg6[%c3, %c0_46, %c0_47] : memref<7x224x32xbf16, #tpu.memory_space<vmem>>, vector<1x224x32xbf16>
    %100 = vector.shape_cast %99 : vector<1x224x32xbf16> to vector<224x32xbf16>
    %cst_48 = arith.constant dense<0.000000e+00> : vector<1x32xf32>
    %101 = tpu.matmul %98, %100, %cst_48 {dimension_numbers = #tpu.dot_dimension_numbers<[1], [0], [0], [1], [0, 0, 1, 1], [], []>} : vector<1x224xbf16>, vector<224x32xbf16>, vector<1x32xf32> -> vector<1x32xf32>
    %102 = arith.addf %95, %101 : vector<1x32xf32>
    %103 = vector.extract_strided_slice %73 {offsets = [0, 4, 0], sizes = [1, 1, 224], strides = [1, 1, 1]} : vector<1x7x224xf32> to vector<1x1x224xf32>
    %104 = vector.shape_cast %103 : vector<1x1x224xf32> to vector<1x224xf32>
    %105 = arith.truncf %104 : vector<1x224xf32> to vector<1x224xbf16>
    %c4 = arith.constant 4 : index
    %c0_49 = arith.constant 0 : index
    %c0_50 = arith.constant 0 : index
    %106 = vector.load %arg6[%c4, %c0_49, %c0_50] : memref<7x224x32xbf16, #tpu.memory_space<vmem>>, vector<1x224x32xbf16>
    %107 = vector.shape_cast %106 : vector<1x224x32xbf16> to vector<224x32xbf16>
    %cst_51 = arith.constant dense<0.000000e+00> : vector<1x32xf32>
    %108 = tpu.matmul %105, %107, %cst_51 {dimension_numbers = #tpu.dot_dimension_numbers<[1], [0], [0], [1], [0, 0, 1, 1], [], []>} : vector<1x224xbf16>, vector<224x32xbf16>, vector<1x32xf32> -> vector<1x32xf32>
    %109 = arith.addf %102, %108 : vector<1x32xf32>
    %110 = vector.extract_strided_slice %73 {offsets = [0, 5, 0], sizes = [1, 1, 224], strides = [1, 1, 1]} : vector<1x7x224xf32> to vector<1x1x224xf32>
    %111 = vector.shape_cast %110 : vector<1x1x224xf32> to vector<1x224xf32>
    %112 = arith.truncf %111 : vector<1x224xf32> to vector<1x224xbf16>
    %c5 = arith.constant 5 : index
    %c0_52 = arith.constant 0 : index
    %c0_53 = arith.constant 0 : index
    %113 = vector.load %arg6[%c5, %c0_52, %c0_53] : memref<7x224x32xbf16, #tpu.memory_space<vmem>>, vector<1x224x32xbf16>
    %114 = vector.shape_cast %113 : vector<1x224x32xbf16> to vector<224x32xbf16>
    %cst_54 = arith.constant dense<0.000000e+00> : vector<1x32xf32>
    %115 = tpu.matmul %112, %114, %cst_54 {dimension_numbers = #tpu.dot_dimension_numbers<[1], [0], [0], [1], [0, 0, 1, 1], [], []>} : vector<1x224xbf16>, vector<224x32xbf16>, vector<1x32xf32> -> vector<1x32xf32>
    %116 = arith.addf %109, %115 : vector<1x32xf32>
    %117 = vector.extract_strided_slice %73 {offsets = [0, 6, 0], sizes = [1, 1, 224], strides = [1, 1, 1]} : vector<1x7x224xf32> to vector<1x1x224xf32>
    %118 = vector.shape_cast %117 : vector<1x1x224xf32> to vector<1x224xf32>
    %119 = arith.truncf %118 : vector<1x224xf32> to vector<1x224xbf16>
    %c6 = arith.constant 6 : index
    %c0_55 = arith.constant 0 : index
    %c0_56 = arith.constant 0 : index
    %120 = vector.load %arg6[%c6, %c0_55, %c0_56] : memref<7x224x32xbf16, #tpu.memory_space<vmem>>, vector<1x224x32xbf16>
    %121 = vector.shape_cast %120 : vector<1x224x32xbf16> to vector<224x32xbf16>
    %cst_57 = arith.constant dense<0.000000e+00> : vector<1x32xf32>
    %122 = tpu.matmul %119, %121, %cst_57 {dimension_numbers = #tpu.dot_dimension_numbers<[1], [0], [0], [1], [0, 0, 1, 1], [], []>} : vector<1x224xbf16>, vector<224x32xbf16>, vector<1x32xf32> -> vector<1x32xf32>
    %123 = arith.addf %116, %122 : vector<1x32xf32>
    %c0_58 = arith.constant 0 : index
    %c0_59 = arith.constant 0 : index
    %124 = vector.load %arg7[%c0_58, %c0_59] : memref<1x32xf32, #tpu.memory_space<vmem>>, vector<1x32xf32>
    %125 = arith.addf %123, %124 : vector<1x32xf32>
    %cst_60 = arith.constant 0.000000e+00 : f32
    %126 = vector.broadcast %cst_60 : f32 to vector<1x32xf32>
    %127 = arith.maximumf %125, %126 : vector<1x32xf32>
    %128 = arith.truncf %127 : vector<1x32xf32> to vector<1x32xbf16>
    %c0_61 = arith.constant 0 : index
    %c0_62 = arith.constant 0 : index
    %129 = vector.load %arg8[%c0_61, %c0_62] : memref<32x16xbf16, #tpu.memory_space<vmem>>, vector<32x16xbf16>
    %cst_63 = arith.constant dense<0.000000e+00> : vector<1x16xf32>
    %130 = tpu.matmul %128, %129, %cst_63 {dimension_numbers = #tpu.dot_dimension_numbers<[1], [0], [0], [1], [0, 0, 1, 1], [], []>} : vector<1x32xbf16>, vector<32x16xbf16>, vector<1x16xf32> -> vector<1x16xf32>
    %c0_64 = arith.constant 0 : index
    %c0_65 = arith.constant 0 : index
    %131 = vector.load %arg9[%c0_64, %c0_65] : memref<1x16xf32, #tpu.memory_space<vmem>>, vector<1x16xf32>
    %132 = arith.addf %130, %131 : vector<1x16xf32>
    %cst_66 = arith.constant 0.000000e+00 : f32
    %133 = vector.broadcast %cst_66 : f32 to vector<1x16xf32>
    %134 = arith.maximumf %132, %133 : vector<1x16xf32>
    %135 = arith.truncf %134 : vector<1x16xf32> to vector<1x16xbf16>
    %c0_67 = arith.constant 0 : index
    %c0_68 = arith.constant 0 : index
    %136 = vector.load %arg10[%c0_67, %c0_68] : memref<16x4xbf16, #tpu.memory_space<vmem>>, vector<16x4xbf16>
    %cst_69 = arith.constant dense<0.000000e+00> : vector<1x4xf32>
    %137 = tpu.matmul %135, %136, %cst_69 {dimension_numbers = #tpu.dot_dimension_numbers<[1], [0], [0], [1], [0, 0, 1, 1], [], []>} : vector<1x16xbf16>, vector<16x4xbf16>, vector<1x4xf32> -> vector<1x4xf32>
    %c0_70 = arith.constant 0 : index
    %c0_71 = arith.constant 0 : index
    %138 = vector.load %arg11[%c0_70, %c0_71] : memref<1x4xf32, #tpu.memory_space<vmem>>, vector<1x4xf32>
    %139 = arith.addf %137, %138 : vector<1x4xf32>
    %c0_72 = arith.constant 0 : index
    %c0_73 = arith.constant 0 : index
    %c0_74 = arith.constant 0 : index
    %140 = vector.load %arg12[%c0_72, %c0_73, %c0_74] : memref<1x1x4xf32, #tpu.memory_space<vmem>>, vector<1x1x4xf32>
    %141 = vector.shape_cast %140 : vector<1x1x4xf32> to vector<1x4xf32>
    %142 = vector.shape_cast %139 : vector<1x4xf32> to vector<1x1x4xf32>
    tpu.vector_store %arg12[%c0_72, %c0_73, %c0_74], %142 {strides = array<i32>} : memref<1x1x4xf32, #tpu.memory_space<vmem>>, vector<1x1x4xf32>,
    return
  }
  func.func @transform_0(%arg0: i32) -> (i32, i32, i32) {
    %c0_i32 = arith.constant 0 : i32
    %c0_i32_0 = arith.constant 0 : i32
    %c0_i32_1 = arith.constant 0 : i32
    return %arg0, %c0_i32, %c0_i32_0 : i32, i32, i32
  }
  func.func @transform_1(%arg0: i32) -> (i32, i32, i32) {
    %c0_i32 = arith.constant 0 : i32
    %c0_i32_0 = arith.constant 0 : i32
    %c0_i32_1 = arith.constant 0 : i32
    %c0_i32_2 = arith.constant 0 : i32
    return %c0_i32, %c0_i32_0, %c0_i32_1 : i32, i32, i32
  }
  func.func @transform_2(%arg0: i32) -> (i32, i32) {
    %c0_i32 = arith.constant 0 : i32
    %c0_i32_0 = arith.constant 0 : i32
    %c0_i32_1 = arith.constant 0 : i32
    return %c0_i32, %c0_i32_0 : i32, i32
  }
  func.func @transform_3(%arg0: i32) -> (i32, i32, i32) {
    %c0_i32 = arith.constant 0 : i32
    %c0_i32_0 = arith.constant 0 : i32
    %c0_i32_1 = arith.constant 0 : i32
    %c0_i32_2 = arith.constant 0 : i32
    return %c0_i32, %c0_i32_0, %c0_i32_1 : i32, i32, i32
  }
  func.func @transform_4(%arg0: i32) -> (i32, i32) {
    %c0_i32 = arith.constant 0 : i32
    %c0_i32_0 = arith.constant 0 : i32
    %c0_i32_1 = arith.constant 0 : i32
    return %c0_i32, %c0_i32_0 : i32, i32
  }
  func.func @transform_5(%arg0: i32) -> (i32, i32, i32) {
    %c0_i32 = arith.constant 0 : i32
    %c0_i32_0 = arith.constant 0 : i32
    %c0_i32_1 = arith.constant 0 : i32
    %c0_i32_2 = arith.constant 0 : i32
    return %c0_i32, %c0_i32_0, %c0_i32_1 : i32, i32, i32
  }
  func.func @transform_6(%arg0: i32) -> (i32, i32) {
    %c0_i32 = arith.constant 0 : i32
    %c0_i32_0 = arith.constant 0 : i32
    %c0_i32_1 = arith.constant 0 : i32
    return %c0_i32, %c0_i32_0 : i32, i32
  }
  func.func @transform_7(%arg0: i32) -> (i32, i32) {
    %c0_i32 = arith.constant 0 : i32
    %c0_i32_0 = arith.constant 0 : i32
    %c0_i32_1 = arith.constant 0 : i32
    return %c0_i32, %c0_i32_0 : i32, i32
  }
  func.func @transform_8(%arg0: i32) -> (i32, i32) {
    %c0_i32 = arith.constant 0 : i32
    %c0_i32_0 = arith.constant 0 : i32
    %c0_i32_1 = arith.constant 0 : i32
    return %c0_i32, %c0_i32_0 : i32, i32
  }
  func.func @transform_9(%arg0: i32) -> (i32, i32) {
    %c0_i32 = arith.constant 0 : i32
    %c0_i32_0 = arith.constant 0 : i32
    %c0_i32_1 = arith.constant 0 : i32
    return %c0_i32, %c0_i32_0 : i32, i32
  }
  func.func @transform_10(%arg0: i32) -> (i32, i32) {
    %c0_i32 = arith.constant 0 : i32
    %c0_i32_0 = arith.constant 0 : i32
    %c0_i32_1 = arith.constant 0 : i32
    return %c0_i32, %c0_i32_0 : i32, i32
  }
  func.func @transform_11(%arg0: i32) -> (i32, i32, i32) {
    %c0_i32 = arith.constant 0 : i32
    %c0_i32_0 = arith.constant 0 : i32
    %c0_i32_1 = arith.constant 0 : i32
    return %arg0, %c0_i32, %c0_i32_0 : i32, i32, i32
  }
}

</mosaic_0001>

<llo_original>
// kernel: forward.1
$region0: #{forward.1}
  #allocation0 [shape = 'u32[]', space=smem, size = 0x4, offset = 0x4, fixed_abs, tag = 'smem constant byte address 0x4 - core index']
  #allocation1 [shape = 'u32[144,128]{1,0:T(1,128)}', space=vmem, size = 0x12000, scoped, tag = 'internal scratch']
  %s0 = inlined_call_operand.vmem [shape: bf16[2,28,84], index: 0, kind: input, shape index: {}]
  %s1 = inlined_call_operand.hbm [shape: bf16[3,84,448], index: 1, kind: input, shape index: {}]
  %s2 = inlined_call_operand.vmem [shape: f32[1,448], index: 2, kind: input, shape index: {}]
  %s3 = inlined_call_operand.vmem [shape: bf16[3,224,448], index: 3, kind: input, shape index: {}]
  %s4 = inlined_call_operand.vmem [shape: f32[1,448], index: 4, kind: input, shape index: {}]
  %s5 = inlined_call_operand.vmem [shape: bf16[7,224,32], index: 5, kind: input, shape index: {}]
  %s6 = inlined_call_operand.vmem [shape: f32[1,32], index: 6, kind: input, shape index: {}]
  %s7 = inlined_call_operand.vmem [shape: bf16[32,16], index: 7, kind: input, shape index: {}]
  %s8 = inlined_call_operand.vmem [shape: f32[1,16], index: 8, kind: input, shape index: {}]
  %s9 = inlined_call_operand.vmem [shape: bf16[16,4], index: 9, kind: input, shape index: {}]
  %s10 = inlined_call_operand.vmem [shape: f32[1,4], index: 10, kind: input, shape index: {}]
  %s11 = inlined_call_operand.hbm [shape: f32[2,1,4], index: 11, kind: output, shape index: {}]
  %s12 = sld [smem:[#allocation0]]
  $region81: #{forward.1} parent=0
    _
  %s14 = ssub.s32 1, %s12
  %s15 = scalar_select 0, %s14, %s12
  $region1: #{forward.1} parent=0
    #allocation2 [shape = 'u8[270336]{0}', space=vmem, size = 0x42000, scoped, tag = 'input window, operand 1, single buffered']
    #allocation3 [shape = 's32[2]{0}', space=sflag, size = 0x8, scoped, tag = 'scoped memory for forward.1']
    #allocation4 [shape = 's32[2]{0}', space=sflag, size = 0x8, scoped, tag = 'scoped memory for forward.1']
    #allocation5 [shape = 'u8[1024]{0}', space=vmem, size = 0x400, scoped, tag = 'output window, operand 0']
    %16 = vsyncpa [#allocation3], 0
    %17 = vsyncpa [#allocation4], 0
    %s18 = scalar_lea.sflag [#allocation4], 1
    %19 = vsyncpa %s18, 0
    loop: start=0, step=1, limit=4
    $region2: #{forward.1} parent=1 // loop_pre_header
      _
    $region3: #{forward.1} parent=1 // loop_header
      %s21 = sphi 0, %s25
      %p22 = scmp.ge.s32.totalorder %s21, 4
      %s31 = sphi 0, %s33
      %s34 = sphi 0, %s31
      %s35 = sphi 0, %s34
      %s51 = sphi 0, %s35
      %s55 = sphi 0, %s55
      %s57 = sphi 0, %s55
      %s58 = sphi 0, %s57
      %s72 = sphi 0, %s58
      %s76 = sphi 0, %s76
      %s78 = sphi 0, %s76
      %s79 = sphi 0, %s78
      %s93 = sphi 0, %s79
      %s97 = sphi 0, %s97
      %s99 = sphi 0, %s97
      %s100 = sphi 0, %s99
      %s114 = sphi 0, %s100
      %s118 = sphi 0, %s118
      %s120 = sphi 0, %s118
      %s121 = sphi 0, %s120
      %s135 = sphi 0, %s121
      %s139 = sphi 0, %s139
      %s141 = sphi 0, %s139
      %s142 = sphi 0, %s141
      %s156 = sphi 0, %s142
      %s160 = sphi 0, %s160
      %s162 = sphi 0, %s160
      %s163 = sphi 0, %s162
      %s177 = sphi 0, %s163
      %s181 = sphi 0, %s181
      %s183 = sphi 0, %s181
      %s184 = sphi 0, %s183
      %s198 = sphi 0, %s184
      %s202 = sphi 0, %s202
      %s204 = sphi 0, %s202
      %s205 = sphi 0, %s204
      %s219 = sphi 0, %s205
      %s223 = sphi 0, %s223
      %s225 = sphi 0, %s223
      %s226 = sphi 0, %s225
      %s240 = sphi 0, %s226
      %s244 = sphi 0, %s244
      %s246 = sphi 0, %s244
      %s247 = sphi 0, %s246
      %s261 = sphi 0, %s247
      %s267 = sphi 0, %s269
      %s270 = sphi 0, %s267
      %s271 = sphi 0, %s270
      %s287 = sphi 0, %s271
    $region4: #{forward.1} parent=1 // loop_header_branch
      %24 = sbr.rel (%p22) target = $region8
    $region5: #{forward.1} parent=1 // loop_body
      %s26 = ssub.s32 %s21, 1
      %s27 = ssub.s32 %s21, 2
      %s28 = sadd.s32 %s21, 1
      %s29 = ssub.s32 %s21, %s28
      %p30 = scmp.eq.s32.totalorder %s29, 0
      %s32 = sadd.s32 %s31, 1
      %s33 = scalar_select %p30, %s31, %s32
      %p36 = pneg %p30
      %p37 = scmp.eq.s32.totalorder %s21, 1
      %p38 = por %p36, %p37
      %p39 = scmp.ne.s32.totalorder %s31, %s34
      %p40 = scmp.eq.s32.totalorder %s21, 0
      %p41 = por %p39, %p40
      %p42 = scmp.ne.s32.totalorder %s31, %s34
      %p43 = scmp.eq.s32.totalorder %s26, 1
      %p44 = por %p42, %p43
      %p45 = scmp.ne.s32.totalorder %s34, %s35
      %p46 = scmp.eq.s32.totalorder %s26, 0
      %p47 = por %p45, %p46
      %p48 = scmp.ne.s32.totalorder %s34, %s35
      %p49 = scmp.eq.s32.totalorder %s27, 1
      %p50 = por %p48, %p49
      %p52 = scmp.ne.s32.totalorder %s35, %s51
      %p53 = scmp.eq.s32.totalorder %s27, 0
      %p54 = por %p52, %p53
      %s56 = sadd.s32 %s55, 1
      %p59 = scmp.eq.s32.totalorder %s21, 1
      %p60 = scmp.ne.s32.totalorder %s55, %s57
      %p61 = scmp.eq.s32.totalorder %s21, 0
      %p62 = por %p60, %p61
      %p63 = scmp.ne.s32.totalorder %s55, %s57
      %p64 = scmp.eq.s32.totalorder %s26, 1
      %p65 = por %p63, %p64
      %p66 = scmp.ne.s32.totalorder %s57, %s58
      %p67 = scmp.eq.s32.totalorder %s26, 0
      %p68 = por %p66, %p67
      %p69 = scmp.ne.s32.totalorder %s57, %s58
      %p70 = scmp.eq.s32.totalorder %s27, 1
      %p71 = por %p69, %p70
      %p73 = scmp.ne.s32.totalorder %s58, %s72
      %p74 = scmp.eq.s32.totalorder %s27, 0
      %p75 = por %p73, %p74
      %s77 = sadd.s32 %s76, 1
      %p80 = scmp.eq.s32.totalorder %s21, 1
      %p81 = scmp.ne.s32.totalorder %s76, %s78
      %p82 = scmp.eq.s32.totalorder %s21, 0
      %p83 = por %p81, %p82
      %p84 = scmp.ne.s32.totalorder %s76, %s78
      %p85 = scmp.eq.s32.totalorder %s26, 1
      %p86 = por %p84, %p85
      %p87 = scmp.ne.s32.totalorder %s78, %s79
      %p88 = scmp.eq.s32.totalorder %s26, 0
      %p89 = por %p87, %p88
      %p90 = scmp.ne.s32.totalorder %s78, %s79
      %p91 = scmp.eq.s32.totalorder %s27, 1
      %p92 = por %p90, %p91
      %p94 = scmp.ne.s32.totalorder %s79, %s93
      %p95 = scmp.eq.s32.totalorder %s27, 0
      %p96 = por %p94, %p95
      %s98 = sadd.s32 %s97, 1
      %p101 = scmp.eq.s32.totalorder %s21, 1
      %p102 = scmp.ne.s32.totalorder %s97, %s99
      %p103 = scmp.eq.s32.totalorder %s21, 0
      %p104 = por %p102, %p103
      %p105 = scmp.ne.s32.totalorder %s97, %s99
      %p106 = scmp.eq.s32.totalorder %s26, 1
      %p107 = por %p105, %p106
      %p108 = scmp.ne.s32.totalorder %s99, %s100
      %p109 = scmp.eq.s32.totalorder %s26, 0
      %p110 = por %p108, %p109
      %p111 = scmp.ne.s32.totalorder %s99, %s100
      %p112 = scmp.eq.s32.totalorder %s27, 1
      %p113 = por %p111, %p112
      %p115 = scmp.ne.s32.totalorder %s100, %s114
      %p116 = scmp.eq.s32.totalorder %s27, 0
      %p117 = por %p115, %p116
      %s119 = sadd.s32 %s118, 1
      %p122 = scmp.eq.s32.totalorder %s21, 1
      %p123 = scmp.ne.s32.totalorder %s118, %s120
      %p124 = scmp.eq.s32.totalorder %s21, 0
      %p125 = por %p123, %p124
      %p126 = scmp.ne.s32.totalorder %s118, %s120
      %p127 = scmp.eq.s32.totalorder %s26, 1
      %p128 = por %p126, %p127
      %p129 = scmp.ne.s32.totalorder %s120, %s121
      %p130 = scmp.eq.s32.totalorder %s26, 0
      %p131 = por %p129, %p130
      %p132 = scmp.ne.s32.totalorder %s120, %s121
      %p133 = scmp.eq.s32.totalorder %s27, 1
      %p134 = por %p132, %p133
      %p136 = scmp.ne.s32.totalorder %s121, %s135
      %p137 = scmp.eq.s32.totalorder %s27, 0
      %p138 = por %p136, %p137
      %s140 = sadd.s32 %s139, 1
      %p143 = scmp.eq.s32.totalorder %s21, 1
      %p144 = scmp.ne.s32.totalorder %s139, %s141
      %p145 = scmp.eq.s32.totalorder %s21, 0
      %p146 = por %p144, %p145
      %p147 = scmp.ne.s32.totalorder %s139, %s141
      %p148 = scmp.eq.s32.totalorder %s26, 1
      %p149 = por %p147, %p148
      %p150 = scmp.ne.s32.totalorder %s141, %s142
      %p151 = scmp.eq.s32.totalorder %s26, 0
      %p152 = por %p150, %p151
      %p153 = scmp.ne.s32.totalorder %s141, %s142
      %p154 = scmp.eq.s32.totalorder %s27, 1
      %p155 = por %p153, %p154
      %p157 = scmp.ne.s32.totalorder %s142, %s156
      %p158 = scmp.eq.s32.totalorder %s27, 0
      %p159 = por %p157, %p158
      %s161 = sadd.s32 %s160, 1
      %p164 = scmp.eq.s32.totalorder %s21, 1
      %p165 = scmp.ne.s32.totalorder %s160, %s162
      %p166 = scmp.eq.s32.totalorder %s21, 0
      %p167 = por %p165, %p166
      %p168 = scmp.ne.s32.totalorder %s160, %s162
      %p169 = scmp.eq.s32.totalorder %s26, 1
      %p170 = por %p168, %p169
      %p171 = scmp.ne.s32.totalorder %s162, %s163
      %p172 = scmp.eq.s32.totalorder %s26, 0
      %p173 = por %p171, %p172
      %p174 = scmp.ne.s32.totalorder %s162, %s163
      %p175 = scmp.eq.s32.totalorder %s27, 1
      %p176 = por %p174, %p175
      %p178 = scmp.ne.s32.totalorder %s163, %s177
      %p179 = scmp.eq.s32.totalorder %s27, 0
      %p180 = por %p178, %p179
      %s182 = sadd.s32 %s181, 1
      %p185 = scmp.eq.s32.totalorder %s21, 1
      %p186 = scmp.ne.s32.totalorder %s181, %s183
      %p187 = scmp.eq.s32.totalorder %s21, 0
      %p188 = por %p186, %p187
      %p189 = scmp.ne.s32.totalorder %s181, %s183
      %p190 = scmp.eq.s32.totalorder %s26, 1
      %p191 = por %p189, %p190
      %p192 = scmp.ne.s32.totalorder %s183, %s184
      %p193 = scmp.eq.s32.totalorder %s26, 0
      %p194 = por %p192, %p193
      %p195 = scmp.ne.s32.totalorder %s183, %s184
      %p196 = scmp.eq.s32.totalorder %s27, 1
      %p197 = por %p195, %p196
      %p199 = scmp.ne.s32.totalorder %s184, %s198
      %p200 = scmp.eq.s32.totalorder %s27, 0
      %p201 = por %p199, %p200
      %s203 = sadd.s32 %s202, 1
      %p206 = scmp.eq.s32.totalorder %s21, 1
      %p207 = scmp.ne.s32.totalorder %s202, %s204
      %p208 = scmp.eq.s32.totalorder %s21, 0
      %p209 = por %p207, %p208
      %p210 = scmp.ne.s32.totalorder %s202, %s204
      %p211 = scmp.eq.s32.totalorder %s26, 1
      %p212 = por %p210, %p211
      %p213 = scmp.ne.s32.totalorder %s204, %s205
      %p214 = scmp.eq.s32.totalorder %s26, 0
      %p215 = por %p213, %p214
      %p216 = scmp.ne.s32.totalorder %s204, %s205
      %p217 = scmp.eq.s32.totalorder %s27, 1
      %p218 = por %p216, %p217
      %p220 = scmp.ne.s32.totalorder %s205, %s219
      %p221 = scmp.eq.s32.totalorder %s27, 0
      %p222 = por %p220, %p221
      %s224 = sadd.s32 %s223, 1
      %p227 = scmp.eq.s32.totalorder %s21, 1
      %p228 = scmp.ne.s32.totalorder %s223, %s225
      %p229 = scmp.eq.s32.totalorder %s21, 0
      %p230 = por %p228, %p229
      %p231 = scmp.ne.s32.totalorder %s223, %s225
      %p232 = scmp.eq.s32.totalorder %s26, 1
      %p233 = por %p231, %p232
      %p234 = scmp.ne.s32.totalorder %s225, %s226
      %p235 = scmp.eq.s32.totalorder %s26, 0
      %p236 = por %p234, %p235
      %p237 = scmp.ne.s32.totalorder %s225, %s226
      %p238 = scmp.eq.s32.totalorder %s27, 1
      %p239 = por %p237, %p238
      %p241 = scmp.ne.s32.totalorder %s226, %s240
      %p242 = scmp.eq.s32.totalorder %s27, 0
      %p243 = por %p241, %p242
      %s245 = sadd.s32 %s244, 1
      %p248 = scmp.eq.s32.totalorder %s21, 1
      %p249 = scmp.ne.s32.totalorder %s244, %s246
      %p250 = scmp.eq.s32.totalorder %s21, 0
      %p251 = por %p249, %p250
      %p252 = scmp.ne.s32.totalorder %s244, %s246
      %p253 = scmp.eq.s32.totalorder %s26, 1
      %p254 = por %p252, %p253
      %p255 = scmp.ne.s32.totalorder %s246, %s247
      %p256 = scmp.eq.s32.totalorder %s26, 0
      %p257 = por %p255, %p256
      %p258 = scmp.ne.s32.totalorder %s246, %s247
      %p259 = scmp.eq.s32.totalorder %s27, 1
      %p260 = por %p258, %p259
      %p262 = scmp.ne.s32.totalorder %s247, %s261
      %p263 = scmp.eq.s32.totalorder %s27, 0
      %p264 = por %p262, %p263
      %s265 = ssub.s32 %s21, %s28
      %p266 = scmp.eq.s32.totalorder %s265, 0
      %s268 = sadd.s32 %s267, 1
      %s269 = scalar_select %p266, %s267, %s268
      %p272 = pneg %p266
      %p273 = scmp.eq.s32.totalorder %s21, 1
      %p274 = por %p272, %p273
      %p275 = scmp.ne.s32.totalorder %s267, %s270
      %p276 = scmp.eq.s32.totalorder %s21, 0
      %p277 = por %p275, %p276
      %p278 = scmp.ne.s32.totalorder %s267, %s270
      %p279 = scmp.eq.s32.totalorder %s26, 1
      %p280 = por %p278, %p279
      %p281 = scmp.ne.s32.totalorder %s270, %s271
      %p282 = scmp.eq.s32.totalorder %s26, 0
      %p283 = por %p281, %p282
      %p284 = scmp.ne.s32.totalorder %s270, %s271
      %p285 = scmp.eq.s32.totalorder %s27, 1
      %p286 = por %p284, %p285
      %p288 = scmp.ne.s32.totalorder %s271, %s287
      %p289 = scmp.eq.s32.totalorder %s27, 0
      %p290 = por %p288, %p289
      %p291 = scmp.le.s32.totalorder 1, %s21
      %p292 = scmp.lt.s32.totalorder %s21, 3
      %p293 = pnand %p291, %p292
      %p294 = pneg %p293
      // Predicated region
      $region9: #{forward.1} parent=5 // pred_check
        _
      $region10: #{forward.1} parent=5 // pred_check_branch
        %296 = sbr.rel (%p293) target = $region12
      $region11: #{forward.1} parent=5 // pred_region
        %s297 = ssub.s32 %s21, 1
        // Predicated region
        $region13: #{forward.1} parent=11 // pred_check
          %p298 = pneg %p68
        $region14: #{forward.1} parent=11 // pred_check_branch
          %300 = sbr.rel (%p298) target = $region16
        $region15: #{forward.1} parent=11 // pred_region
          %s302 = ssub.s32 8448, 8448
          %303 = vsyncadd [#allocation3], %s302
          %s304 = sshll.u32 [#allocation2], 4
          %s305 = int_to_ptr.vmem [resolvable:$true] %s304
          %310 = dma.hbm_to_vmem [thread:$0]  %s1, 8448, %s305, [#allocation3], 256, 256, 16
        $region16: #{forward.1} parent=11 // pred_fallthru
          _
        // Predicated region
        $region17: #{forward.1} parent=11 // pred_check
          %p311 = pneg %p89
        $region18: #{forward.1} parent=11 // pred_check_branch
          %313 = sbr.rel (%p311) target = $region20
        $region19: #{forward.1} parent=11 // pred_region
          _
        $region20: #{forward.1} parent=11 // pred_fallthru
          _
        // Predicated region
        $region21: #{forward.1} parent=11 // pred_check
          %p314 = pneg %p110
        $region22: #{forward.1} parent=11 // pred_check_branch
          %316 = sbr.rel (%p314) target = $region24
        $region23: #{forward.1} parent=11 // pred_region
          _
        $region24: #{forward.1} parent=11 // pred_fallthru
          _
        // Predicated region
        $region25: #{forward.1} parent=11 // pred_check
          %p317 = pneg %p131
        $region26: #{forward.1} parent=11 // pred_check_branch
          %319 = sbr.rel (%p317) target = $region28
        $region27: #{forward.1} parent=11 // pred_region
          _
        $region28: #{forward.1} parent=11 // pred_fallthru
          _
        // Predicated region
        $region29: #{forward.1} parent=11 // pred_check
          %p320 = pneg %p152
        $region30: #{forward.1} parent=11 // pred_check_branch
          %322 = sbr.rel (%p320) target = $region32
        $region31: #{forward.1} parent=11 // pred_region
          _
        $region32: #{forward.1} parent=11 // pred_fallthru
          _
        // Predicated region
        $region33: #{forward.1} parent=11 // pred_check
          %p323 = pneg %p173
        $region34: #{forward.1} parent=11 // pred_check_branch
          %325 = sbr.rel (%p323) target = $region36
        $region35: #{forward.1} parent=11 // pred_region
          _
        $region36: #{forward.1} parent=11 // pred_fallthru
          _
        // Predicated region
        $region37: #{forward.1} parent=11 // pred_check
          %p326 = pneg %p194
        $region38: #{forward.1} parent=11 // pred_check_branch
          %328 = sbr.rel (%p326) target = $region40
        $region39: #{forward.1} parent=11 // pred_region
          _
        $region40: #{forward.1} parent=11 // pred_fallthru
          _
        // Predicated region
        $region41: #{forward.1} parent=11 // pred_check
          %p329 = pneg %p215
        $region42: #{forward.1} parent=11 // pred_check_branch
          %331 = sbr.rel (%p329) target = $region44
        $region43: #{forward.1} parent=11 // pred_region
          _
        $region44: #{forward.1} parent=11 // pred_fallthru
          _
        // Predicated region
        $region45: #{forward.1} parent=11 // pred_check
          %p332 = pneg %p236
        $region46: #{forward.1} parent=11 // pred_check_branch
          %334 = sbr.rel (%p332) target = $region48
        $region47: #{forward.1} parent=11 // pred_region
          _
        $region48: #{forward.1} parent=11 // pred_fallthru
          _
        // Predicated region
        $region49: #{forward.1} parent=11 // pred_check
          %p335 = pneg %p257
        $region50: #{forward.1} parent=11 // pred_check_branch
          %337 = sbr.rel (%p335) target = $region52
        $region51: #{forward.1} parent=11 // pred_region
          _
        $region52: #{forward.1} parent=11 // pred_fallthru
          _
      $region12: #{forward.1} parent=5 // pred_fallthru
        _
      %p338 = scmp.lt.s32.totalorder %s21, 2
      // Predicated region
      $region53: #{forward.1} parent=5 // pred_check
        %p339 = pneg %p338
      $region54: #{forward.1} parent=5 // pred_check_branch
        %341 = sbr.rel (%p339) target = $region56
      $region55: #{forward.1} parent=5 // pred_region
        // Predicated region
        $region57: #{forward.1} parent=55 // pred_check
          %p342 = pneg %p41
        $region58: #{forward.1} parent=55 // pred_check_branch
          %344 = sbr.rel (%p342) target = $region60
        $region59: #{forward.1} parent=55 // pred_region
          %p345 = scmp.lt.s32.totalorder %s21, 1
          %s346 = scalar_select %p345, %s21, 1
          %s347 = smul.addr %s346, 4
          %s348 = smul.addr %s347, 4
          %s349 = scalar_lea.vmem %s0, %s348
        $region60: #{forward.1} parent=55 // pred_fallthru
          _
      $region56: #{forward.1} parent=5 // pred_fallthru
        _
      %p350 = scmp.le.s32.totalorder 1, %s21
      %p351 = scmp.lt.s32.totalorder %s21, 3
      %p352 = pnand %p350, %p351
      %p353 = pneg %p352
      // Predicated region
      $region61: #{forward.1} parent=5 // pred_check
        _
      $region62: #{forward.1} parent=5 // pred_check_branch
        %355 = sbr.rel (%p352) target = $region64
      $region63: #{forward.1} parent=5 // pred_region
        %s356 = ssub.s32 %s21, 1
        // Predicated region
        $region65: #{forward.1} parent=63 // pred_check
          %p357 = pneg %p68
        $region66: #{forward.1} parent=63 // pred_check_branch
          %359 = sbr.rel (%p357) target = $region68
        $region67: #{forward.1} parent=63 // pred_region
          %360 = dma.done [#allocation3], 8448
        $region68: #{forward.1} parent=63 // pred_fallthru
          _
        %p361 = scmp.lt.s32.totalorder %s26, 1
        %s362 = scalar_select %p361, %s26, 1
        %s363 = smul.addr %s362, 4
        %s364 = smul.addr %s363, 4
        %s365 = scalar_lea.vmem %s0, %s364
        %p366 = pneg %p47
        %p367 = pneg %p44
        %p368 = pneg %p68
        %p369 = pneg %p65
        %p370 = pneg %p89
        %p371 = pneg %p86
        %p372 = pneg %p110
        %p373 = pneg %p107
        %p374 = pneg %p131
        %p375 = pneg %p128
        %p376 = pneg %p152
        %p377 = pneg %p149
        %p378 = pneg %p173
        %p379 = pneg %p170
        %p380 = pneg %p194
        %p381 = pneg %p191
        %p382 = pneg %p215
        %p383 = pneg %p212
        %p384 = pneg %p236
        %p385 = pneg %p233
        %p386 = pneg %p257
        %p387 = pneg %p254
        %p388 = pneg %p283
        %p389 = pneg %p280
        %s390 = sand.u32 %s270, 1
        %s391 = scalar_lea.sflag [#allocation4], %s390
        %s392 = sand.u32 %s270, 1
        %s393 = scalar_lea.vmem [#allocation5], %s392
        %p394 = scmp.lt.s32.totalorder %s26, 1
        %s395 = scalar_select %p394, %s26, 1
        %s396 = smul.addr %s395, 4
        %s397 = smul.addr %s396, 4
        %s398 = scalar_lea.vmem %s0, %s397
        %v400 = vld [vmem:[%s398] sm:$0xf]
        %v401 = vld [vmem:[%s398 + $0x4] sm:$0xf]
        %v402 = vld [vmem:[%s398 + $0x8] sm:$0xf]
        %v403 = vld [vmem:[%s398 + $0xc] sm:$0x3]
        %v408 = vunpack.c.l.b16 %v400
        %v409 = vunpack.c.l.b16 %v401
        %v410 = vunpack.c.l.b16 %v402
        %v411 = vunpack.c.l.b16 %v403
        %v412 = vpack.c.b16 %v409, %v408
        %v413 = vpack.c.b16 %v411, %v410
        %vm414 = vsmask.f32 256
        %v416 = vshrl.u32 %v412, 16
        %v418 = vrot.slane %v416, 7
        %v419 = vshll.u32 %v412, 16
        %v421 = vor.u32 %v418, %v419
        %v423 = vshrl.u32 %v413, 16
        %v425 = vrot.slane %v423, 7
        %v426 = vshll.u32 %v413, 16
        %v428 = vor.u32 %v425, %v426
        %v429 = vsel %vm414, %v418, %v428
        %vm432 = vcmask 1040384
        %vm433 = vmand %vm432, %vm414
        %v434 = vsel %vm433, 0, %v421
        %vm435 = vcmask 1046528
        %vm436 = vsmask.f32 6400
        %vm437 = vmand %vm435, %vm436
        %v438 = vsel %vm437, %v429, 0
        %v439 = vld [vmem:[#allocation2] sm:$0xff]
        %v440 = vld [vmem:[#allocation2 + $0x8] sm:$0xff]
        %v441 = vld [vmem:[#allocation2 + $0x10] sm:$0xff]
        %v442 = vld [vmem:[#allocation2 + $0x18] sm:$0xff]
        %v443 = vld [vmem:[#allocation2 + $0x20] sm:$0xff]
        %v444 = vld [vmem:[#allocation2 + $0x28] sm:$0xff]
        %v445 = vld [vmem:[#allocation2 + $0x30] sm:$0xff]
        %v446 = vld [vmem:[#allocation2 + $0x38] sm:$0xff]
        %v447 = vld [vmem:[#allocation2 + $0x40] sm:$0xff]
        %v448 = vld [vmem:[#allocation2 + $0x48] sm:$0xff]
        %v449 = vld [vmem:[#allocation2 + $0x50] sm:$0xff]
        %v450 = vld [vmem:[#allocation2 + $0x58] sm:$0xff]
        %v451 = vld [vmem:[#allocation2 + $0x60] sm:$0xff]
        %v452 = vld [vmem:[#allocation2 + $0x68] sm:$0xff]
        %v453 = vld [vmem:[#allocation2 + $0x70] sm:$0xff]
        %v454 = vld [vmem:[#allocation2 + $0x78] sm:$0xff]
        %v455 = vld [vmem:[#allocation2 + $0x80] sm:$0xff]
        %v456 = vld [vmem:[#allocation2 + $0x88] sm:$0xff]
        %v457 = vld [vmem:[#allocation2 + $0x90] sm:$0xff]
        %v458 = vld [vmem:[#allocation2 + $0x98] sm:$0xff]
        %v459 = vld [vmem:[#allocation2 + $0xa0] sm:$0x33]
        %v460 = vld [vmem:[#allocation2 + $0xa8] sm:$0x33]
        %s461 = scalar_lea.vmem [#allocation2], 176
        %v462 = vld [vmem:[%s461] sm:$0xff]
        %v463 = vld [vmem:[%s461 + $0x8] sm:$0xff]
        %v464 = vld [vmem:[%s461 + $0x10] sm:$0xff]
        %v465 = vld [vmem:[%s461 + $0x18] sm:$0xff]
        %v466 = vld [vmem:[%s461 + $0x20] sm:$0xff]
        %v467 = vld [vmem:[%s461 + $0x28] sm:$0xff]
        %v468 = vld [vmem:[%s461 + $0x30] sm:$0xff]
        %v469 = vld [vmem:[%s461 + $0x38] sm:$0xff]
        %v470 = vld [vmem:[%s461 + $0x40] sm:$0xff]
        %v471 = vld [vmem:[%s461 + $0x48] sm:$0xff]
        %v472 = vld [vmem:[%s461 + $0x50] sm:$0xff]
        %v473 = vld [vmem:[%s461 + $0x58] sm:$0xff]
        %v474 = vld [vmem:[%s461 + $0x60] sm:$0xff]
        %v475 = vld [vmem:[%s461 + $0x68] sm:$0xff]
        %v476 = vld [vmem:[%s461 + $0x70] sm:$0xff]
        %v477 = vld [vmem:[%s461 + $0x78] sm:$0xff]
        %v478 = vld [vmem:[%s461 + $0x80] sm:$0xff]
        %v479 = vld [vmem:[%s461 + $0x88] sm:$0xff]
        %v480 = vld [vmem:[%s461 + $0x90] sm:$0xff]
        %v481 = vld [vmem:[%s461 + $0x98] sm:$0xff]
        %v482 = vld [vmem:[%s461 + $0xa0] sm:$0x33]
        %v483 = vld [vmem:[%s461 + $0xa8] sm:$0x33]
        %vm484 = vsmask.f32 7424
        %v486 = vshrl.u32 %v434, 16
        %v488 = vshll.u32 %v434, 16
        %v490 = vrot.slane %v488, 1
        %v491 = vor.u32 %v486, %v490
        %v493 = vshll.u32 %v438, 16
        %v495 = vrot.slane %v493, 1
        %v496 = vsel %vm484, %v491, %v495
        %v497 = vshrl.u32 %v438, 16
        %v499 = vor.u32 %v497, %v495
        %v522 = vunpack.c.l.b16 %v462
        %v523 = vunpack.c.h.b16 %v462
        %v524 = vunpack.c.l.b16 %v463
        %v525 = vunpack.c.h.b16 %v463
        %v526 = vunpack.c.l.b16 %v464
        %v527 = vunpack.c.h.b16 %v464
        %v528 = vunpack.c.l.b16 %v465
        %v529 = vunpack.c.h.b16 %v465
        %v530 = vunpack.c.l.b16 %v466
        %v531 = vunpack.c.h.b16 %v466
        %v532 = vunpack.c.l.b16 %v467
        %v533 = vunpack.c.h.b16 %v467
        %v534 = vunpack.c.l.b16 %v468
        %v535 = vunpack.c.h.b16 %v468
        %v536 = vunpack.c.l.b16 %v469
        %v537 = vunpack.c.h.b16 %v469
        %v538 = vunpack.c.l.b16 %v470
        %v539 = vunpack.c.h.b16 %v470
        %v540 = vunpack.c.l.b16 %v471
        %v541 = vunpack.c.h.b16 %v471
        %v542 = vunpack.c.l.b16 %v472
        %v543 = vunpack.c.h.b16 %v472
        %v544 = vunpack.c.l.b16 %v473
        %v545 = vunpack.c.h.b16 %v473
        %v546 = vunpack.c.l.b16 %v474
        %v547 = vunpack.c.h.b16 %v474
        %v548 = vunpack.c.l.b16 %v475
        %v549 = vunpack.c.h.b16 %v475
        %v550 = vunpack.c.l.b16 %v476
        %v551 = vunpack.c.h.b16 %v476
        %v552 = vunpack.c.l.b16 %v477
        %v553 = vunpack.c.h.b16 %v477
        %v554 = vunpack.c.l.b16 %v478
        %v555 = vunpack.c.h.b16 %v478
        %v556 = vunpack.c.l.b16 %v479
        %v557 = vunpack.c.h.b16 %v479
        %v558 = vunpack.c.l.b16 %v480
        %v559 = vunpack.c.h.b16 %v480
        %v560 = vunpack.c.l.b16 %v481
        %v561 = vunpack.c.h.b16 %v481
        %v562 = vunpack.c.l.b16 %v482
        %v563 = vunpack.c.h.b16 %v482
        %v564 = vunpack.c.l.b16 %v483
        %v565 = vunpack.c.h.b16 %v483
        %v566 = vpack.c.b16 %v526, %v522
        %v567 = vpack.c.b16 %v527, %v523
        %v568 = vpack.c.b16 %v528, %v524
        %v569 = vpack.c.b16 %v529, %v525
        %v570 = vpack.c.b16 %v534, %v530
        %v571 = vpack.c.b16 %v535, %v531
        %v572 = vpack.c.b16 %v536, %v532
        %v573 = vpack.c.b16 %v537, %v533
        %v574 = vpack.c.b16 %v542, %v538
        %v575 = vpack.c.b16 %v543, %v539
        %v576 = vpack.c.b16 %v544, %v540
        %v577 = vpack.c.b16 %v545, %v541
        %v578 = vpack.c.b16 %v550, %v546
        %v579 = vpack.c.b16 %v551, %v547
        %v580 = vpack.c.b16 %v552, %v548
        %v581 = vpack.c.b16 %v553, %v549
        %v582 = vpack.c.b16 %v558, %v554
        %v583 = vpack.c.b16 %v559, %v555
        %v584 = vpack.c.b16 %v560, %v556
        %v585 = vpack.c.b16 %v561, %v557
        %v586 = vpack.c.b16 %v562, %v562
        %v587 = vpack.c.b16 %v563, %v563
        %v588 = vpack.c.b16 %v564, %v564
        %v589 = vpack.c.b16 %v565, %v565
        %vm610 = vcmask 687104
        %v612 = vsel %vm610, %v496, 0
        %v615 = vsel %vm610, %v499, 0
        %vm617 = vcmask 1041408
        %v619 = vsel %vm617, %v586, 0
        %v622 = vsel %vm617, %v587, 0
        %v625 = vsel %vm617, %v588, 0
        %v628 = vsel %vm617, %v589, 0
        %630 = vmatprep.subr.bf16.mxu0 %v567
        %631 = vmatpush1.bf16.msra.mxu0 %v566
        %632 = vmatprep.subr.bf16.mxu0 %v571
        %633 = vmatpush1.bf16.msra.mxu0 %v570
        %634 = vmatprep.subr.bf16.mxu0 %v575
        %635 = vmatpush1.bf16.msra.mxu0 %v574
        %636 = vmatprep.subr.bf16.mxu0 %v579
        %637 = vmatpush1.bf16.msra.mxu0 %v578
        %638 = vmatprep.subr.bf16.mxu0 %v583
        %639 = vmatpush1.bf16.msra.mxu0 %v582
        %640 = vmatprep.subr.bf16.mxu0 %v622
        %641 = vmatpush1.bf16.msra.mxu0 %v619
        %642 = vmatprep.subr.bf16.mxu0 0
        %643 = vmatpush1.bf16.msra.mxu0 0
        %644 = vmatprep.subr.bf16.mxu0 0
        %645 = vmatpush1.bf16.msra.mxu0 0
        %646 = vmatprep.subr.bf16.mxu0 0
        %647 = vmatpush1.bf16.msra.mxu0 0
        %648 = vmatprep.subr.bf16.mxu0 0
        %649 = vmatpush1.bf16.msra.mxu0 0
        %650 = vmatprep.subr.bf16.mxu0 0
        %651 = vmatpush1.bf16.msra.mxu0 0
        %652 = vmatprep.subr.bf16.mxu0 0
        %653 = vmatpush1.bf16.msra.mxu0 0
        %654 = vmatprep.subr.bf16.mxu0 0
        %655 = vmatpush1.bf16.msra.mxu0 0
        %656 = vmatprep.subr.bf16.mxu0 0
        %657 = vmatpush1.bf16.msra.mxu0 0
        %658 = vmatprep.subr.bf16.mxu0 0
        %659 = vmatpush1.bf16.msra.mxu0 0
        %660 = vmatprep.subr.bf16.mxu0 0
        %661 = vmatpush1.bf16.msra.mxu0 0
        %662 = vmatprep.mubr.bf16.mxu0 0
        %663 = vmatmul.mubr.bf16.gmra.mrb[0].mxu0 %v612
        %v664 = vpop.f32.mrb[0].mxu0
        %v665 = vadd.f32 0.0, %v664
        %v666 = vpop.f32.mrb[0].mxu0
        %v667 = vadd.f32 0.0, %v666
        %v668 = vpop.f32.mrb[0].mxu0
        %v669 = vadd.f32 0.0, %v668
        %v670 = vpop.f32.mrb[0].mxu0
        %v671 = vadd.f32 0.0, %v670
        %672 = vmatprep.mubr.bf16.mxu0 0
        %673 = vmatmul.mubr.bf16.gmra.mrb[0].mxu0 %v615
        %v674 = vpop.f32.mrb[0].mxu0
        %v675 = vadd.f32 0.0, %v674
        %v676 = vpop.f32.mrb[0].mxu0
        %v677 = vadd.f32 0.0, %v676
        %v678 = vpop.f32.mrb[0].mxu0
        %v679 = vadd.f32 0.0, %v678
        %v680 = vpop.f32.mrb[0].mxu0
        %v681 = vadd.f32 0.0, %v680
        %682 = vdwg.mxu0
        %683 = vmatprep.subr.bf16.mxu0 %v569
        %684 = vmatpush1.bf16.msra.mxu0 %v568
        %685 = vmatprep.subr.bf16.mxu0 %v573
        %686 = vmatpush1.bf16.msra.mxu0 %v572
        %687 = vmatprep.subr.bf16.mxu0 %v577
        %688 = vmatpush1.bf16.msra.mxu0 %v576
        %689 = vmatprep.subr.bf16.mxu0 %v581
        %690 = vmatpush1.bf16.msra.mxu0 %v580
        %691 = vmatprep.subr.bf16.mxu0 %v585
        %692 = vmatpush1.bf16.msra.mxu0 %v584
        %693 = vmatprep.subr.bf16.mxu0 %v628
        %694 = vmatpush1.bf16.msra.mxu0 %v625
        %695 = vmatprep.subr.bf16.mxu0 0
        %696 = vmatpush1.bf16.msra.mxu0 0
        %697 = vmatprep.subr.bf16.mxu0 0
        %698 = vmatpush1.bf16.msra.mxu0 0
        %699 = vmatprep.subr.bf16.mxu0 0
        %700 = vmatpush1.bf16.msra.mxu0 0
        %701 = vmatprep.subr.bf16.mxu0 0
        %702 = vmatpush1.bf16.msra.mxu0 0
        %703 = vmatprep.subr.bf16.mxu0 0
        %704 = vmatpush1.bf16.msra.mxu0 0
        %705 = vmatprep.subr.bf16.mxu0 0
        %706 = vmatpush1.bf16.msra.mxu0 0
        %707 = vmatprep.subr.bf16.mxu0 0
        %708 = vmatpush1.bf16.msra.mxu0 0
        %709 = vmatprep.subr.bf16.mxu0 0
        %710 = vmatpush1.bf16.msra.mxu0 0
        %711 = vmatprep.subr.bf16.mxu0 0
        %712 = vmatpush1.bf16.msra.mxu0 0
        %713 = vmatprep.subr.bf16.mxu0 0
        %714 = vmatpush1.bf16.msra.mxu0 0
        %715 = vmatprep.mubr.bf16.mxu0 0
        %716 = vmatmul.mubr.bf16.gmra.mrb[0].mxu0 %v612
        %v717 = vpop.f32.mrb[0].mxu0
        %v718 = vadd.f32 0.0, %v717
        %v719 = vpop.f32.mrb[0].mxu0
        %v720 = vadd.f32 0.0, %v719
        %v721 = vpop.f32.mrb[0].mxu0
        %v722 = vadd.f32 0.0, %v721
        %v723 = vpop.f32.mrb[0].mxu0
        %v724 = vadd.f32 0.0, %v723
        %725 = vmatprep.mubr.bf16.mxu0 0
        %726 = vmatmul.mubr.bf16.gmra.mrb[0].mxu0 %v615
        %v727 = vpop.f32.mrb[0].mxu0
        %v728 = vadd.f32 0.0, %v727
        %v729 = vpop.f32.mrb[0].mxu0
        %v730 = vadd.f32 0.0, %v729
        %v731 = vpop.f32.mrb[0].mxu0
        %v732 = vadd.f32 0.0, %v731
        %v733 = vpop.f32.mrb[0].mxu0
        %v734 = vadd.f32 0.0, %v733
        %735 = vdwg.mxu0
        %v758 = vunpack.c.l.b16 %v439
        %v759 = vunpack.c.h.b16 %v439
        %v760 = vunpack.c.l.b16 %v440
        %v761 = vunpack.c.h.b16 %v440
        %v762 = vunpack.c.l.b16 %v441
        %v763 = vunpack.c.h.b16 %v441
        %v764 = vunpack.c.l.b16 %v442
        %v765 = vunpack.c.h.b16 %v442
        %v766 = vunpack.c.l.b16 %v443
        %v767 = vunpack.c.h.b16 %v443
        %v768 = vunpack.c.l.b16 %v444
        %v769 = vunpack.c.h.b16 %v444
        %v770 = vunpack.c.l.b16 %v445
        %v771 = vunpack.c.h.b16 %v445
        %v772 = vunpack.c.l.b16 %v446
        %v773 = vunpack.c.h.b16 %v446
        %v774 = vunpack.c.l.b16 %v447
        %v775 = vunpack.c.h.b16 %v447
        %v776 = vunpack.c.l.b16 %v448
        %v777 = vunpack.c.h.b16 %v448
        %v778 = vunpack.c.l.b16 %v449
        %v779 = vunpack.c.h.b16 %v449
        %v780 = vunpack.c.l.b16 %v450
        %v781 = vunpack.c.h.b16 %v450
        %v782 = vunpack.c.l.b16 %v451
        %v783 = vunpack.c.h.b16 %v451
        %v784 = vunpack.c.l.b16 %v452
        %v785 = vunpack.c.h.b16 %v452
        %v786 = vunpack.c.l.b16 %v453
        %v787 = vunpack.c.h.b16 %v453
        %v788 = vunpack.c.l.b16 %v454
        %v789 = vunpack.c.h.b16 %v454
        %v790 = vunpack.c.l.b16 %v455
        %v791 = vunpack.c.h.b16 %v455
        %v792 = vunpack.c.l.b16 %v456
        %v793 = vunpack.c.h.b16 %v456
        %v794 = vunpack.c.l.b16 %v457
        %v795 = vunpack.c.h.b16 %v457
        %v796 = vunpack.c.l.b16 %v458
        %v797 = vunpack.c.h.b16 %v458
        %v798 = vunpack.c.l.b16 %v459
        %v799 = vunpack.c.h.b16 %v459
        %v800 = vunpack.c.l.b16 %v460
        %v801 = vunpack.c.h.b16 %v460
        %v802 = vpack.c.b16 %v762, %v758
        %v803 = vpack.c.b16 %v763, %v759
        %v804 = vpack.c.b16 %v764, %v760
        %v805 = vpack.c.b16 %v765, %v761
        %v806 = vpack.c.b16 %v770, %v766
        %v807 = vpack.c.b16 %v771, %v767
        %v808 = vpack.c.b16 %v772, %v768
        %v809 = vpack.c.b16 %v773, %v769
        %v810 = vpack.c.b16 %v778, %v774
        %v811 = vpack.c.b16 %v779, %v775
        %v812 = vpack.c.b16 %v780, %v776
        %v813 = vpack.c.b16 %v781, %v777
        %v814 = vpack.c.b16 %v786, %v782
        %v815 = vpack.c.b16 %v787, %v783
        %v816 = vpack.c.b16 %v788, %v784
        %v817 = vpack.c.b16 %v789, %v785
        %v818 = vpack.c.b16 %v794, %v790
        %v819 = vpack.c.b16 %v795, %v791
        %v820 = vpack.c.b16 %v796, %v792
        %v821 = vpack.c.b16 %v797, %v793
        %v822 = vpack.c.b16 %v798, %v798
        %v823 = vpack.c.b16 %v799, %v799
        %v824 = vpack.c.b16 %v800, %v800
        %v825 = vpack.c.b16 %v801, %v801
        %v846 = vsel %vm610, %v434, 0
        %v848 = vsel %vm610, %v438, 0
        %v851 = vsel %vm617, %v822, 0
        %v854 = vsel %vm617, %v823, 0
        %v857 = vsel %vm617, %v824, 0
        %v860 = vsel %vm617, %v825, 0
        %862 = vmatprep.subr.bf16.mxu0 %v803
        %863 = vmatpush1.bf16.msra.mxu0 %v802
        %864 = vmatprep.subr.bf16.mxu0 %v807
        %865 = vmatpush1.bf16.msra.mxu0 %v806
        %866 = vmatprep.subr.bf16.mxu0 %v811
        %867 = vmatpush1.bf16.msra.mxu0 %v810
        %868 = vmatprep.subr.bf16.mxu0 %v815
        %869 = vmatpush1.bf16.msra.mxu0 %v814
        %870 = vmatprep.subr.bf16.mxu0 %v819
        %871 = vmatpush1.bf16.msra.mxu0 %v818
        %872 = vmatprep.subr.bf16.mxu0 %v854
        %873 = vmatpush1.bf16.msra.mxu0 %v851
        %874 = vmatprep.subr.bf16.mxu0 0
        %875 = vmatpush1.bf16.msra.mxu0 0
        %876 = vmatprep.subr.bf16.mxu0 0
        %877 = vmatpush1.bf16.msra.mxu0 0
        %878 = vmatprep.subr.bf16.mxu0 0
        %879 = vmatpush1.bf16.msra.mxu0 0
        %880 = vmatprep.subr.bf16.mxu0 0
        %881 = vmatpush1.bf16.msra.mxu0 0
        %882 = vmatprep.subr.bf16.mxu0 0
        %883 = vmatpush1.bf16.msra.mxu0 0
        %884 = vmatprep.subr.bf16.mxu0 0
        %885 = vmatpush1.bf16.msra.mxu0 0
        %886 = vmatprep.subr.bf16.mxu0 0
        %887 = vmatpush1.bf16.msra.mxu0 0
        %888 = vmatprep.subr.bf16.mxu0 0
        %889 = vmatpush1.bf16.msra.mxu0 0
        %890 = vmatprep.subr.bf16.mxu0 0
        %891 = vmatpush1.bf16.msra.mxu0 0
        %892 = vmatprep.subr.bf16.mxu0 0
        %893 = vmatpush1.bf16.msra.mxu0 0
        %894 = vmatprep.mubr.bf16.mxu0 0
        %895 = vmatmul.mubr.bf16.gmra.mrb[0].mxu0 %v846
        %v896 = vpop.f32.mrb[0].mxu0
        %v897 = vadd.f32 %v665, %v896
        %v898 = vpop.f32.mrb[0].mxu0
        %v899 = vadd.f32 %v667, %v898
        %v900 = vpop.f32.mrb[0].mxu0
        %v901 = vadd.f32 %v669, %v900
        %v902 = vpop.f32.mrb[0].mxu0
        %v903 = vadd.f32 %v671, %v902
        %904 = vmatprep.mubr.bf16.mxu0 0
        %905 = vmatmul.mubr.bf16.gmra.mrb[0].mxu0 %v848
        %v906 = vpop.f32.mrb[0].mxu0
        %v907 = vadd.f32 %v675, %v906
        %v908 = vpop.f32.mrb[0].mxu0
        %v909 = vadd.f32 %v677, %v908
        %v910 = vpop.f32.mrb[0].mxu0
        %v911 = vadd.f32 %v679, %v910
        %v912 = vpop.f32.mrb[0].mxu0
        %v913 = vadd.f32 %v681, %v912
        %914 = vdwg.mxu0
        %915 = vmatprep.subr.bf16.mxu0 %v805
        %916 = vmatpush1.bf16.msra.mxu0 %v804
        %917 = vmatprep.subr.bf16.mxu0 %v809
        %918 = vmatpush1.bf16.msra.mxu0 %v808
        %919 = vmatprep.subr.bf16.mxu0 %v813
        %920 = vmatpush1.bf16.msra.mxu0 %v812
        %921 = vmatprep.subr.bf16.mxu0 %v817
        %922 = vmatpush1.bf16.msra.mxu0 %v816
        %923 = vmatprep.subr.bf16.mxu0 %v821
        %924 = vmatpush1.bf16.msra.mxu0 %v820
        %925 = vmatprep.subr.bf16.mxu0 %v860
        %926 = vmatpush1.bf16.msra.mxu0 %v857
        %927 = vmatprep.subr.bf16.mxu0 0
        %928 = vmatpush1.bf16.msra.mxu0 0
        %929 = vmatprep.subr.bf16.mxu0 0
        %930 = vmatpush1.bf16.msra.mxu0 0
        %931 = vmatprep.subr.bf16.mxu0 0
        %932 = vmatpush1.bf16.msra.mxu0 0
        %933 = vmatprep.subr.bf16.mxu0 0
        %934 = vmatpush1.bf16.msra.mxu0 0
        %935 = vmatprep.subr.bf16.mxu0 0
        %936 = vmatpush1.bf16.msra.mxu0 0
        %937 = vmatprep.subr.bf16.mxu0 0
        %938 = vmatpush1.bf16.msra.mxu0 0
        %939 = vmatprep.subr.bf16.mxu0 0
        %940 = vmatpush1.bf16.msra.mxu0 0
        %941 = vmatprep.subr.bf16.mxu0 0
        %942 = vmatpush1.bf16.msra.mxu0 0
        %943 = vmatprep.subr.bf16.mxu0 0
        %944 = vmatpush1.bf16.msra.mxu0 0
        %945 = vmatprep.subr.bf16.mxu0 0
        %946 = vmatpush1.bf16.msra.mxu0 0
        %947 = vmatprep.mubr.bf16.mxu0 0
        %948 = vmatmul.mubr.bf16.gmra.mrb[0].mxu0 %v846
        %v949 = vpop.f32.mrb[0].mxu0
        %v950 = vadd.f32 %v718, %v949
        %v951 = vpop.f32.mrb[0].mxu0
        %v952 = vadd.f32 %v720, %v951
        %v953 = vpop.f32.mrb[0].mxu0
        %v954 = vadd.f32 %v722, %v953
        %v955 = vpop.f32.mrb[0].mxu0
        %v956 = vadd.f32 %v724, %v955
        %957 = vmatprep.mubr.bf16.mxu0 0
        %958 = vmatmul.mubr.bf16.gmra.mrb[0].mxu0 %v848
        %v959 = vpop.f32.mrb[0].mxu0
        %v960 = vadd.f32 %v728, %v959
        %v961 = vpop.f32.mrb[0].mxu0
        %v962 = vadd.f32 %v730, %v961
        %v963 = vpop.f32.mrb[0].mxu0
        %v964 = vadd.f32 %v732, %v963
        %v965 = vpop.f32.mrb[0].mxu0
        %v966 = vadd.f32 %v734, %v965
        %967 = vdwg.mxu0
        %s968 = scalar_lea.vmem [#allocation2], 352
        %v969 = vld [vmem:[%s968] sm:$0xff]
        %v970 = vld [vmem:[%s968 + $0x8] sm:$0xff]
        %v971 = vld [vmem:[%s968 + $0x10] sm:$0xff]
        %v972 = vld [vmem:[%s968 + $0x18] sm:$0xff]
        %v973 = vld [vmem:[%s968 + $0x20] sm:$0xff]
        %v974 = vld [vmem:[%s968 + $0x28] sm:$0xff]
        %v975 = vld [vmem:[%s968 + $0x30] sm:$0xff]
        %v976 = vld [vmem:[%s968 + $0x38] sm:$0xff]
        %v977 = vld [vmem:[%s968 + $0x40] sm:$0xff]
        %v978 = vld [vmem:[%s968 + $0x48] sm:$0xff]
        %v979 = vld [vmem:[%s968 + $0x50] sm:$0xff]
        %v980 = vld [vmem:[%s968 + $0x58] sm:$0xff]
        %v981 = vld [vmem:[%s968 + $0x60] sm:$0xff]
        %v982 = vld [vmem:[%s968 + $0x68] sm:$0xff]
        %v983 = vld [vmem:[%s968 + $0x70] sm:$0xff]
        %v984 = vld [vmem:[%s968 + $0x78] sm:$0xff]
        %v985 = vld [vmem:[%s968 + $0x80] sm:$0xff]
        %v986 = vld [vmem:[%s968 + $0x88] sm:$0xff]
        %v987 = vld [vmem:[%s968 + $0x90] sm:$0xff]
        %v988 = vld [vmem:[%s968 + $0x98] sm:$0xff]
        %v989 = vld [vmem:[%s968 + $0xa0] sm:$0x33]
        %v990 = vld [vmem:[%s968 + $0xa8] sm:$0x33]
        %v993 = vrot.slane %v434, 1
        %v994 = vrot.slane %v438, 1
        %v995 = vsel %vm435, %v993, %v994
        %v1018 = vunpack.c.l.b16 %v969
        %v1019 = vunpack.c.h.b16 %v969
        %v1020 = vunpack.c.l.b16 %v970
        %v1021 = vunpack.c.h.b16 %v970
        %v1022 = vunpack.c.l.b16 %v971
        %v1023 = vunpack.c.h.b16 %v971
        %v1024 = vunpack.c.l.b16 %v972
        %v1025 = vunpack.c.h.b16 %v972
        %v1026 = vunpack.c.l.b16 %v973
        %v1027 = vunpack.c.h.b16 %v973
        %v1028 = vunpack.c.l.b16 %v974
        %v1029 = vunpack.c.h.b16 %v974
        %v1030 = vunpack.c.l.b16 %v975
        %v1031 = vunpack.c.h.b16 %v975
        %v1032 = vunpack.c.l.b16 %v976
        %v1033 = vunpack.c.h.b16 %v976
        %v1034 = vunpack.c.l.b16 %v977
        %v1035 = vunpack.c.h.b16 %v977
        %v1036 = vunpack.c.l.b16 %v978
        %v1037 = vunpack.c.h.b16 %v978
        %v1038 = vunpack.c.l.b16 %v979
        %v1039 = vunpack.c.h.b16 %v979
        %v1040 = vunpack.c.l.b16 %v980
        %v1041 = vunpack.c.h.b16 %v980
        %v1042 = vunpack.c.l.b16 %v981
        %v1043 = vunpack.c.h.b16 %v981
        %v1044 = vunpack.c.l.b16 %v982
        %v1045 = vunpack.c.h.b16 %v982
        %v1046 = vunpack.c.l.b16 %v983
        %v1047 = vunpack.c.h.b16 %v983
        %v1048 = vunpack.c.l.b16 %v984
        %v1049 = vunpack.c.h.b16 %v984
        %v1050 = vunpack.c.l.b16 %v985
        %v1051 = vunpack.c.h.b16 %v985
        %v1052 = vunpack.c.l.b16 %v986
        %v1053 = vunpack.c.h.b16 %v986
        %v1054 = vunpack.c.l.b16 %v987
        %v1055 = vunpack.c.h.b16 %v987
        %v1056 = vunpack.c.l.b16 %v988
        %v1057 = vunpack.c.h.b16 %v988
        %v1058 = vunpack.c.l.b16 %v989
        %v1059 = vunpack.c.h.b16 %v989
        %v1060 = vunpack.c.l.b16 %v990
        %v1061 = vunpack.c.h.b16 %v990
        %v1062 = vpack.c.b16 %v1022, %v1018
        %v1063 = vpack.c.b16 %v1023, %v1019
        %v1064 = vpack.c.b16 %v1024, %v1020
        %v1065 = vpack.c.b16 %v1025, %v1021
        %v1066 = vpack.c.b16 %v1030, %v1026
        %v1067 = vpack.c.b16 %v1031, %v1027
        %v1068 = vpack.c.b16 %v1032, %v1028
        %v1069 = vpack.c.b16 %v1033, %v1029
        %v1070 = vpack.c.b16 %v1038, %v1034
        %v1071 = vpack.c.b16 %v1039, %v1035
        %v1072 = vpack.c.b16 %v1040, %v1036
        %v1073 = vpack.c.b16 %v1041, %v1037
        %v1074 = vpack.c.b16 %v1046, %v1042
        %v1075 = vpack.c.b16 %v1047, %v1043
        %v1076 = vpack.c.b16 %v1048, %v1044
        %v1077 = vpack.c.b16 %v1049, %v1045
        %v1078 = vpack.c.b16 %v1054, %v1050
        %v1079 = vpack.c.b16 %v1055, %v1051
        %v1080 = vpack.c.b16 %v1056, %v1052
        %v1081 = vpack.c.b16 %v1057, %v1053
        %v1082 = vpack.c.b16 %v1058, %v1058
        %v1083 = vpack.c.b16 %v1059, %v1059
        %v1084 = vpack.c.b16 %v1060, %v1060
        %v1085 = vpack.c.b16 %v1061, %v1061
        %v1107 = vsel %vm610, %v995, 0
        %v1110 = vsel %vm610, %v994, 0
        %v1113 = vsel %vm617, %v1082, 0
        %v1116 = vsel %vm617, %v1083, 0
        %v1119 = vsel %vm617, %v1084, 0
        %v1122 = vsel %vm617, %v1085, 0
        %1124 = vmatprep.subr.bf16.mxu0 %v1063
        %1125 = vmatpush1.bf16.msra.mxu0 %v1062
        %1126 = vmatprep.subr.bf16.mxu0 %v1067
        %1127 = vmatpush1.bf16.msra.mxu0 %v1066
        %1128 = vmatprep.subr.bf16.mxu0 %v1071
        %1129 = vmatpush1.bf16.msra.mxu0 %v1070
        %1130 = vmatprep.subr.bf16.mxu0 %v1075
        %1131 = vmatpush1.bf16.msra.mxu0 %v1074
        %1132 = vmatprep.subr.bf16.mxu0 %v1079
        %1133 = vmatpush1.bf16.msra.mxu0 %v1078
        %1134 = vmatprep.subr.bf16.mxu0 %v1116
        %1135 = vmatpush1.bf16.msra.mxu0 %v1113
        %1136 = vmatprep.subr.bf16.mxu0 0
        %1137 = vmatpush1.bf16.msra.mxu0 0
        %1138 = vmatprep.subr.bf16.mxu0 0
        %1139 = vmatpush1.bf16.msra.mxu0 0
        %1140 = vmatprep.subr.bf16.mxu0 0
        %1141 = vmatpush1.bf16.msra.mxu0 0
        %1142 = vmatprep.subr.bf16.mxu0 0
        %1143 = vmatpush1.bf16.msra.mxu0 0
        %1144 = vmatprep.subr.bf16.mxu0 0
        %1145 = vmatpush1.bf16.msra.mxu0 0
        %1146 = vmatprep.subr.bf16.mxu0 0
        %1147 = vmatpush1.bf16.msra.mxu0 0
        %1148 = vmatprep.subr.bf16.mxu0 0
        %1149 = vmatpush1.bf16.msra.mxu0 0
        %1150 = vmatprep.subr.bf16.mxu0 0
        %1151 = vmatpush1.bf16.msra.mxu0 0
        %1152 = vmatprep.subr.bf16.mxu0 0
        %1153 = vmatpush1.bf16.msra.mxu0 0
        %1154 = vmatprep.subr.bf16.mxu0 0
        %1155 = vmatpush1.bf16.msra.mxu0 0
        %1156 = vmatprep.mubr.bf16.mxu0 0
        %1157 = vmatmul.mubr.bf16.gmra.mrb[0].mxu0 %v1107
        %v1158 = vpop.f32.mrb[0].mxu0
        %v1159 = vadd.f32 0.0, %v1158
        %v1160 = vpop.f32.mrb[0].mxu0
        %v1161 = vadd.f32 0.0, %v1160
        %v1162 = vpop.f32.mrb[0].mxu0
        %v1163 = vadd.f32 0.0, %v1162
        %v1164 = vpop.f32.mrb[0].mxu0
        %v1165 = vadd.f32 0.0, %v1164
        %1166 = vmatprep.mubr.bf16.mxu0 0
        %1167 = vmatmul.mubr.bf16.gmra.mrb[0].mxu0 %v1110
        %v1168 = vpop.f32.mrb[0].mxu0
        %v1169 = vadd.f32 0.0, %v1168
        %v1170 = vpop.f32.mrb[0].mxu0
        %v1171 = vadd.f32 0.0, %v1170
        %v1172 = vpop.f32.mrb[0].mxu0
        %v1173 = vadd.f32 0.0, %v1172
        %v1174 = vpop.f32.mrb[0].mxu0
        %v1175 = vadd.f32 0.0, %v1174
        %1176 = vdwg.mxu0
        %1177 = vmatprep.subr.bf16.mxu0 %v1065
        %1178 = vmatpush1.bf16.msra.mxu0 %v1064
        %1179 = vmatprep.subr.bf16.mxu0 %v1069
        %1180 = vmatpush1.bf16.msra.mxu0 %v1068
        %1181 = vmatprep.subr.bf16.mxu0 %v1073
        %1182 = vmatpush1.bf16.msra.mxu0 %v1072
        %1183 = vmatprep.subr.bf16.mxu0 %v1077
        %1184 = vmatpush1.bf16.msra.mxu0 %v1076
        %1185 = vmatprep.subr.bf16.mxu0 %v1081
        %1186 = vmatpush1.bf16.msra.mxu0 %v1080
        %1187 = vmatprep.subr.bf16.mxu0 %v1122
        %1188 = vmatpush1.bf16.msra.mxu0 %v1119
        %1189 = vmatprep.subr.bf16.mxu0 0
        %1190 = vmatpush1.bf16.msra.mxu0 0
        %1191 = vmatprep.subr.bf16.mxu0 0
        %1192 = vmatpush1.bf16.msra.mxu0 0
        %1193 = vmatprep.subr.bf16.mxu0 0
        %1194 = vmatpush1.bf16.msra.mxu0 0
        %1195 = vmatprep.subr.bf16.mxu0 0
        %1196 = vmatpush1.bf16.msra.mxu0 0
        %1197 = vmatprep.subr.bf16.mxu0 0
        %1198 = vmatpush1.bf16.msra.mxu0 0
        %1199 = vmatprep.subr.bf16.mxu0 0
        %1200 = vmatpush1.bf16.msra.mxu0 0
        %1201 = vmatprep.subr.bf16.mxu0 0
        %1202 = vmatpush1.bf16.msra.mxu0 0
        %1203 = vmatprep.subr.bf16.mxu0 0
        %1204 = vmatpush1.bf16.msra.mxu0 0
        %1205 = vmatprep.subr.bf16.mxu0 0
        %1206 = vmatpush1.bf16.msra.mxu0 0
        %1207 = vmatprep.subr.bf16.mxu0 0
        %1208 = vmatpush1.bf16.msra.mxu0 0
        %1209 = vmatprep.mubr.bf16.mxu0 0
        %1210 = vmatmul.mubr.bf16.gmra.mrb[0].mxu0 %v1107
        %v1211 = vpop.f32.mrb[0].mxu0
        %v1212 = vadd.f32 0.0, %v1211
        %v1213 = vpop.f32.mrb[0].mxu0
        %v1214 = vadd.f32 0.0, %v1213
        %v1215 = vpop.f32.mrb[0].mxu0
        %v1216 = vadd.f32 0.0, %v1215
        %v1217 = vpop.f32.mrb[0].mxu0
        %v1218 = vadd.f32 0.0, %v1217
        %1219 = vmatprep.mubr.bf16.mxu0 0
        %1220 = vmatmul.mubr.bf16.gmra.mrb[0].mxu0 %v1110
        %v1221 = vpop.f32.mrb[0].mxu0
        %v1222 = vadd.f32 0.0, %v1221
        %v1223 = vpop.f32.mrb[0].mxu0
        %v1224 = vadd.f32 0.0, %v1223
        %v1225 = vpop.f32.mrb[0].mxu0
        %v1226 = vadd.f32 0.0, %v1225
        %v1227 = vpop.f32.mrb[0].mxu0
        %v1228 = vadd.f32 0.0, %v1227
        %1229 = vdwg.mxu0
        %v1230 = vadd.f32 %v897, %v1159
        %v1231 = vadd.f32 %v899, %v1161
        %v1232 = vadd.f32 %v950, %v1212
        %v1233 = vadd.f32 %v952, %v1214
        %v1234 = vadd.f32 %v901, %v1163
        %v1235 = vadd.f32 %v903, %v1165
        %v1236 = vadd.f32 %v954, %v1216
        %v1237 = vadd.f32 %v956, %v1218
        %v1238 = vadd.f32 %v907, %v1169
        %v1239 = vadd.f32 %v909, %v1171
        %v1240 = vadd.f32 %v960, %v1222
        %v1241 = vadd.f32 %v962, %v1224
        %v1242 = vadd.f32 %v911, %v1173
        %v1243 = vadd.f32 %v913, %v1175
        %v1244 = vadd.f32 %v964, %v1226
        %v1245 = vadd.f32 %v966, %v1228
        %v1246 = vld [vmem:[%s2] sm:$0xf]
        %v1248 = vlaneseq
        %v1249 = vshrl.u32 %v1248, 7
        %v1250 = vsub.s32 0, %v1249
        %v1251 = vrot.slane %v1246, %v1250
        %v1252 = vlaneseq
        %v1253 = vshrl.u32 %v1252, 7
        %v1254 = vsub.s32 1, %v1253
        %v1255 = vrot.slane %v1246, %v1254
        %v1256 = vlaneseq
        %v1257 = vshrl.u32 %v1256, 7
        %v1258 = vsub.s32 2, %v1257
        %v1259 = vrot.slane %v1246, %v1258
        %v1260 = vlaneseq
        %v1261 = vshrl.u32 %v1260, 7
        %v1262 = vsub.s32 3, %v1261
        %v1263 = vrot.slane %v1246, %v1262
        %v1268 = vadd.f32 %v1230, %v1251
        %v1269 = vadd.f32 %v1231, %v1255
        %v1270 = vadd.f32 %v1232, %v1259
        %v1271 = vadd.f32 %v1233, %v1263
        %v1272 = vadd.f32 %v1234, %v1251
        %v1273 = vadd.f32 %v1235, %v1255
        %v1274 = vadd.f32 %v1236, %v1259
        %v1275 = vadd.f32 %v1237, %v1263
        %v1276 = vadd.f32 %v1238, %v1251
        %v1277 = vadd.f32 %v1239, %v1255
        %v1278 = vadd.f32 %v1240, %v1259
        %v1279 = vadd.f32 %v1241, %v1263
        %v1280 = vadd.f32 %v1242, %v1251
        %v1281 = vadd.f32 %v1243, %v1255
        %v1282 = vadd.f32 %v1244, %v1259
        %v1283 = vadd.f32 %v1245, %v1263
        %v1284 = vmax.f32 %v1268, 0.0
        %v1285 = vmax.f32 %v1269, 0.0
        %v1286 = vmax.f32 %v1270, 0.0
        %v1287 = vmax.f32 %v1271, 0.0
        %v1288 = vmax.f32 %v1272, 0.0
        %v1289 = vmax.f32 %v1273, 0.0
        %v1290 = vmax.f32 %v1274, 0.0
        %v1291 = vmax.f32 %v1275, 0.0
        %v1292 = vmax.f32 %v1276, 0.0
        %v1293 = vmax.f32 %v1277, 0.0
        %v1294 = vmax.f32 %v1278, 0.0
        %v1295 = vmax.f32 %v1279, 0.0
        %v1296 = vmax.f32 %v1280, 0.0
        %v1297 = vmax.f32 %v1281, 0.0
        %v1298 = vmax.f32 %v1282, 0.0
        %v1299 = vmax.f32 %v1283, 0.0
        %1312 = vrot.lane.b32.xlu0 %v1285, 32
        %v1313 = vpop.permute.xlu0 %1312
        %1314 = vrot.lane.b32.xlu0 %v1286, 32
        %v1315 = vpop.permute.xlu0 %1314
        %1316 = vrot.lane.b32.xlu0 %v1287, 32
        %v1317 = vpop.permute.xlu0 %1316
        %1318 = vrot.lane.b32.xlu0 %v1289, 32
        %v1319 = vpop.permute.xlu0 %1318
        %1320 = vrot.lane.b32.xlu0 %v1290, 32
        %v1321 = vpop.permute.xlu0 %1320
        %1322 = vrot.lane.b32.xlu0 %v1291, 32
        %v1323 = vpop.permute.xlu0 %1322
        %1324 = vrot.lane.b32.xlu0 %v1293, 32
        %v1325 = vpop.permute.xlu0 %1324
        %1326 = vrot.lane.b32.xlu0 %v1294, 32
        %v1327 = vpop.permute.xlu0 %1326
        %1328 = vrot.lane.b32.xlu0 %v1295, 32
        %v1329 = vpop.permute.xlu0 %1328
        %1330 = vrot.lane.b32.xlu0 %v1297, 32
        %v1331 = vpop.permute.xlu0 %1330
        %1332 = vrot.lane.b32.xlu0 %v1298, 32
        %v1333 = vpop.permute.xlu0 %1332
        %1334 = vrot.lane.b32.xlu0 %v1299, 32
        %v1335 = vpop.permute.xlu0 %1334
        %vm1336 = vcmask 261120
        %v1337 = vsel %vm1336, %v1313, %v1315
        %v1338 = vsel %vm1336, %v1315, %v1317
        %v1339 = vsel %vm1336, %v1319, %v1321
        %v1340 = vsel %vm1336, %v1321, %v1323
        %v1341 = vsel %vm1336, %v1325, %v1327
        %v1342 = vsel %vm1336, %v1327, %v1329
        %v1343 = vsel %vm1336, %v1331, %v1333
        %v1344 = vsel %vm1336, %v1333, %v1335
        %v1353 = vmax.f32 %v1284, %v1337
        %v1354 = vmax.f32 %v1285, %v1338
        %v1355 = vmax.f32 %v1288, %v1339
        %v1356 = vmax.f32 %v1289, %v1340
        %v1357 = vmax.f32 %v1292, %v1341
        %v1358 = vmax.f32 %v1293, %v1342
        %v1359 = vmax.f32 %v1296, %v1343
        %v1360 = vmax.f32 %v1297, %v1344
        %v1369 = vcombine.low %v1353, %v1354
        %v1370 = vcombine.high %v1353, %v1354
        %v1372 = vunpack.c.l.s4 1983009808
        %v1373 = vunpack.c.0.s8 %v1372
        %v1374 = vlaneseq
        %v1375 = vshrl.u32 %v1374, 7
        %v1376 = vsub.s32 %v1373, %v1375
        %v1377 = vrot.slane %v1369, %v1376
        %v1379 = vunpack.c.l.s4 1983009808
        %v1380 = vunpack.c.0.s8 %v1379
        %v1381 = vlaneseq
        %v1382 = vshrl.u32 %v1381, 7
        %v1383 = vsub.s32 %v1380, %v1382
        %v1384 = vrot.slane %v1370, %v1383
        %v1385 = vcombine.high %v1377, %v1377
        %v1386 = vcombine.high %v1384, %v1384
        %v1387 = vcombine.low %v1355, %v1356
        %v1388 = vcombine.high %v1355, %v1356
        %v1390 = vunpack.c.l.s4 1983009808
        %v1391 = vunpack.c.0.s8 %v1390
        %v1392 = vlaneseq
        %v1393 = vshrl.u32 %v1392, 7
        %v1394 = vsub.s32 %v1391, %v1393
        %v1395 = vrot.slane %v1387, %v1394
        %v1397 = vunpack.c.l.s4 1983009808
        %v1398 = vunpack.c.0.s8 %v1397
        %v1399 = vlaneseq
        %v1400 = vshrl.u32 %v1399, 7
        %v1401 = vsub.s32 %v1398, %v1400
        %v1402 = vrot.slane %v1388, %v1401
        %v1403 = vcombine.high %v1395, %v1395
        %v1404 = vcombine.high %v1402, %v1402
        %v1405 = vcombine.low %v1357, %v1358
        %v1406 = vcombine.high %v1357, %v1358
        %v1408 = vunpack.c.l.s4 1983009808
        %v1409 = vunpack.c.0.s8 %v1408
        %v1410 = vlaneseq
        %v1411 = vshrl.u32 %v1410, 7
        %v1412 = vsub.s32 %v1409, %v1411
        %v1413 = vrot.slane %v1405, %v1412
        %v1415 = vunpack.c.l.s4 1983009808
        %v1416 = vunpack.c.0.s8 %v1415
        %v1417 = vlaneseq
        %v1418 = vshrl.u32 %v1417, 7
        %v1419 = vsub.s32 %v1416, %v1418
        %v1420 = vrot.slane %v1406, %v1419
        %v1421 = vcombine.high %v1413, %v1413
        %v1422 = vcombine.high %v1420, %v1420
        %v1423 = vcombine.low %v1359, %v1360
        %v1425 = vunpack.c.l.s4 1983009808
        %v1426 = vunpack.c.0.s8 %v1425
        %v1427 = vlaneseq
        %v1428 = vshrl.u32 %v1427, 7
        %v1429 = vsub.s32 %v1426, %v1428
        %v1430 = vrot.slane %v1423, %v1429
        %v1431 = vcombine.high %v1430, %v1430
        %v1446 = vrot.slane %v1377, 7
        %v1447 = vrot.slane %v1446, 2
        %v1448 = vrot.slane %v1385, 7
        %v1449 = vrot.slane %v1448, 2
        %v1450 = vrot.slane %v1384, 7
        %v1451 = vrot.slane %v1450, 2
        %v1452 = vrot.slane %v1386, 7
        %v1453 = vrot.slane %v1452, 2
        %v1454 = vrot.slane %v1395, 7
        %v1455 = vrot.slane %v1454, 2
        %v1456 = vrot.slane %v1403, 7
        %v1457 = vrot.slane %v1456, 2
        %v1458 = vrot.slane %v1402, 7
        %v1459 = vrot.slane %v1458, 2
        %v1460 = vrot.slane %v1404, 7
        %v1461 = vrot.slane %v1460, 2
        %v1462 = vrot.slane %v1413, 7
        %v1463 = vrot.slane %v1462, 2
        %v1464 = vrot.slane %v1421, 7
        %v1465 = vrot.slane %v1464, 2
        %v1466 = vrot.slane %v1420, 7
        %v1467 = vrot.slane %v1466, 2
        %v1468 = vrot.slane %v1422, 7
        %v1469 = vrot.slane %v1468, 2
        %v1470 = vrot.slane %v1430, 7
        %v1471 = vrot.slane %v1470, 2
        %v1472 = vrot.slane %v1431, 7
        %v1473 = vrot.slane %v1472, 2
        %v1488 = vmax.f32 %v1377, %v1447
        %v1489 = vmax.f32 %v1385, %v1449
        %v1490 = vmax.f32 %v1384, %v1451
        %v1491 = vmax.f32 %v1386, %v1453
        %v1492 = vmax.f32 %v1395, %v1455
        %v1493 = vmax.f32 %v1403, %v1457
        %v1494 = vmax.f32 %v1402, %v1459
        %v1495 = vmax.f32 %v1404, %v1461
        %v1496 = vmax.f32 %v1413, %v1463
        %v1497 = vmax.f32 %v1421, %v1465
        %v1498 = vmax.f32 %v1420, %v1467
        %v1499 = vmax.f32 %v1422, %v1469
        %v1500 = vmax.f32 %v1430, %v1471
        %v1501 = vmax.f32 %v1431, %v1473
        %v1516 = vlaneseq
        %v1517 = vshrl.u32 %v1516, 7
        %v1518 = vsub.s32 0, %v1517
        %v1519 = vrot.slane %v1488, %v1518
        %v1520 = vlaneseq
        %v1521 = vshrl.u32 %v1520, 7
        %v1522 = vsub.s32 2, %v1521
        %v1523 = vrot.slane %v1488, %v1522
        %v1524 = vlaneseq
        %v1525 = vshrl.u32 %v1524, 7
        %v1526 = vsub.s32 0, %v1525
        %v1527 = vrot.slane %v1489, %v1526
        %v1528 = vlaneseq
        %v1529 = vshrl.u32 %v1528, 7
        %v1530 = vsub.s32 2, %v1529
        %v1531 = vrot.slane %v1489, %v1530
        %v1532 = vlaneseq
        %v1533 = vshrl.u32 %v1532, 7
        %v1534 = vsub.s32 0, %v1533
        %v1535 = vrot.slane %v1490, %v1534
        %v1536 = vlaneseq
        %v1537 = vshrl.u32 %v1536, 7
        %v1538 = vsub.s32 2, %v1537
        %v1539 = vrot.slane %v1490, %v1538
        %v1540 = vlaneseq
        %v1541 = vshrl.u32 %v1540, 7
        %v1542 = vsub.s32 0, %v1541
        %v1543 = vrot.slane %v1491, %v1542
        %v1544 = vlaneseq
        %v1545 = vshrl.u32 %v1544, 7
        %v1546 = vsub.s32 2, %v1545
        %v1547 = vrot.slane %v1491, %v1546
        %v1548 = vlaneseq
        %v1549 = vshrl.u32 %v1548, 7
        %v1550 = vsub.s32 0, %v1549
        %v1551 = vrot.slane %v1492, %v1550
        %v1552 = vlaneseq
        %v1553 = vshrl.u32 %v1552, 7
        %v1554 = vsub.s32 2, %v1553
        %v1555 = vrot.slane %v1492, %v1554
        %v1556 = vlaneseq
        %v1557 = vshrl.u32 %v1556, 7
        %v1558 = vsub.s32 0, %v1557
        %v1559 = vrot.slane %v1493, %v1558
        %v1560 = vlaneseq
        %v1561 = vshrl.u32 %v1560, 7
        %v1562 = vsub.s32 2, %v1561
        %v1563 = vrot.slane %v1493, %v1562
        %v1564 = vlaneseq
        %v1565 = vshrl.u32 %v1564, 7
        %v1566 = vsub.s32 0, %v1565
        %v1567 = vrot.slane %v1494, %v1566
        %v1568 = vlaneseq
        %v1569 = vshrl.u32 %v1568, 7
        %v1570 = vsub.s32 2, %v1569
        %v1571 = vrot.slane %v1494, %v1570
        %v1572 = vlaneseq
        %v1573 = vshrl.u32 %v1572, 7
        %v1574 = vsub.s32 0, %v1573
        %v1575 = vrot.slane %v1495, %v1574
        %v1576 = vlaneseq
        %v1577 = vshrl.u32 %v1576, 7
        %v1578 = vsub.s32 2, %v1577
        %v1579 = vrot.slane %v1495, %v1578
        %v1580 = vlaneseq
        %v1581 = vshrl.u32 %v1580, 7
        %v1582 = vsub.s32 0, %v1581
        %v1583 = vrot.slane %v1496, %v1582
        %v1584 = vlaneseq
        %v1585 = vshrl.u32 %v1584, 7
        %v1586 = vsub.s32 2, %v1585
        %v1587 = vrot.slane %v1496, %v1586
        %v1588 = vlaneseq
        %v1589 = vshrl.u32 %v1588, 7
        %v1590 = vsub.s32 0, %v1589
        %v1591 = vrot.slane %v1497, %v1590
        %v1592 = vlaneseq
        %v1593 = vshrl.u32 %v1592, 7
        %v1594 = vsub.s32 2, %v1593
        %v1595 = vrot.slane %v1497, %v1594
        %v1596 = vlaneseq
        %v1597 = vshrl.u32 %v1596, 7
        %v1598 = vsub.s32 0, %v1597
        %v1599 = vrot.slane %v1498, %v1598
        %v1600 = vlaneseq
        %v1601 = vshrl.u32 %v1600, 7
        %v1602 = vsub.s32 2, %v1601
        %v1603 = vrot.slane %v1498, %v1602
        %v1604 = vlaneseq
        %v1605 = vshrl.u32 %v1604, 7
        %v1606 = vsub.s32 0, %v1605
        %v1607 = vrot.slane %v1499, %v1606
        %v1608 = vlaneseq
        %v1609 = vshrl.u32 %v1608, 7
        %v1610 = vsub.s32 2, %v1609
        %v1611 = vrot.slane %v1499, %v1610
        %v1612 = vlaneseq
        %v1613 = vshrl.u32 %v1612, 7
        %v1614 = vsub.s32 0, %v1613
        %v1615 = vrot.slane %v1500, %v1614
        %v1616 = vlaneseq
        %v1617 = vshrl.u32 %v1616, 7
        %v1618 = vsub.s32 2, %v1617
        %v1619 = vrot.slane %v1500, %v1618
        %v1620 = vlaneseq
        %v1621 = vshrl.u32 %v1620, 7
        %v1622 = vsub.s32 0, %v1621
        %v1623 = vrot.slane %v1501, %v1622
        %v1624 = vlaneseq
        %v1625 = vshrl.u32 %v1624, 7
        %v1626 = vsub.s32 2, %v1625
        %v1627 = vrot.slane %v1501, %v1626
        %v1656 = vpack.c.bf16 %v1519, %v1519
        %v1657 = vpack.c.bf16 %v1523, %v1523
        %v1658 = vpack.c.bf16 %v1527, %v1527
        %v1659 = vpack.c.bf16 %v1531, %v1531
        %v1660 = vpack.c.bf16 %v1535, %v1535
        %v1661 = vpack.c.bf16 %v1539, %v1539
        %v1662 = vpack.c.bf16 %v1543, %v1543
        %v1663 = vpack.c.bf16 %v1547, %v1547
        %v1664 = vpack.c.bf16 %v1551, %v1551
        %v1665 = vpack.c.bf16 %v1555, %v1555
        %v1666 = vpack.c.bf16 %v1559, %v1559
        %v1667 = vpack.c.bf16 %v1563, %v1563
        %v1668 = vpack.c.bf16 %v1567, %v1567
        %v1669 = vpack.c.bf16 %v1571, %v1571
        %v1670 = vpack.c.bf16 %v1575, %v1575
        %v1671 = vpack.c.bf16 %v1579, %v1579
        %v1672 = vpack.c.bf16 %v1583, %v1583
        %v1673 = vpack.c.bf16 %v1587, %v1587
        %v1674 = vpack.c.bf16 %v1591, %v1591
        %v1675 = vpack.c.bf16 %v1595, %v1595
        %v1676 = vpack.c.bf16 %v1599, %v1599
        %v1677 = vpack.c.bf16 %v1603, %v1603
        %v1678 = vpack.c.bf16 %v1607, %v1607
        %v1679 = vpack.c.bf16 %v1611, %v1611
        %v1680 = vpack.c.bf16 %v1615, %v1615
        %v1681 = vpack.c.bf16 %v1619, %v1619
        %v1682 = vpack.c.bf16 %v1623, %v1623
        %v1683 = vpack.c.bf16 %v1627, %v1627
        %v1712 = vunpack.c.l.b16 %v1656
        %v1713 = vunpack.c.l.b16 %v1657
        %v1714 = vunpack.c.l.b16 %v1658
        %v1715 = vunpack.c.l.b16 %v1659
        %v1716 = vunpack.c.l.b16 %v1660
        %v1717 = vunpack.c.l.b16 %v1661
        %v1718 = vunpack.c.l.b16 %v1662
        %v1719 = vunpack.c.l.b16 %v1663
        %v1720 = vunpack.c.l.b16 %v1664
        %v1721 = vunpack.c.l.b16 %v1665
        %v1722 = vunpack.c.l.b16 %v1666
        %v1723 = vunpack.c.l.b16 %v1667
        %v1724 = vunpack.c.l.b16 %v1668
        %v1725 = vunpack.c.l.b16 %v1669
        %v1726 = vunpack.c.l.b16 %v1670
        %v1727 = vunpack.c.l.b16 %v1671
        %v1728 = vunpack.c.l.b16 %v1672
        %v1729 = vunpack.c.l.b16 %v1673
        %v1730 = vunpack.c.l.b16 %v1674
        %v1731 = vunpack.c.l.b16 %v1675
        %v1732 = vunpack.c.l.b16 %v1676
        %v1733 = vunpack.c.l.b16 %v1677
        %v1734 = vunpack.c.l.b16 %v1678
        %v1735 = vunpack.c.l.b16 %v1679
        %v1736 = vunpack.c.l.b16 %v1680
        %v1737 = vunpack.c.l.b16 %v1681
        %v1738 = vunpack.c.l.b16 %v1682
        %v1739 = vunpack.c.l.b16 %v1683
        %v1740 = vrot.slane %v1712, 7
        %v1741 = vrot.slane %v1714, 6
        %vm1742 = vcmask 1042434
        %v1743 = vsel %vm1742, %v1741, %v1740
        %v1744 = vrot.slane %v1716, 5
        %vm1745 = vcmask 1043459
        %v1746 = vsel %vm1745, %v1744, %v1743
        %v1747 = vrot.slane %v1718, 4
        %vm1748 = vcmask 1044484
        %v1749 = vsel %vm1748, %v1747, %v1746
        %v1750 = vrot.slane %v1720, 3
        %vm1751 = vcmask 1045509
        %v1752 = vsel %vm1751, %v1750, %v1749
        %v1753 = vrot.slane %v1722, 2
        %vm1754 = vcmask 1046534
        %v1755 = vsel %vm1754, %v1753, %v1752
        %v1756 = vrot.slane %v1724, 1
        %vm1757 = vcmask 1047559
        %v1758 = vsel %vm1757, %v1756, %v1755
        %v1759 = vrot.slane %v1713, 7
        %v1760 = vrot.slane %v1715, 6
        %v1761 = vsel %vm1742, %v1760, %v1759
        %v1762 = vrot.slane %v1717, 5
        %v1763 = vsel %vm1745, %v1762, %v1761
        %v1764 = vrot.slane %v1719, 4
        %v1765 = vsel %vm1748, %v1764, %v1763
        %v1766 = vrot.slane %v1721, 3
        %v1767 = vsel %vm1751, %v1766, %v1765
        %v1768 = vrot.slane %v1723, 2
        %v1769 = vsel %vm1754, %v1768, %v1767
        %v1770 = vrot.slane %v1725, 1
        %v1771 = vsel %vm1757, %v1770, %v1769
        %v1772 = vrot.slane %v1728, 7
        %vm1773 = vcmask 1041409
        %v1774 = vsel %vm1773, %v1772, %v1726
        %v1775 = vrot.slane %v1730, 6
        %v1776 = vsel %vm1742, %v1775, %v1774
        %v1777 = vrot.slane %v1732, 5
        %v1778 = vsel %vm1745, %v1777, %v1776
        %v1779 = vrot.slane %v1734, 4
        %v1780 = vsel %vm1748, %v1779, %v1778
        %v1781 = vrot.slane %v1736, 3
        %v1782 = vsel %vm1751, %v1781, %v1780
        %v1783 = vrot.slane %v1738, 2
        %v1784 = vsel %vm1754, %v1783, %v1782
        %v1785 = vrot.slane %v1729, 7
        %v1786 = vsel %vm1773, %v1785, %v1727
        %v1787 = vrot.slane %v1731, 6
        %v1788 = vsel %vm1742, %v1787, %v1786
        %v1789 = vrot.slane %v1733, 5
        %v1790 = vsel %vm1745, %v1789, %v1788
        %v1791 = vrot.slane %v1735, 4
        %v1792 = vsel %vm1748, %v1791, %v1790
        %v1793 = vrot.slane %v1737, 3
        %v1794 = vsel %vm1751, %v1793, %v1792
        %v1795 = vrot.slane %v1739, 2
        %v1796 = vsel %vm1754, %v1795, %v1794
        %v1797 = vpack.c.b16 %v1784, %v1758
        %v1798 = vpack.c.b16 %v1796, %v1771
        %v1801 = vsel %vm433, 0, %v1797
        %v1802 = vsel %vm433, 0, %v1798
        %vm1803 = vcmask 1047552
        %vm1804 = vmand %vm1803, %vm484
        %v1805 = vsel %vm1804, %v1801, 0
        %v1806 = vsel %vm1804, %v1802, 0
        %v1807 = vld [vmem:[%s3] sm:$0xff]
        %v1808 = vld [vmem:[%s3 + $0x8] sm:$0xff]
        %v1809 = vld [vmem:[%s3 + $0x10] sm:$0xff]
        %v1810 = vld [vmem:[%s3 + $0x18] sm:$0xff]
        %v1811 = vld [vmem:[%s3 + $0x20] sm:$0xff]
        %v1812 = vld [vmem:[%s3 + $0x28] sm:$0xff]
        %v1813 = vld [vmem:[%s3 + $0x30] sm:$0xff]
        %v1814 = vld [vmem:[%s3 + $0x38] sm:$0xff]
        %v1815 = vld [vmem:[%s3 + $0x40] sm:$0xff]
        %v1816 = vld [vmem:[%s3 + $0x48] sm:$0xff]
        %v1817 = vld [vmem:[%s3 + $0x50] sm:$0xff]
        %v1818 = vld [vmem:[%s3 + $0x58] sm:$0xff]
        %v1819 = vld [vmem:[%s3 + $0x60] sm:$0xff]
        %v1820 = vld [vmem:[%s3 + $0x68] sm:$0xff]
        %v1821 = vld [vmem:[%s3 + $0x70] sm:$0xff]
        %v1822 = vld [vmem:[%s3 + $0x78] sm:$0xff]
        %v1823 = vld [vmem:[%s3 + $0x80] sm:$0xff]
        %v1824 = vld [vmem:[%s3 + $0x88] sm:$0xff]
        %v1825 = vld [vmem:[%s3 + $0x90] sm:$0xff]
        %v1826 = vld [vmem:[%s3 + $0x98] sm:$0xff]
        %v1827 = vld [vmem:[%s3 + $0xa0] sm:$0xff]
        %v1828 = vld [vmem:[%s3 + $0xa8] sm:$0xff]
        %v1829 = vld [vmem:[%s3 + $0xb0] sm:$0xff]
        %v1830 = vld [vmem:[%s3 + $0xb8] sm:$0xff]
        %v1831 = vld [vmem:[%s3 + $0xc0] sm:$0xff]
        %v1832 = vld [vmem:[%s3 + $0xc8] sm:$0xff]
        %v1833 = vld [vmem:[%s3 + $0xd0] sm:$0xff]
        %v1834 = vld [vmem:[%s3 + $0xd8] sm:$0xff]
        %v1835 = vld [vmem:[%s3 + $0xe0] sm:$0xff]
        %v1836 = vld [vmem:[%s3 + $0xe8] sm:$0xff]
        %v1837 = vld [vmem:[%s3 + $0xf0] sm:$0xff]
        %v1838 = vld [vmem:[%s3 + $0xf8] sm:$0xff]
        %v1839 = vld [vmem:[%s3 + $0x100] sm:$0xff]
        %v1840 = vld [vmem:[%s3 + $0x108] sm:$0xff]
        %v1841 = vld [vmem:[%s3 + $0x110] sm:$0xff]
        %v1842 = vld [vmem:[%s3 + $0x118] sm:$0xff]
        %v1843 = vld [vmem:[%s3 + $0x120] sm:$0xff]
        %v1844 = vld [vmem:[%s3 + $0x128] sm:$0xff]
        %v1845 = vld [vmem:[%s3 + $0x130] sm:$0xff]
        %v1846 = vld [vmem:[%s3 + $0x138] sm:$0xff]
        %v1847 = vld [vmem:[%s3 + $0x140] sm:$0xff]
        %v1848 = vld [vmem:[%s3 + $0x148] sm:$0xff]
        %v1849 = vld [vmem:[%s3 + $0x150] sm:$0xff]
        %v1850 = vld [vmem:[%s3 + $0x158] sm:$0xff]
        %v1851 = vld [vmem:[%s3 + $0x160] sm:$0xff]
        %v1852 = vld [vmem:[%s3 + $0x168] sm:$0xff]
        %v1853 = vld [vmem:[%s3 + $0x170] sm:$0xff]
        %v1854 = vld [vmem:[%s3 + $0x178] sm:$0xff]
        %v1855 = vld [vmem:[%s3 + $0x180] sm:$0xff]
        %v1856 = vld [vmem:[%s3 + $0x188] sm:$0xff]
        %v1857 = vld [vmem:[%s3 + $0x190] sm:$0xff]
        %v1858 = vld [vmem:[%s3 + $0x198] sm:$0xff]
        %v1859 = vld [vmem:[%s3 + $0x1a0] sm:$0xff]
        %v1860 = vld [vmem:[%s3 + $0x1a8] sm:$0xff]
        %v1861 = vld [vmem:[%s3 + $0x1b0] sm:$0xff]
        %v1862 = vld [vmem:[%s3 + $0x1b8] sm:$0xff]
        %s1863 = scalar_lea.vmem %s3, 448
        %v1864 = vld [vmem:[%s1863] sm:$0xff]
        %v1865 = vld [vmem:[%s1863 + $0x8] sm:$0xff]
        %v1866 = vld [vmem:[%s1863 + $0x10] sm:$0xff]
        %v1867 = vld [vmem:[%s1863 + $0x18] sm:$0xff]
        %v1868 = vld [vmem:[%s1863 + $0x20] sm:$0xff]
        %v1869 = vld [vmem:[%s1863 + $0x28] sm:$0xff]
        %v1870 = vld [vmem:[%s1863 + $0x30] sm:$0xff]
        %v1871 = vld [vmem:[%s1863 + $0x38] sm:$0xff]
        %v1872 = vld [vmem:[%s1863 + $0x40] sm:$0xff]
        %v1873 = vld [vmem:[%s1863 + $0x48] sm:$0xff]
        %v1874 = vld [vmem:[%s1863 + $0x50] sm:$0xff]
        %v1875 = vld [vmem:[%s1863 + $0x58] sm:$0xff]
        %v1876 = vld [vmem:[%s1863 + $0x60] sm:$0xff]
        %v1877 = vld [vmem:[%s1863 + $0x68] sm:$0xff]
        %v1878 = vld [vmem:[%s1863 + $0x70] sm:$0xff]
        %v1879 = vld [vmem:[%s1863 + $0x78] sm:$0xff]
        %v1880 = vld [vmem:[%s1863 + $0x80] sm:$0xff]
        %v1881 = vld [vmem:[%s1863 + $0x88] sm:$0xff]
        %v1882 = vld [vmem:[%s1863 + $0x90] sm:$0xff]
        %v1883 = vld [vmem:[%s1863 + $0x98] sm:$0xff]
        %v1884 = vld [vmem:[%s1863 + $0xa0] sm:$0xff]
        %v1885 = vld [vmem:[%s1863 + $0xa8] sm:$0xff]
        %v1886 = vld [vmem:[%s1863 + $0xb0] sm:$0xff]
        %v1887 = vld [vmem:[%s1863 + $0xb8] sm:$0xff]
        %v1888 = vld [vmem:[%s1863 + $0xc0] sm:$0xff]
        %v1889 = vld [vmem:[%s1863 + $0xc8] sm:$0xff]
        %v1890 = vld [vmem:[%s1863 + $0xd0] sm:$0xff]
        %v1891 = vld [vmem:[%s1863 + $0xd8] sm:$0xff]
        %v1892 = vld [vmem:[%s1863 + $0xe0] sm:$0xff]
        %v1893 = vld [vmem:[%s1863 + $0xe8] sm:$0xff]
        %v1894 = vld [vmem:[%s1863 + $0xf0] sm:$0xff]
        %v1895 = vld [vmem:[%s1863 + $0xf8] sm:$0xff]
        %v1896 = vld [vmem:[%s1863 + $0x100] sm:$0xff]
        %v1897 = vld [vmem:[%s1863 + $0x108] sm:$0xff]
        %v1898 = vld [vmem:[%s1863 + $0x110] sm:$0xff]
        %v1899 = vld [vmem:[%s1863 + $0x118] sm:$0xff]
        %v1900 = vld [vmem:[%s1863 + $0x120] sm:$0xff]
        %v1901 = vld [vmem:[%s1863 + $0x128] sm:$0xff]
        %v1902 = vld [vmem:[%s1863 + $0x130] sm:$0xff]
        %v1903 = vld [vmem:[%s1863 + $0x138] sm:$0xff]
        %v1904 = vld [vmem:[%s1863 + $0x140] sm:$0xff]
        %v1905 = vld [vmem:[%s1863 + $0x148] sm:$0xff]
        %v1906 = vld [vmem:[%s1863 + $0x150] sm:$0xff]
        %v1907 = vld [vmem:[%s1863 + $0x158] sm:$0xff]
        %v1908 = vld [vmem:[%s1863 + $0x160] sm:$0xff]
        %v1909 = vld [vmem:[%s1863 + $0x168] sm:$0xff]
        %v1910 = vld [vmem:[%s1863 + $0x170] sm:$0xff]
        %v1911 = vld [vmem:[%s1863 + $0x178] sm:$0xff]
        %v1912 = vld [vmem:[%s1863 + $0x180] sm:$0xff]
        %v1913 = vld [vmem:[%s1863 + $0x188] sm:$0xff]
        %v1914 = vld [vmem:[%s1863 + $0x190] sm:$0xff]
        %v1915 = vld [vmem:[%s1863 + $0x198] sm:$0xff]
        %v1916 = vld [vmem:[%s1863 + $0x1a0] sm:$0xff]
        %v1917 = vld [vmem:[%s1863 + $0x1a8] sm:$0xff]
        %v1918 = vld [vmem:[%s1863 + $0x1b0] sm:$0xff]
        %v1919 = vld [vmem:[%s1863 + $0x1b8] sm:$0xff]
        %v1921 = vshrl.u32 %v1805, 16
        %v1923 = vshll.u32 %v1805, 16
        %v1925 = vrot.slane %v1923, 1
        %v1926 = vor.u32 %v1921, %v1925
        %v1928 = vshrl.u32 %v1806, 16
        %v1930 = vshll.u32 %v1806, 16
        %v1932 = vrot.slane %v1930, 1
        %v1933 = vor.u32 %v1928, %v1932
        %v1991 = vunpack.c.l.b16 %v1864
        %v1992 = vunpack.c.h.b16 %v1864
        %v1993 = vunpack.c.l.b16 %v1865
        %v1994 = vunpack.c.h.b16 %v1865
        %v1995 = vunpack.c.l.b16 %v1866
        %v1996 = vunpack.c.h.b16 %v1866
        %v1997 = vunpack.c.l.b16 %v1867
        %v1998 = vunpack.c.h.b16 %v1867
        %v1999 = vunpack.c.l.b16 %v1868
        %v2000 = vunpack.c.h.b16 %v1868
        %v2001 = vunpack.c.l.b16 %v1869
        %v2002 = vunpack.c.h.b16 %v1869
        %v2003 = vunpack.c.l.b16 %v1870
        %v2004 = vunpack.c.h.b16 %v1870
        %v2005 = vunpack.c.l.b16 %v1871
        %v2006 = vunpack.c.h.b16 %v1871
        %v2007 = vunpack.c.l.b16 %v1872
        %v2008 = vunpack.c.h.b16 %v1872
        %v2009 = vunpack.c.l.b16 %v1873
        %v2010 = vunpack.c.h.b16 %v1873
        %v2011 = vunpack.c.l.b16 %v1874
        %v2012 = vunpack.c.h.b16 %v1874
        %v2013 = vunpack.c.l.b16 %v1875
        %v2014 = vunpack.c.h.b16 %v1875
        %v2015 = vunpack.c.l.b16 %v1876
        %v2016 = vunpack.c.h.b16 %v1876
        %v2017 = vunpack.c.l.b16 %v1877
        %v2018 = vunpack.c.h.b16 %v1877
        %v2019 = vunpack.c.l.b16 %v1878
        %v2020 = vunpack.c.h.b16 %v1878
        %v2021 = vunpack.c.l.b16 %v1879
        %v2022 = vunpack.c.h.b16 %v1879
        %v2023 = vunpack.c.l.b16 %v1880
        %v2024 = vunpack.c.h.b16 %v1880
        %v2025 = vunpack.c.l.b16 %v1881
        %v2026 = vunpack.c.h.b16 %v1881
        %v2027 = vunpack.c.l.b16 %v1882
        %v2028 = vunpack.c.h.b16 %v1882
        %v2029 = vunpack.c.l.b16 %v1883
        %v2030 = vunpack.c.h.b16 %v1883
        %v2031 = vunpack.c.l.b16 %v1884
        %v2032 = vunpack.c.h.b16 %v1884
        %v2033 = vunpack.c.l.b16 %v1885
        %v2034 = vunpack.c.h.b16 %v1885
        %v2035 = vunpack.c.l.b16 %v1886
        %v2036 = vunpack.c.h.b16 %v1886
        %v2037 = vunpack.c.l.b16 %v1887
        %v2038 = vunpack.c.h.b16 %v1887
        %v2039 = vunpack.c.l.b16 %v1888
        %v2040 = vunpack.c.h.b16 %v1888
        %v2041 = vunpack.c.l.b16 %v1889
        %v2042 = vunpack.c.h.b16 %v1889
        %v2043 = vunpack.c.l.b16 %v1890
        %v2044 = vunpack.c.h.b16 %v1890
        %v2045 = vunpack.c.l.b16 %v1891
        %v2046 = vunpack.c.h.b16 %v1891
        %v2047 = vunpack.c.l.b16 %v1892
        %v2048 = vunpack.c.h.b16 %v1892
        %v2049 = vunpack.c.l.b16 %v1893
        %v2050 = vunpack.c.h.b16 %v1893
        %v2051 = vunpack.c.l.b16 %v1894
        %v2052 = vunpack.c.h.b16 %v1894
        %v2053 = vunpack.c.l.b16 %v1895
        %v2054 = vunpack.c.h.b16 %v1895
        %v2055 = vunpack.c.l.b16 %v1896
        %v2056 = vunpack.c.h.b16 %v1896
        %v2057 = vunpack.c.l.b16 %v1897
        %v2058 = vunpack.c.h.b16 %v1897
        %v2059 = vunpack.c.l.b16 %v1898
        %v2060 = vunpack.c.h.b16 %v1898
        %v2061 = vunpack.c.l.b16 %v1899
        %v2062 = vunpack.c.h.b16 %v1899
        %v2063 = vunpack.c.l.b16 %v1900
        %v2064 = vunpack.c.h.b16 %v1900
        %v2065 = vunpack.c.l.b16 %v1901
        %v2066 = vunpack.c.h.b16 %v1901
        %v2067 = vunpack.c.l.b16 %v1902
        %v2068 = vunpack.c.h.b16 %v1902
        %v2069 = vunpack.c.l.b16 %v1903
        %v2070 = vunpack.c.h.b16 %v1903
        %v2071 = vunpack.c.l.b16 %v1904
        %v2072 = vunpack.c.h.b16 %v1904
        %v2073 = vunpack.c.l.b16 %v1905
        %v2074 = vunpack.c.h.b16 %v1905
        %v2075 = vunpack.c.l.b16 %v1906
        %v2076 = vunpack.c.h.b16 %v1906
        %v2077 = vunpack.c.l.b16 %v1907
        %v2078 = vunpack.c.h.b16 %v1907
        %v2079 = vunpack.c.l.b16 %v1908
        %v2080 = vunpack.c.h.b16 %v1908
        %v2081 = vunpack.c.l.b16 %v1909
        %v2082 = vunpack.c.h.b16 %v1909
        %v2083 = vunpack.c.l.b16 %v1910
        %v2084 = vunpack.c.h.b16 %v1910
        %v2085 = vunpack.c.l.b16 %v1911
        %v2086 = vunpack.c.h.b16 %v1911
        %v2087 = vunpack.c.l.b16 %v1912
        %v2088 = vunpack.c.h.b16 %v1912
        %v2089 = vunpack.c.l.b16 %v1913
        %v2090 = vunpack.c.h.b16 %v1913
        %v2091 = vunpack.c.l.b16 %v1914
        %v2092 = vunpack.c.h.b16 %v1914
        %v2093 = vunpack.c.l.b16 %v1915
        %v2094 = vunpack.c.h.b16 %v1915
        %v2095 = vunpack.c.l.b16 %v1916
        %v2096 = vunpack.c.h.b16 %v1916
        %v2097 = vunpack.c.l.b16 %v1917
        %v2098 = vunpack.c.h.b16 %v1917
        %v2099 = vunpack.c.l.b16 %v1918
        %v2100 = vunpack.c.h.b16 %v1918
        %v2101 = vunpack.c.l.b16 %v1919
        %v2102 = vunpack.c.h.b16 %v1919
        %v2103 = vpack.c.b16 %v1995, %v1991
        %v2104 = vpack.c.b16 %v1996, %v1992
        %v2105 = vpack.c.b16 %v1997, %v1993
        %v2106 = vpack.c.b16 %v1998, %v1994
        %v2107 = vpack.c.b16 %v2003, %v1999
        %v2108 = vpack.c.b16 %v2004, %v2000
        %v2109 = vpack.c.b16 %v2005, %v2001
        %v2110 = vpack.c.b16 %v2006, %v2002
        %v2111 = vpack.c.b16 %v2011, %v2007
        %v2112 = vpack.c.b16 %v2012, %v2008
        %v2113 = vpack.c.b16 %v2013, %v2009
        %v2114 = vpack.c.b16 %v2014, %v2010
        %v2115 = vpack.c.b16 %v2019, %v2015
        %v2116 = vpack.c.b16 %v2020, %v2016
        %v2117 = vpack.c.b16 %v2021, %v2017
        %v2118 = vpack.c.b16 %v2022, %v2018
        %v2119 = vpack.c.b16 %v2027, %v2023
        %v2120 = vpack.c.b16 %v2028, %v2024
        %v2121 = vpack.c.b16 %v2029, %v2025
        %v2122 = vpack.c.b16 %v2030, %v2026
        %v2123 = vpack.c.b16 %v2035, %v2031
        %v2124 = vpack.c.b16 %v2036, %v2032
        %v2125 = vpack.c.b16 %v2037, %v2033
        %v2126 = vpack.c.b16 %v2038, %v2034
        %v2127 = vpack.c.b16 %v2043, %v2039
        %v2128 = vpack.c.b16 %v2044, %v2040
        %v2129 = vpack.c.b16 %v2045, %v2041
        %v2130 = vpack.c.b16 %v2046, %v2042
        %v2131 = vpack.c.b16 %v2051, %v2047
        %v2132 = vpack.c.b16 %v2052, %v2048
        %v2133 = vpack.c.b16 %v2053, %v2049
        %v2134 = vpack.c.b16 %v2054, %v2050
        %v2135 = vpack.c.b16 %v2059, %v2055
        %v2136 = vpack.c.b16 %v2060, %v2056
        %v2137 = vpack.c.b16 %v2061, %v2057
        %v2138 = vpack.c.b16 %v2062, %v2058
        %v2139 = vpack.c.b16 %v2067, %v2063
        %v2140 = vpack.c.b16 %v2068, %v2064
        %v2141 = vpack.c.b16 %v2069, %v2065
        %v2142 = vpack.c.b16 %v2070, %v2066
        %v2143 = vpack.c.b16 %v2075, %v2071
        %v2144 = vpack.c.b16 %v2076, %v2072
        %v2145 = vpack.c.b16 %v2077, %v2073
        %v2146 = vpack.c.b16 %v2078, %v2074
        %v2147 = vpack.c.b16 %v2083, %v2079
        %v2148 = vpack.c.b16 %v2084, %v2080
        %v2149 = vpack.c.b16 %v2085, %v2081
        %v2150 = vpack.c.b16 %v2086, %v2082
        %v2151 = vpack.c.b16 %v2091, %v2087
        %v2152 = vpack.c.b16 %v2092, %v2088
        %v2153 = vpack.c.b16 %v2093, %v2089
        %v2154 = vpack.c.b16 %v2094, %v2090
        %v2155 = vpack.c.b16 %v2099, %v2095
        %v2156 = vpack.c.b16 %v2100, %v2096
        %v2157 = vpack.c.b16 %v2101, %v2097
        %v2158 = vpack.c.b16 %v2102, %v2098
        %vm2215 = vcmask 785408
        %v2217 = vsel %vm2215, %v1933, 0
        %2219 = vmatprep.subr.bf16.mxu0 %v2104
        %2220 = vmatpush1.bf16.msra.mxu0 %v2103
        %2221 = vmatprep.subr.bf16.mxu0 %v2108
        %2222 = vmatpush1.bf16.msra.mxu0 %v2107
        %2223 = vmatprep.subr.bf16.mxu0 %v2112
        %2224 = vmatpush1.bf16.msra.mxu0 %v2111
        %2225 = vmatprep.subr.bf16.mxu0 %v2116
        %2226 = vmatpush1.bf16.msra.mxu0 %v2115
        %2227 = vmatprep.subr.bf16.mxu0 %v2120
        %2228 = vmatpush1.bf16.msra.mxu0 %v2119
        %2229 = vmatprep.subr.bf16.mxu0 %v2124
        %2230 = vmatpush1.bf16.msra.mxu0 %v2123
        %2231 = vmatprep.subr.bf16.mxu0 %v2128
        %2232 = vmatpush1.bf16.msra.mxu0 %v2127
        %2233 = vmatprep.subr.bf16.mxu0 %v2132
        %2234 = vmatpush1.bf16.msra.mxu0 %v2131
        %2235 = vmatprep.subr.bf16.mxu0 %v2136
        %2236 = vmatpush1.bf16.msra.mxu0 %v2135
        %2237 = vmatprep.subr.bf16.mxu0 %v2140
        %2238 = vmatpush1.bf16.msra.mxu0 %v2139
        %2239 = vmatprep.subr.bf16.mxu0 %v2144
        %2240 = vmatpush1.bf16.msra.mxu0 %v2143
        %2241 = vmatprep.subr.bf16.mxu0 %v2148
        %2242 = vmatpush1.bf16.msra.mxu0 %v2147
        %2243 = vmatprep.subr.bf16.mxu0 %v2152
        %2244 = vmatpush1.bf16.msra.mxu0 %v2151
        %2245 = vmatprep.subr.bf16.mxu0 %v2156
        %2246 = vmatpush1.bf16.msra.mxu0 %v2155
        %2247 = vmatprep.subr.bf16.mxu0 0
        %2248 = vmatpush1.bf16.msra.mxu0 0
        %2249 = vmatprep.subr.bf16.mxu0 0
        %2250 = vmatpush1.bf16.msra.mxu0 0
        %2251 = vmatprep.mubr.bf16.mxu0 %v2217
        %2252 = vmatmul.mubr.bf16.gmra.mrb[0].mxu0 %v1926
        %v2253 = vpop.f32.mrb[0].mxu0
        %v2254 = vadd.f32 0.0, %v2253
        %v2255 = vpop.f32.mrb[0].mxu0
        %v2256 = vadd.f32 0.0, %v2255
        %v2257 = vpop.f32.mrb[0].mxu0
        %v2258 = vadd.f32 0.0, %v2257
        %v2259 = vpop.f32.mrb[0].mxu0
        %v2260 = vadd.f32 0.0, %v2259
        %2261 = vdwg.mxu0
        %2262 = vmatprep.subr.bf16.mxu0 %v2106
        %2263 = vmatpush1.bf16.msra.mxu0 %v2105
        %2264 = vmatprep.subr.bf16.mxu0 %v2110
        %2265 = vmatpush1.bf16.msra.mxu0 %v2109
        %2266 = vmatprep.subr.bf16.mxu0 %v2114
        %2267 = vmatpush1.bf16.msra.mxu0 %v2113
        %2268 = vmatprep.subr.bf16.mxu0 %v2118
        %2269 = vmatpush1.bf16.msra.mxu0 %v2117
        %2270 = vmatprep.subr.bf16.mxu0 %v2122
        %2271 = vmatpush1.bf16.msra.mxu0 %v2121
        %2272 = vmatprep.subr.bf16.mxu0 %v2126
        %2273 = vmatpush1.bf16.msra.mxu0 %v2125
        %2274 = vmatprep.subr.bf16.mxu0 %v2130
        %2275 = vmatpush1.bf16.msra.mxu0 %v2129
        %2276 = vmatprep.subr.bf16.mxu0 %v2134
        %2277 = vmatpush1.bf16.msra.mxu0 %v2133
        %2278 = vmatprep.subr.bf16.mxu0 %v2138
        %2279 = vmatpush1.bf16.msra.mxu0 %v2137
        %2280 = vmatprep.subr.bf16.mxu0 %v2142
        %2281 = vmatpush1.bf16.msra.mxu0 %v2141
        %2282 = vmatprep.subr.bf16.mxu0 %v2146
        %2283 = vmatpush1.bf16.msra.mxu0 %v2145
        %2284 = vmatprep.subr.bf16.mxu0 %v2150
        %2285 = vmatpush1.bf16.msra.mxu0 %v2149
        %2286 = vmatprep.subr.bf16.mxu0 %v2154
        %2287 = vmatpush1.bf16.msra.mxu0 %v2153
        %2288 = vmatprep.subr.bf16.mxu0 %v2158
        %2289 = vmatpush1.bf16.msra.mxu0 %v2157
        %2290 = vmatprep.subr.bf16.mxu0 0
        %2291 = vmatpush1.bf16.msra.mxu0 0
        %2292 = vmatprep.subr.bf16.mxu0 0
        %2293 = vmatpush1.bf16.msra.mxu0 0
        %2294 = vmatprep.mubr.bf16.mxu0 %v2217
        %2295 = vmatmul.mubr.bf16.gmra.mrb[0].mxu0 %v1926
        %v2296 = vpop.f32.mrb[0].mxu0
        %v2297 = vadd.f32 0.0, %v2296
        %v2298 = vpop.f32.mrb[0].mxu0
        %v2299 = vadd.f32 0.0, %v2298
        %v2300 = vpop.f32.mrb[0].mxu0
        %v2301 = vadd.f32 0.0, %v2300
        %v2302 = vpop.f32.mrb[0].mxu0
        %v2303 = vadd.f32 0.0, %v2302
        %2304 = vdwg.mxu0
        %v2361 = vunpack.c.l.b16 %v1807
        %v2362 = vunpack.c.h.b16 %v1807
        %v2363 = vunpack.c.l.b16 %v1808
        %v2364 = vunpack.c.h.b16 %v1808
        %v2365 = vunpack.c.l.b16 %v1809
        %v2366 = vunpack.c.h.b16 %v1809
        %v2367 = vunpack.c.l.b16 %v1810
        %v2368 = vunpack.c.h.b16 %v1810
        %v2369 = vunpack.c.l.b16 %v1811
        %v2370 = vunpack.c.h.b16 %v1811
        %v2371 = vunpack.c.l.b16 %v1812
        %v2372 = vunpack.c.h.b16 %v1812
        %v2373 = vunpack.c.l.b16 %v1813
        %v2374 = vunpack.c.h.b16 %v1813
        %v2375 = vunpack.c.l.b16 %v1814
        %v2376 = vunpack.c.h.b16 %v1814
        %v2377 = vunpack.c.l.b16 %v1815
        %v2378 = vunpack.c.h.b16 %v1815
        %v2379 = vunpack.c.l.b16 %v1816
        %v2380 = vunpack.c.h.b16 %v1816
        %v2381 = vunpack.c.l.b16 %v1817
        %v2382 = vunpack.c.h.b16 %v1817
        %v2383 = vunpack.c.l.b16 %v1818
        %v2384 = vunpack.c.h.b16 %v1818
        %v2385 = vunpack.c.l.b16 %v1819
        %v2386 = vunpack.c.h.b16 %v1819
        %v2387 = vunpack.c.l.b16 %v1820
        %v2388 = vunpack.c.h.b16 %v1820
        %v2389 = vunpack.c.l.b16 %v1821
        %v2390 = vunpack.c.h.b16 %v1821
        %v2391 = vunpack.c.l.b16 %v1822
        %v2392 = vunpack.c.h.b16 %v1822
        %v2393 = vunpack.c.l.b16 %v1823
        %v2394 = vunpack.c.h.b16 %v1823
        %v2395 = vunpack.c.l.b16 %v1824
        %v2396 = vunpack.c.h.b16 %v1824
        %v2397 = vunpack.c.l.b16 %v1825
        %v2398 = vunpack.c.h.b16 %v1825
        %v2399 = vunpack.c.l.b16 %v1826
        %v2400 = vunpack.c.h.b16 %v1826
        %v2401 = vunpack.c.l.b16 %v1827
        %v2402 = vunpack.c.h.b16 %v1827
        %v2403 = vunpack.c.l.b16 %v1828
        %v2404 = vunpack.c.h.b16 %v1828
        %v2405 = vunpack.c.l.b16 %v1829
        %v2406 = vunpack.c.h.b16 %v1829
        %v2407 = vunpack.c.l.b16 %v1830
        %v2408 = vunpack.c.h.b16 %v1830
        %v2409 = vunpack.c.l.b16 %v1831
        %v2410 = vunpack.c.h.b16 %v1831
        %v2411 = vunpack.c.l.b16 %v1832
        %v2412 = vunpack.c.h.b16 %v1832
        %v2413 = vunpack.c.l.b16 %v1833
        %v2414 = vunpack.c.h.b16 %v1833
        %v2415 = vunpack.c.l.b16 %v1834
        %v2416 = vunpack.c.h.b16 %v1834
        %v2417 = vunpack.c.l.b16 %v1835
        %v2418 = vunpack.c.h.b16 %v1835
        %v2419 = vunpack.c.l.b16 %v1836
        %v2420 = vunpack.c.h.b16 %v1836
        %v2421 = vunpack.c.l.b16 %v1837
        %v2422 = vunpack.c.h.b16 %v1837
        %v2423 = vunpack.c.l.b16 %v1838
        %v2424 = vunpack.c.h.b16 %v1838
        %v2425 = vunpack.c.l.b16 %v1839
        %v2426 = vunpack.c.h.b16 %v1839
        %v2427 = vunpack.c.l.b16 %v1840
        %v2428 = vunpack.c.h.b16 %v1840
        %v2429 = vunpack.c.l.b16 %v1841
        %v2430 = vunpack.c.h.b16 %v1841
        %v2431 = vunpack.c.l.b16 %v1842
        %v2432 = vunpack.c.h.b16 %v1842
        %v2433 = vunpack.c.l.b16 %v1843
        %v2434 = vunpack.c.h.b16 %v1843
        %v2435 = vunpack.c.l.b16 %v1844
        %v2436 = vunpack.c.h.b16 %v1844
        %v2437 = vunpack.c.l.b16 %v1845
        %v2438 = vunpack.c.h.b16 %v1845
        %v2439 = vunpack.c.l.b16 %v1846
        %v2440 = vunpack.c.h.b16 %v1846
        %v2441 = vunpack.c.l.b16 %v1847
        %v2442 = vunpack.c.h.b16 %v1847
        %v2443 = vunpack.c.l.b16 %v1848
        %v2444 = vunpack.c.h.b16 %v1848
        %v2445 = vunpack.c.l.b16 %v1849
        %v2446 = vunpack.c.h.b16 %v1849
        %v2447 = vunpack.c.l.b16 %v1850
        %v2448 = vunpack.c.h.b16 %v1850
        %v2449 = vunpack.c.l.b16 %v1851
        %v2450 = vunpack.c.h.b16 %v1851
        %v2451 = vunpack.c.l.b16 %v1852
        %v2452 = vunpack.c.h.b16 %v1852
        %v2453 = vunpack.c.l.b16 %v1853
        %v2454 = vunpack.c.h.b16 %v1853
        %v2455 = vunpack.c.l.b16 %v1854
        %v2456 = vunpack.c.h.b16 %v1854
        %v2457 = vunpack.c.l.b16 %v1855
        %v2458 = vunpack.c.h.b16 %v1855
        %v2459 = vunpack.c.l.b16 %v1856
        %v2460 = vunpack.c.h.b16 %v1856
        %v2461 = vunpack.c.l.b16 %v1857
        %v2462 = vunpack.c.h.b16 %v1857
        %v2463 = vunpack.c.l.b16 %v1858
        %v2464 = vunpack.c.h.b16 %v1858
        %v2465 = vunpack.c.l.b16 %v1859
        %v2466 = vunpack.c.h.b16 %v1859
        %v2467 = vunpack.c.l.b16 %v1860
        %v2468 = vunpack.c.h.b16 %v1860
        %v2469 = vunpack.c.l.b16 %v1861
        %v2470 = vunpack.c.h.b16 %v1861
        %v2471 = vunpack.c.l.b16 %v1862
        %v2472 = vunpack.c.h.b16 %v1862
        %v2473 = vpack.c.b16 %v2365, %v2361
        %v2474 = vpack.c.b16 %v2366, %v2362
        %v2475 = vpack.c.b16 %v2367, %v2363
        %v2476 = vpack.c.b16 %v2368, %v2364
        %v2477 = vpack.c.b16 %v2373, %v2369
        %v2478 = vpack.c.b16 %v2374, %v2370
        %v2479 = vpack.c.b16 %v2375, %v2371
        %v2480 = vpack.c.b16 %v2376, %v2372
        %v2481 = vpack.c.b16 %v2381, %v2377
        %v2482 = vpack.c.b16 %v2382, %v2378
        %v2483 = vpack.c.b16 %v2383, %v2379
        %v2484 = vpack.c.b16 %v2384, %v2380
        %v2485 = vpack.c.b16 %v2389, %v2385
        %v2486 = vpack.c.b16 %v2390, %v2386
        %v2487 = vpack.c.b16 %v2391, %v2387
        %v2488 = vpack.c.b16 %v2392, %v2388
        %v2489 = vpack.c.b16 %v2397, %v2393
        %v2490 = vpack.c.b16 %v2398, %v2394
        %v2491 = vpack.c.b16 %v2399, %v2395
        %v2492 = vpack.c.b16 %v2400, %v2396
        %v2493 = vpack.c.b16 %v2405, %v2401
        %v2494 = vpack.c.b16 %v2406, %v2402
        %v2495 = vpack.c.b16 %v2407, %v2403
        %v2496 = vpack.c.b16 %v2408, %v2404
        %v2497 = vpack.c.b16 %v2413, %v2409
        %v2498 = vpack.c.b16 %v2414, %v2410
        %v2499 = vpack.c.b16 %v2415, %v2411
        %v2500 = vpack.c.b16 %v2416, %v2412
        %v2501 = vpack.c.b16 %v2421, %v2417
        %v2502 = vpack.c.b16 %v2422, %v2418
        %v2503 = vpack.c.b16 %v2423, %v2419
        %v2504 = vpack.c.b16 %v2424, %v2420
        %v2505 = vpack.c.b16 %v2429, %v2425
        %v2506 = vpack.c.b16 %v2430, %v2426
        %v2507 = vpack.c.b16 %v2431, %v2427
        %v2508 = vpack.c.b16 %v2432, %v2428
        %v2509 = vpack.c.b16 %v2437, %v2433
        %v2510 = vpack.c.b16 %v2438, %v2434
        %v2511 = vpack.c.b16 %v2439, %v2435
        %v2512 = vpack.c.b16 %v2440, %v2436
        %v2513 = vpack.c.b16 %v2445, %v2441
        %v2514 = vpack.c.b16 %v2446, %v2442
        %v2515 = vpack.c.b16 %v2447, %v2443
        %v2516 = vpack.c.b16 %v2448, %v2444
        %v2517 = vpack.c.b16 %v2453, %v2449
        %v2518 = vpack.c.b16 %v2454, %v2450
        %v2519 = vpack.c.b16 %v2455, %v2451
        %v2520 = vpack.c.b16 %v2456, %v2452
        %v2521 = vpack.c.b16 %v2461, %v2457
        %v2522 = vpack.c.b16 %v2462, %v2458
        %v2523 = vpack.c.b16 %v2463, %v2459
        %v2524 = vpack.c.b16 %v2464, %v2460
        %v2525 = vpack.c.b16 %v2469, %v2465
        %v2526 = vpack.c.b16 %v2470, %v2466
        %v2527 = vpack.c.b16 %v2471, %v2467
        %v2528 = vpack.c.b16 %v2472, %v2468
        %v2585 = vsel %vm2215, %v1806, 0
        %2587 = vmatprep.subr.bf16.mxu0 %v2474
        %2588 = vmatpush1.bf16.msra.mxu0 %v2473
        %2589 = vmatprep.subr.bf16.mxu0 %v2478
        %2590 = vmatpush1.bf16.msra.mxu0 %v2477
        %2591 = vmatprep.subr.bf16.mxu0 %v2482
        %2592 = vmatpush1.bf16.msra.mxu0 %v2481
        %2593 = vmatprep.subr.bf16.mxu0 %v2486
        %2594 = vmatpush1.bf16.msra.mxu0 %v2485
        %2595 = vmatprep.subr.bf16.mxu0 %v2490
        %2596 = vmatpush1.bf16.msra.mxu0 %v2489
        %2597 = vmatprep.subr.bf16.mxu0 %v2494
        %2598 = vmatpush1.bf16.msra.mxu0 %v2493
        %2599 = vmatprep.subr.bf16.mxu0 %v2498
        %2600 = vmatpush1.bf16.msra.mxu0 %v2497
        %2601 = vmatprep.subr.bf16.mxu0 %v2502
        %2602 = vmatpush1.bf16.msra.mxu0 %v2501
        %2603 = vmatprep.subr.bf16.mxu0 %v2506
        %2604 = vmatpush1.bf16.msra.mxu0 %v2505
        %2605 = vmatprep.subr.bf16.mxu0 %v2510
        %2606 = vmatpush1.bf16.msra.mxu0 %v2509
        %2607 = vmatprep.subr.bf16.mxu0 %v2514
        %2608 = vmatpush1.bf16.msra.mxu0 %v2513
        %2609 = vmatprep.subr.bf16.mxu0 %v2518
        %2610 = vmatpush1.bf16.msra.mxu0 %v2517
        %2611 = vmatprep.subr.bf16.mxu0 %v2522
        %2612 = vmatpush1.bf16.msra.mxu0 %v2521
        %2613 = vmatprep.subr.bf16.mxu0 %v2526
        %2614 = vmatpush1.bf16.msra.mxu0 %v2525
        %2615 = vmatprep.subr.bf16.mxu0 0
        %2616 = vmatpush1.bf16.msra.mxu0 0
        %2617 = vmatprep.subr.bf16.mxu0 0
        %2618 = vmatpush1.bf16.msra.mxu0 0
        %2619 = vmatprep.mubr.bf16.mxu0 %v2585
        %2620 = vmatmul.mubr.bf16.gmra.mrb[0].mxu0 %v1805
        %v2621 = vpop.f32.mrb[0].mxu0
        %v2622 = vadd.f32 %v2254, %v2621
        %v2623 = vpop.f32.mrb[0].mxu0
        %v2624 = vadd.f32 %v2256, %v2623
        %v2625 = vpop.f32.mrb[0].mxu0
        %v2626 = vadd.f32 %v2258, %v2625
        %v2627 = vpop.f32.mrb[0].mxu0
        %v2628 = vadd.f32 %v2260, %v2627
        %2629 = vdwg.mxu0
        %2630 = vmatprep.subr.bf16.mxu0 %v2476
        %2631 = vmatpush1.bf16.msra.mxu0 %v2475
        %2632 = vmatprep.subr.bf16.mxu0 %v2480
        %2633 = vmatpush1.bf16.msra.mxu0 %v2479
        %2634 = vmatprep.subr.bf16.mxu0 %v2484
        %2635 = vmatpush1.bf16.msra.mxu0 %v2483
        %2636 = vmatprep.subr.bf16.mxu0 %v2488
        %2637 = vmatpush1.bf16.msra.mxu0 %v2487
        %2638 = vmatprep.subr.bf16.mxu0 %v2492
        %2639 = vmatpush1.bf16.msra.mxu0 %v2491
        %2640 = vmatprep.subr.bf16.mxu0 %v2496
        %2641 = vmatpush1.bf16.msra.mxu0 %v2495
        %2642 = vmatprep.subr.bf16.mxu0 %v2500
        %2643 = vmatpush1.bf16.msra.mxu0 %v2499
        %2644 = vmatprep.subr.bf16.mxu0 %v2504
        %2645 = vmatpush1.bf16.msra.mxu0 %v2503
        %2646 = vmatprep.subr.bf16.mxu0 %v2508
        %2647 = vmatpush1.bf16.msra.mxu0 %v2507
        %2648 = vmatprep.subr.bf16.mxu0 %v2512
        %2649 = vmatpush1.bf16.msra.mxu0 %v2511
        %2650 = vmatprep.subr.bf16.mxu0 %v2516
        %2651 = vmatpush1.bf16.msra.mxu0 %v2515
        %2652 = vmatprep.subr.bf16.mxu0 %v2520
        %2653 = vmatpush1.bf16.msra.mxu0 %v2519
        %2654 = vmatprep.subr.bf16.mxu0 %v2524
        %2655 = vmatpush1.bf16.msra.mxu0 %v2523
        %2656 = vmatprep.subr.bf16.mxu0 %v2528
        %2657 = vmatpush1.bf16.msra.mxu0 %v2527
        %2658 = vmatprep.subr.bf16.mxu0 0
        %2659 = vmatpush1.bf16.msra.mxu0 0
        %2660 = vmatprep.subr.bf16.mxu0 0
        %2661 = vmatpush1.bf16.msra.mxu0 0
        %2662 = vmatprep.mubr.bf16.mxu0 %v2585
        %2663 = vmatmul.mubr.bf16.gmra.mrb[0].mxu0 %v1805
        %v2664 = vpop.f32.mrb[0].mxu0
        %v2665 = vadd.f32 %v2297, %v2664
        %v2666 = vpop.f32.mrb[0].mxu0
        %v2667 = vadd.f32 %v2299, %v2666
        %v2668 = vpop.f32.mrb[0].mxu0
        %v2669 = vadd.f32 %v2301, %v2668
        %v2670 = vpop.f32.mrb[0].mxu0
        %v2671 = vadd.f32 %v2303, %v2670
        %2672 = vdwg.mxu0
        %s2673 = scalar_lea.vmem %s3, 896
        %v2674 = vld [vmem:[%s2673] sm:$0xff]
        %v2675 = vld [vmem:[%s2673 + $0x8] sm:$0xff]
        %v2676 = vld [vmem:[%s2673 + $0x10] sm:$0xff]
        %v2677 = vld [vmem:[%s2673 + $0x18] sm:$0xff]
        %v2678 = vld [vmem:[%s2673 + $0x20] sm:$0xff]
        %v2679 = vld [vmem:[%s2673 + $0x28] sm:$0xff]
        %v2680 = vld [vmem:[%s2673 + $0x30] sm:$0xff]
        %v2681 = vld [vmem:[%s2673 + $0x38] sm:$0xff]
        %v2682 = vld [vmem:[%s2673 + $0x40] sm:$0xff]
        %v2683 = vld [vmem:[%s2673 + $0x48] sm:$0xff]
        %v2684 = vld [vmem:[%s2673 + $0x50] sm:$0xff]
        %v2685 = vld [vmem:[%s2673 + $0x58] sm:$0xff]
        %v2686 = vld [vmem:[%s2673 + $0x60] sm:$0xff]
        %v2687 = vld [vmem:[%s2673 + $0x68] sm:$0xff]
        %v2688 = vld [vmem:[%s2673 + $0x70] sm:$0xff]
        %v2689 = vld [vmem:[%s2673 + $0x78] sm:$0xff]
        %v2690 = vld [vmem:[%s2673 + $0x80] sm:$0xff]
        %v2691 = vld [vmem:[%s2673 + $0x88] sm:$0xff]
        %v2692 = vld [vmem:[%s2673 + $0x90] sm:$0xff]
        %v2693 = vld [vmem:[%s2673 + $0x98] sm:$0xff]
        %v2694 = vld [vmem:[%s2673 + $0xa0] sm:$0xff]
        %v2695 = vld [vmem:[%s2673 + $0xa8] sm:$0xff]
        %v2696 = vld [vmem:[%s2673 + $0xb0] sm:$0xff]
        %v2697 = vld [vmem:[%s2673 + $0xb8] sm:$0xff]
        %v2698 = vld [vmem:[%s2673 + $0xc0] sm:$0xff]
        %v2699 = vld [vmem:[%s2673 + $0xc8] sm:$0xff]
        %v2700 = vld [vmem:[%s2673 + $0xd0] sm:$0xff]
        %v2701 = vld [vmem:[%s2673 + $0xd8] sm:$0xff]
        %v2702 = vld [vmem:[%s2673 + $0xe0] sm:$0xff]
        %v2703 = vld [vmem:[%s2673 + $0xe8] sm:$0xff]
        %v2704 = vld [vmem:[%s2673 + $0xf0] sm:$0xff]
        %v2705 = vld [vmem:[%s2673 + $0xf8] sm:$0xff]
        %v2706 = vld [vmem:[%s2673 + $0x100] sm:$0xff]
        %v2707 = vld [vmem:[%s2673 + $0x108] sm:$0xff]
        %v2708 = vld [vmem:[%s2673 + $0x110] sm:$0xff]
        %v2709 = vld [vmem:[%s2673 + $0x118] sm:$0xff]
        %v2710 = vld [vmem:[%s2673 + $0x120] sm:$0xff]
        %v2711 = vld [vmem:[%s2673 + $0x128] sm:$0xff]
        %v2712 = vld [vmem:[%s2673 + $0x130] sm:$0xff]
        %v2713 = vld [vmem:[%s2673 + $0x138] sm:$0xff]
        %v2714 = vld [vmem:[%s2673 + $0x140] sm:$0xff]
        %v2715 = vld [vmem:[%s2673 + $0x148] sm:$0xff]
        %v2716 = vld [vmem:[%s2673 + $0x150] sm:$0xff]
        %v2717 = vld [vmem:[%s2673 + $0x158] sm:$0xff]
        %v2718 = vld [vmem:[%s2673 + $0x160] sm:$0xff]
        %v2719 = vld [vmem:[%s2673 + $0x168] sm:$0xff]
        %v2720 = vld [vmem:[%s2673 + $0x170] sm:$0xff]
        %v2721 = vld [vmem:[%s2673 + $0x178] sm:$0xff]
        %v2722 = vld [vmem:[%s2673 + $0x180] sm:$0xff]
        %v2723 = vld [vmem:[%s2673 + $0x188] sm:$0xff]
        %v2724 = vld [vmem:[%s2673 + $0x190] sm:$0xff]
        %v2725 = vld [vmem:[%s2673 + $0x198] sm:$0xff]
        %v2726 = vld [vmem:[%s2673 + $0x1a0] sm:$0xff]
        %v2727 = vld [vmem:[%s2673 + $0x1a8] sm:$0xff]
        %v2728 = vld [vmem:[%s2673 + $0x1b0] sm:$0xff]
        %v2729 = vld [vmem:[%s2673 + $0x1b8] sm:$0xff]
        %v2732 = vrot.slane %v1805, 1
        %v2733 = vrot.slane %v1806, 1
        %v2791 = vunpack.c.l.b16 %v2674
        %v2792 = vunpack.c.h.b16 %v2674
        %v2793 = vunpack.c.l.b16 %v2675
        %v2794 = vunpack.c.h.b16 %v2675
        %v2795 = vunpack.c.l.b16 %v2676
        %v2796 = vunpack.c.h.b16 %v2676
        %v2797 = vunpack.c.l.b16 %v2677
        %v2798 = vunpack.c.h.b16 %v2677
        %v2799 = vunpack.c.l.b16 %v2678
        %v2800 = vunpack.c.h.b16 %v2678
        %v2801 = vunpack.c.l.b16 %v2679
        %v2802 = vunpack.c.h.b16 %v2679
        %v2803 = vunpack.c.l.b16 %v2680
        %v2804 = vunpack.c.h.b16 %v2680
        %v2805 = vunpack.c.l.b16 %v2681
        %v2806 = vunpack.c.h.b16 %v2681
        %v2807 = vunpack.c.l.b16 %v2682
        %v2808 = vunpack.c.h.b16 %v2682
        %v2809 = vunpack.c.l.b16 %v2683
        %v2810 = vunpack.c.h.b16 %v2683
        %v2811 = vunpack.c.l.b16 %v2684
        %v2812 = vunpack.c.h.b16 %v2684
        %v2813 = vunpack.c.l.b16 %v2685
        %v2814 = vunpack.c.h.b16 %v2685
        %v2815 = vunpack.c.l.b16 %v2686
        %v2816 = vunpack.c.h.b16 %v2686
        %v2817 = vunpack.c.l.b16 %v2687
        %v2818 = vunpack.c.h.b16 %v2687
        %v2819 = vunpack.c.l.b16 %v2688
        %v2820 = vunpack.c.h.b16 %v2688
        %v2821 = vunpack.c.l.b16 %v2689
        %v2822 = vunpack.c.h.b16 %v2689
        %v2823 = vunpack.c.l.b16 %v2690
        %v2824 = vunpack.c.h.b16 %v2690
        %v2825 = vunpack.c.l.b16 %v2691
        %v2826 = vunpack.c.h.b16 %v2691
        %v2827 = vunpack.c.l.b16 %v2692
        %v2828 = vunpack.c.h.b16 %v2692
        %v2829 = vunpack.c.l.b16 %v2693
        %v2830 = vunpack.c.h.b16 %v2693
        %v2831 = vunpack.c.l.b16 %v2694
        %v2832 = vunpack.c.h.b16 %v2694
        %v2833 = vunpack.c.l.b16 %v2695
        %v2834 = vunpack.c.h.b16 %v2695
        %v2835 = vunpack.c.l.b16 %v2696
        %v2836 = vunpack.c.h.b16 %v2696
        %v2837 = vunpack.c.l.b16 %v2697
        %v2838 = vunpack.c.h.b16 %v2697
        %v2839 = vunpack.c.l.b16 %v2698
        %v2840 = vunpack.c.h.b16 %v2698
        %v2841 = vunpack.c.l.b16 %v2699
        %v2842 = vunpack.c.h.b16 %v2699
        %v2843 = vunpack.c.l.b16 %v2700
        %v2844 = vunpack.c.h.b16 %v2700
        %v2845 = vunpack.c.l.b16 %v2701
        %v2846 = vunpack.c.h.b16 %v2701
        %v2847 = vunpack.c.l.b16 %v2702
        %v2848 = vunpack.c.h.b16 %v2702
        %v2849 = vunpack.c.l.b16 %v2703
        %v2850 = vunpack.c.h.b16 %v2703
        %v2851 = vunpack.c.l.b16 %v2704
        %v2852 = vunpack.c.h.b16 %v2704
        %v2853 = vunpack.c.l.b16 %v2705
        %v2854 = vunpack.c.h.b16 %v2705
        %v2855 = vunpack.c.l.b16 %v2706
        %v2856 = vunpack.c.h.b16 %v2706
        %v2857 = vunpack.c.l.b16 %v2707
        %v2858 = vunpack.c.h.b16 %v2707
        %v2859 = vunpack.c.l.b16 %v2708
        %v2860 = vunpack.c.h.b16 %v2708
        %v2861 = vunpack.c.l.b16 %v2709
        %v2862 = vunpack.c.h.b16 %v2709
        %v2863 = vunpack.c.l.b16 %v2710
        %v2864 = vunpack.c.h.b16 %v2710
        %v2865 = vunpack.c.l.b16 %v2711
        %v2866 = vunpack.c.h.b16 %v2711
        %v2867 = vunpack.c.l.b16 %v2712
        %v2868 = vunpack.c.h.b16 %v2712
        %v2869 = vunpack.c.l.b16 %v2713
        %v2870 = vunpack.c.h.b16 %v2713
        %v2871 = vunpack.c.l.b16 %v2714
        %v2872 = vunpack.c.h.b16 %v2714
        %v2873 = vunpack.c.l.b16 %v2715
        %v2874 = vunpack.c.h.b16 %v2715
        %v2875 = vunpack.c.l.b16 %v2716
        %v2876 = vunpack.c.h.b16 %v2716
        %v2877 = vunpack.c.l.b16 %v2717
        %v2878 = vunpack.c.h.b16 %v2717
        %v2879 = vunpack.c.l.b16 %v2718
        %v2880 = vunpack.c.h.b16 %v2718
        %v2881 = vunpack.c.l.b16 %v2719
        %v2882 = vunpack.c.h.b16 %v2719
        %v2883 = vunpack.c.l.b16 %v2720
        %v2884 = vunpack.c.h.b16 %v2720
        %v2885 = vunpack.c.l.b16 %v2721
        %v2886 = vunpack.c.h.b16 %v2721
        %v2887 = vunpack.c.l.b16 %v2722
        %v2888 = vunpack.c.h.b16 %v2722
        %v2889 = vunpack.c.l.b16 %v2723
        %v2890 = vunpack.c.h.b16 %v2723
        %v2891 = vunpack.c.l.b16 %v2724
        %v2892 = vunpack.c.h.b16 %v2724
        %v2893 = vunpack.c.l.b16 %v2725
        %v2894 = vunpack.c.h.b16 %v2725
        %v2895 = vunpack.c.l.b16 %v2726
        %v2896 = vunpack.c.h.b16 %v2726
        %v2897 = vunpack.c.l.b16 %v2727
        %v2898 = vunpack.c.h.b16 %v2727
        %v2899 = vunpack.c.l.b16 %v2728
        %v2900 = vunpack.c.h.b16 %v2728
        %v2901 = vunpack.c.l.b16 %v2729
        %v2902 = vunpack.c.h.b16 %v2729
        %v2903 = vpack.c.b16 %v2795, %v2791
        %v2904 = vpack.c.b16 %v2796, %v2792
        %v2905 = vpack.c.b16 %v2797, %v2793
        %v2906 = vpack.c.b16 %v2798, %v2794
        %v2907 = vpack.c.b16 %v2803, %v2799
        %v2908 = vpack.c.b16 %v2804, %v2800
        %v2909 = vpack.c.b16 %v2805, %v2801
        %v2910 = vpack.c.b16 %v2806, %v2802
        %v2911 = vpack.c.b16 %v2811, %v2807
        %v2912 = vpack.c.b16 %v2812, %v2808
        %v2913 = vpack.c.b16 %v2813, %v2809
        %v2914 = vpack.c.b16 %v2814, %v2810
        %v2915 = vpack.c.b16 %v2819, %v2815
        %v2916 = vpack.c.b16 %v2820, %v2816
        %v2917 = vpack.c.b16 %v2821, %v2817
        %v2918 = vpack.c.b16 %v2822, %v2818
        %v2919 = vpack.c.b16 %v2827, %v2823
        %v2920 = vpack.c.b16 %v2828, %v2824
        %v2921 = vpack.c.b16 %v2829, %v2825
        %v2922 = vpack.c.b16 %v2830, %v2826
        %v2923 = vpack.c.b16 %v2835, %v2831
        %v2924 = vpack.c.b16 %v2836, %v2832
        %v2925 = vpack.c.b16 %v2837, %v2833
        %v2926 = vpack.c.b16 %v2838, %v2834
        %v2927 = vpack.c.b16 %v2843, %v2839
        %v2928 = vpack.c.b16 %v2844, %v2840
        %v2929 = vpack.c.b16 %v2845, %v2841
        %v2930 = vpack.c.b16 %v2846, %v2842
        %v2931 = vpack.c.b16 %v2851, %v2847
        %v2932 = vpack.c.b16 %v2852, %v2848
        %v2933 = vpack.c.b16 %v2853, %v2849
        %v2934 = vpack.c.b16 %v2854, %v2850
        %v2935 = vpack.c.b16 %v2859, %v2855
        %v2936 = vpack.c.b16 %v2860, %v2856
        %v2937 = vpack.c.b16 %v2861, %v2857
        %v2938 = vpack.c.b16 %v2862, %v2858
        %v2939 = vpack.c.b16 %v2867, %v2863
        %v2940 = vpack.c.b16 %v2868, %v2864
        %v2941 = vpack.c.b16 %v2869, %v2865
        %v2942 = vpack.c.b16 %v2870, %v2866
        %v2943 = vpack.c.b16 %v2875, %v2871
        %v2944 = vpack.c.b16 %v2876, %v2872
        %v2945 = vpack.c.b16 %v2877, %v2873
        %v2946 = vpack.c.b16 %v2878, %v2874
        %v2947 = vpack.c.b16 %v2883, %v2879
        %v2948 = vpack.c.b16 %v2884, %v2880
        %v2949 = vpack.c.b16 %v2885, %v2881
        %v2950 = vpack.c.b16 %v2886, %v2882
        %v2951 = vpack.c.b16 %v2891, %v2887
        %v2952 = vpack.c.b16 %v2892, %v2888
        %v2953 = vpack.c.b16 %v2893, %v2889
        %v2954 = vpack.c.b16 %v2894, %v2890
        %v2955 = vpack.c.b16 %v2899, %v2895
        %v2956 = vpack.c.b16 %v2900, %v2896
        %v2957 = vpack.c.b16 %v2901, %v2897
        %v2958 = vpack.c.b16 %v2902, %v2898
        %v3016 = vsel %vm2215, %v2733, 0
        %3018 = vmatprep.subr.bf16.mxu0 %v2904
        %3019 = vmatpush1.bf16.msra.mxu0 %v2903
        %3020 = vmatprep.subr.bf16.mxu0 %v2908
        %3021 = vmatpush1.bf16.msra.mxu0 %v2907
        %3022 = vmatprep.subr.bf16.mxu0 %v2912
        %3023 = vmatpush1.bf16.msra.mxu0 %v2911
        %3024 = vmatprep.subr.bf16.mxu0 %v2916
        %3025 = vmatpush1.bf16.msra.mxu0 %v2915
        %3026 = vmatprep.subr.bf16.mxu0 %v2920
        %3027 = vmatpush1.bf16.msra.mxu0 %v2919
        %3028 = vmatprep.subr.bf16.mxu0 %v2924
        %3029 = vmatpush1.bf16.msra.mxu0 %v2923
        %3030 = vmatprep.subr.bf16.mxu0 %v2928
        %3031 = vmatpush1.bf16.msra.mxu0 %v2927
        %3032 = vmatprep.subr.bf16.mxu0 %v2932
        %3033 = vmatpush1.bf16.msra.mxu0 %v2931
        %3034 = vmatprep.subr.bf16.mxu0 %v2936
        %3035 = vmatpush1.bf16.msra.mxu0 %v2935
        %3036 = vmatprep.subr.bf16.mxu0 %v2940
        %3037 = vmatpush1.bf16.msra.mxu0 %v2939
        %3038 = vmatprep.subr.bf16.mxu0 %v2944
        %3039 = vmatpush1.bf16.msra.mxu0 %v2943
        %3040 = vmatprep.subr.bf16.mxu0 %v2948
        %3041 = vmatpush1.bf16.msra.mxu0 %v2947
        %3042 = vmatprep.subr.bf16.mxu0 %v2952
        %3043 = vmatpush1.bf16.msra.mxu0 %v2951
        %3044 = vmatprep.subr.bf16.mxu0 %v2956
        %3045 = vmatpush1.bf16.msra.mxu0 %v2955
        %3046 = vmatprep.subr.bf16.mxu0 0
        %3047 = vmatpush1.bf16.msra.mxu0 0
        %3048 = vmatprep.subr.bf16.mxu0 0
        %3049 = vmatpush1.bf16.msra.mxu0 0
        %3050 = vmatprep.mubr.bf16.mxu0 %v3016
        %3051 = vmatmul.mubr.bf16.gmra.mrb[0].mxu0 %v2732
        %v3052 = vpop.f32.mrb[0].mxu0
        %v3053 = vadd.f32 0.0, %v3052
        %v3054 = vpop.f32.mrb[0].mxu0
        %v3055 = vadd.f32 0.0, %v3054
        %v3056 = vpop.f32.mrb[0].mxu0
        %v3057 = vadd.f32 0.0, %v3056
        %v3058 = vpop.f32.mrb[0].mxu0
        %v3059 = vadd.f32 0.0, %v3058
        %3060 = vdwg.mxu0
        %3061 = vmatprep.subr.bf16.mxu0 %v2906
        %3062 = vmatpush1.bf16.msra.mxu0 %v2905
        %3063 = vmatprep.subr.bf16.mxu0 %v2910
        %3064 = vmatpush1.bf16.msra.mxu0 %v2909
        %3065 = vmatprep.subr.bf16.mxu0 %v2914
        %3066 = vmatpush1.bf16.msra.mxu0 %v2913
        %3067 = vmatprep.subr.bf16.mxu0 %v2918
        %3068 = vmatpush1.bf16.msra.mxu0 %v2917
        %3069 = vmatprep.subr.bf16.mxu0 %v2922
        %3070 = vmatpush1.bf16.msra.mxu0 %v2921
        %3071 = vmatprep.subr.bf16.mxu0 %v2926
        %3072 = vmatpush1.bf16.msra.mxu0 %v2925
        %3073 = vmatprep.subr.bf16.mxu0 %v2930
        %3074 = vmatpush1.bf16.msra.mxu0 %v2929
        %3075 = vmatprep.subr.bf16.mxu0 %v2934
        %3076 = vmatpush1.bf16.msra.mxu0 %v2933
        %3077 = vmatprep.subr.bf16.mxu0 %v2938
        %3078 = vmatpush1.bf16.msra.mxu0 %v2937
        %3079 = vmatprep.subr.bf16.mxu0 %v2942
        %3080 = vmatpush1.bf16.msra.mxu0 %v2941
        %3081 = vmatprep.subr.bf16.mxu0 %v2946
        %3082 = vmatpush1.bf16.msra.mxu0 %v2945
        %3083 = vmatprep.subr.bf16.mxu0 %v2950
        %3084 = vmatpush1.bf16.msra.mxu0 %v2949
        %3085 = vmatprep.subr.bf16.mxu0 %v2954
        %3086 = vmatpush1.bf16.msra.mxu0 %v2953
        %3087 = vmatprep.subr.bf16.mxu0 %v2958
        %3088 = vmatpush1.bf16.msra.mxu0 %v2957
        %3089 = vmatprep.subr.bf16.mxu0 0
        %3090 = vmatpush1.bf16.msra.mxu0 0
        %3091 = vmatprep.subr.bf16.mxu0 0
        %3092 = vmatpush1.bf16.msra.mxu0 0
        %3093 = vmatprep.mubr.bf16.mxu0 %v3016
        %3094 = vmatmul.mubr.bf16.gmra.mrb[0].mxu0 %v2732
        %v3095 = vpop.f32.mrb[0].mxu0
        %v3096 = vadd.f32 0.0, %v3095
        %v3097 = vpop.f32.mrb[0].mxu0
        %v3098 = vadd.f32 0.0, %v3097
        %v3099 = vpop.f32.mrb[0].mxu0
        %v3100 = vadd.f32 0.0, %v3099
        %v3101 = vpop.f32.mrb[0].mxu0
        %v3102 = vadd.f32 0.0, %v3101
        %3103 = vdwg.mxu0
        %v3104 = vadd.f32 %v2622, %v3053
        %v3105 = vadd.f32 %v2624, %v3055
        %v3106 = vadd.f32 %v2665, %v3096
        %v3107 = vadd.f32 %v2667, %v3098
        %v3108 = vadd.f32 %v2626, %v3057
        %v3109 = vadd.f32 %v2628, %v3059
        %v3110 = vadd.f32 %v2669, %v3100
        %v3111 = vadd.f32 %v2671, %v3102
        %v3112 = vld [vmem:[%s4] sm:$0xf]
        %v3114 = vlaneseq
        %v3115 = vshrl.u32 %v3114, 7
        %v3116 = vsub.s32 0, %v3115
        %v3117 = vrot.slane %v3112, %v3116
        %v3118 = vlaneseq
        %v3119 = vshrl.u32 %v3118, 7
        %v3120 = vsub.s32 1, %v3119
        %v3121 = vrot.slane %v3112, %v3120
        %v3122 = vlaneseq
        %v3123 = vshrl.u32 %v3122, 7
        %v3124 = vsub.s32 2, %v3123
        %v3125 = vrot.slane %v3112, %v3124
        %v3126 = vlaneseq
        %v3127 = vshrl.u32 %v3126, 7
        %v3128 = vsub.s32 3, %v3127
        %v3129 = vrot.slane %v3112, %v3128
        %v3134 = vadd.f32 %v3104, %v3117
        %v3135 = vadd.f32 %v3105, %v3121
        %v3136 = vadd.f32 %v3106, %v3125
        %v3137 = vadd.f32 %v3107, %v3129
        %v3138 = vadd.f32 %v3108, %v3117
        %v3139 = vadd.f32 %v3109, %v3121
        %v3140 = vadd.f32 %v3110, %v3125
        %v3141 = vadd.f32 %v3111, %v3129
        %v3142 = vmax.f32 %v3134, 0.0
        %v3143 = vmax.f32 %v3135, 0.0
        %v3144 = vmax.f32 %v3136, 0.0
        %v3145 = vmax.f32 %v3137, 0.0
        %v3146 = vmax.f32 %v3138, 0.0
        %v3147 = vmax.f32 %v3139, 0.0
        %v3148 = vmax.f32 %v3140, 0.0
        %v3149 = vmax.f32 %v3141, 0.0
        %3156 = vrot.lane.b32.xlu0 %v3143, 32
        %v3157 = vpop.permute.xlu0 %3156
        %3158 = vrot.lane.b32.xlu0 %v3144, 32
        %v3159 = vpop.permute.xlu0 %3158
        %3160 = vrot.lane.b32.xlu0 %v3145, 32
        %v3161 = vpop.permute.xlu0 %3160
        %3162 = vrot.lane.b32.xlu0 %v3147, 32
        %v3163 = vpop.permute.xlu0 %3162
        %3164 = vrot.lane.b32.xlu0 %v3148, 32
        %v3165 = vpop.permute.xlu0 %3164
        %3166 = vrot.lane.b32.xlu0 %v3149, 32
        %v3167 = vpop.permute.xlu0 %3166
        %v3168 = vsel %vm1336, %v3157, %v3159
        %v3169 = vsel %vm1336, %v3159, %v3161
        %v3170 = vsel %vm1336, %v3163, %v3165
        %v3171 = vsel %vm1336, %v3165, %v3167
        %v3176 = vmax.f32 %v3142, %v3168
        %v3177 = vmax.f32 %v3143, %v3169
        %v3178 = vmax.f32 %v3146, %v3170
        %v3179 = vmax.f32 %v3147, %v3171
        %v3184 = vcombine.low %v3176, %v3177
        %v3185 = vcombine.high %v3176, %v3177
        %v3187 = vunpack.c.l.s4 1983009808
        %v3188 = vunpack.c.0.s8 %v3187
        %v3189 = vlaneseq
        %v3190 = vshrl.u32 %v3189, 7
        %v3191 = vsub.s32 %v3188, %v3190
        %v3192 = vrot.slane %v3184, %v3191
        %v3194 = vunpack.c.l.s4 1983009808
        %v3195 = vunpack.c.0.s8 %v3194
        %v3196 = vlaneseq
        %v3197 = vshrl.u32 %v3196, 7
        %v3198 = vsub.s32 %v3195, %v3197
        %v3199 = vrot.slane %v3185, %v3198
        %v3200 = vcombine.high %v3192, %v3192
        %v3201 = vcombine.high %v3199, %v3199
        %v3202 = vcombine.low %v3178, %v3179
        %v3203 = vcombine.high %v3178, %v3179
        %v3205 = vunpack.c.l.s4 1983009808
        %v3206 = vunpack.c.0.s8 %v3205
        %v3207 = vlaneseq
        %v3208 = vshrl.u32 %v3207, 7
        %v3209 = vsub.s32 %v3206, %v3208
        %v3210 = vrot.slane %v3202, %v3209
        %v3212 = vunpack.c.l.s4 1983009808
        %v3213 = vunpack.c.0.s8 %v3212
        %v3214 = vlaneseq
        %v3215 = vshrl.u32 %v3214, 7
        %v3216 = vsub.s32 %v3213, %v3215
        %v3217 = vrot.slane %v3203, %v3216
        %v3218 = vcombine.high %v3210, %v3210
        %v3226 = vrot.slane %v3192, 7
        %v3227 = vrot.slane %v3226, 2
        %v3228 = vrot.slane %v3200, 7
        %v3229 = vrot.slane %v3228, 2
        %v3230 = vrot.slane %v3199, 7
        %v3231 = vrot.slane %v3230, 2
        %v3232 = vrot.slane %v3201, 7
        %v3233 = vrot.slane %v3232, 2
        %v3234 = vrot.slane %v3210, 7
        %v3235 = vrot.slane %v3234, 2
        %v3236 = vrot.slane %v3218, 7
        %v3237 = vrot.slane %v3236, 2
        %v3238 = vrot.slane %v3217, 7
        %v3239 = vrot.slane %v3238, 2
        %v3247 = vmax.f32 %v3192, %v3227
        %v3248 = vmax.f32 %v3200, %v3229
        %v3249 = vmax.f32 %v3199, %v3231
        %v3250 = vmax.f32 %v3201, %v3233
        %v3251 = vmax.f32 %v3210, %v3235
        %v3252 = vmax.f32 %v3218, %v3237
        %v3253 = vmax.f32 %v3217, %v3239
        %v3255 = vlaneseq
        %v3256 = vshrl.u32 %v3255, 7
        %v3257 = vsub.s32 0, %v3256
        %v3258 = vrot.slane %v3247, %v3257
        %v3259 = vlaneseq
        %v3260 = vshrl.u32 %v3259, 7
        %v3261 = vsub.s32 2, %v3260
        %v3262 = vrot.slane %v3247, %v3261
        %v3265 = vpack.c.bf16 %v3258, %v3258
        %v3266 = vpack.c.bf16 %v3262, %v3262
        %v3267 = vld [vmem:[%s5] sm:$0xf]
        %v3268 = vld [vmem:[%s5 + $0x4] sm:$0xf]
        %v3269 = vld [vmem:[%s5 + $0x8] sm:$0xf]
        %v3270 = vld [vmem:[%s5 + $0xc] sm:$0xf]
        %v3271 = vld [vmem:[%s5 + $0x10] sm:$0xf]
        %v3272 = vld [vmem:[%s5 + $0x14] sm:$0xf]
        %v3273 = vld [vmem:[%s5 + $0x18] sm:$0xf]
        %v3274 = vld [vmem:[%s5 + $0x1c] sm:$0xf]
        %v3275 = vld [vmem:[%s5 + $0x20] sm:$0xf]
        %v3276 = vld [vmem:[%s5 + $0x24] sm:$0xf]
        %v3277 = vld [vmem:[%s5 + $0x28] sm:$0xf]
        %v3278 = vld [vmem:[%s5 + $0x2c] sm:$0xf]
        %v3279 = vld [vmem:[%s5 + $0x30] sm:$0xf]
        %v3280 = vld [vmem:[%s5 + $0x34] sm:$0xf]
        %v3281 = vld [vmem:[%s5 + $0x38] sm:$0xf]
        %v3282 = vld [vmem:[%s5 + $0x3c] sm:$0xf]
        %v3283 = vld [vmem:[%s5 + $0x40] sm:$0xf]
        %v3284 = vld [vmem:[%s5 + $0x44] sm:$0xf]
        %v3285 = vld [vmem:[%s5 + $0x48] sm:$0xf]
        %v3286 = vld [vmem:[%s5 + $0x4c] sm:$0xf]
        %v3287 = vld [vmem:[%s5 + $0x50] sm:$0xf]
        %v3288 = vld [vmem:[%s5 + $0x54] sm:$0xf]
        %v3289 = vld [vmem:[%s5 + $0x58] sm:$0xf]
        %v3290 = vld [vmem:[%s5 + $0x5c] sm:$0xf]
        %v3291 = vld [vmem:[%s5 + $0x60] sm:$0xf]
        %v3292 = vld [vmem:[%s5 + $0x64] sm:$0xf]
        %v3293 = vld [vmem:[%s5 + $0x68] sm:$0xf]
        %v3294 = vld [vmem:[%s5 + $0x6c] sm:$0xf]
        %v3296 = vlaneseq
        %v3297 = vshrl.u32 %v3296, 7
        %v3298 = vsub.s32 0, %v3297
        %v3299 = vrot.slane %v3248, %v3298
        %v3300 = vlaneseq
        %v3301 = vshrl.u32 %v3300, 7
        %v3302 = vsub.s32 2, %v3301
        %v3303 = vrot.slane %v3248, %v3302
        %v3306 = vpack.c.bf16 %v3299, %v3299
        %v3307 = vpack.c.bf16 %v3303, %v3303
        %s3308 = scalar_lea.vmem %s5, 112
        %v3309 = vld [vmem:[%s3308] sm:$0xf]
        %v3310 = vld [vmem:[%s3308 + $0x4] sm:$0xf]
        %v3311 = vld [vmem:[%s3308 + $0x8] sm:$0xf]
        %v3312 = vld [vmem:[%s3308 + $0xc] sm:$0xf]
        %v3313 = vld [vmem:[%s3308 + $0x10] sm:$0xf]
        %v3314 = vld [vmem:[%s3308 + $0x14] sm:$0xf]
        %v3315 = vld [vmem:[%s3308 + $0x18] sm:$0xf]
        %v3316 = vld [vmem:[%s3308 + $0x1c] sm:$0xf]
        %v3317 = vld [vmem:[%s3308 + $0x20] sm:$0xf]
        %v3318 = vld [vmem:[%s3308 + $0x24] sm:$0xf]
        %v3319 = vld [vmem:[%s3308 + $0x28] sm:$0xf]
        %v3320 = vld [vmem:[%s3308 + $0x2c] sm:$0xf]
        %v3321 = vld [vmem:[%s3308 + $0x30] sm:$0xf]
        %v3322 = vld [vmem:[%s3308 + $0x34] sm:$0xf]
        %v3323 = vld [vmem:[%s3308 + $0x38] sm:$0xf]
        %v3324 = vld [vmem:[%s3308 + $0x3c] sm:$0xf]
        %v3325 = vld [vmem:[%s3308 + $0x40] sm:$0xf]
        %v3326 = vld [vmem:[%s3308 + $0x44] sm:$0xf]
        %v3327 = vld [vmem:[%s3308 + $0x48] sm:$0xf]
        %v3328 = vld [vmem:[%s3308 + $0x4c] sm:$0xf]
        %v3329 = vld [vmem:[%s3308 + $0x50] sm:$0xf]
        %v3330 = vld [vmem:[%s3308 + $0x54] sm:$0xf]
        %v3331 = vld [vmem:[%s3308 + $0x58] sm:$0xf]
        %v3332 = vld [vmem:[%s3308 + $0x5c] sm:$0xf]
        %v3333 = vld [vmem:[%s3308 + $0x60] sm:$0xf]
        %v3334 = vld [vmem:[%s3308 + $0x64] sm:$0xf]
        %v3335 = vld [vmem:[%s3308 + $0x68] sm:$0xf]
        %v3336 = vld [vmem:[%s3308 + $0x6c] sm:$0xf]
        %v3365 = vunpack.c.l.b16 %v3309
        %v3366 = vunpack.c.l.b16 %v3310
        %v3367 = vunpack.c.l.b16 %v3311
        %v3368 = vunpack.c.l.b16 %v3312
        %v3369 = vunpack.c.l.b16 %v3313
        %v3370 = vunpack.c.l.b16 %v3314
        %v3371 = vunpack.c.l.b16 %v3315
        %v3372 = vunpack.c.l.b16 %v3316
        %v3373 = vunpack.c.l.b16 %v3317
        %v3374 = vunpack.c.l.b16 %v3318
        %v3375 = vunpack.c.l.b16 %v3319
        %v3376 = vunpack.c.l.b16 %v3320
        %v3377 = vunpack.c.l.b16 %v3321
        %v3378 = vunpack.c.l.b16 %v3322
        %v3379 = vunpack.c.l.b16 %v3323
        %v3380 = vunpack.c.l.b16 %v3324
        %v3381 = vunpack.c.l.b16 %v3325
        %v3382 = vunpack.c.l.b16 %v3326
        %v3383 = vunpack.c.l.b16 %v3327
        %v3384 = vunpack.c.l.b16 %v3328
        %v3385 = vunpack.c.l.b16 %v3329
        %v3386 = vunpack.c.l.b16 %v3330
        %v3387 = vunpack.c.l.b16 %v3331
        %v3388 = vunpack.c.l.b16 %v3332
        %v3389 = vunpack.c.l.b16 %v3333
        %v3390 = vunpack.c.l.b16 %v3334
        %v3391 = vunpack.c.l.b16 %v3335
        %v3392 = vunpack.c.l.b16 %v3336
        %v3393 = vpack.c.b16 %v3366, %v3365
        %v3394 = vpack.c.b16 %v3368, %v3367
        %v3395 = vpack.c.b16 %v3370, %v3369
        %v3396 = vpack.c.b16 %v3372, %v3371
        %v3397 = vpack.c.b16 %v3374, %v3373
        %v3398 = vpack.c.b16 %v3376, %v3375
        %v3399 = vpack.c.b16 %v3378, %v3377
        %v3400 = vpack.c.b16 %v3380, %v3379
        %v3401 = vpack.c.b16 %v3382, %v3381
        %v3402 = vpack.c.b16 %v3384, %v3383
        %v3403 = vpack.c.b16 %v3386, %v3385
        %v3404 = vpack.c.b16 %v3388, %v3387
        %v3405 = vpack.c.b16 %v3390, %v3389
        %v3406 = vpack.c.b16 %v3392, %v3391
        %v3422 = vsel %vm2215, %v3307, 0
        %3424 = vmatprep.subr.bf16.mxu0 0
        %3425 = vmatpush1.bf16.msra.mxu0 %v3393
        %3426 = vmatprep.subr.bf16.mxu0 0
        %3427 = vmatpush1.bf16.msra.mxu0 %v3394
        %3428 = vmatprep.subr.bf16.mxu0 0
        %3429 = vmatpush1.bf16.msra.mxu0 %v3395
        %3430 = vmatprep.subr.bf16.mxu0 0
        %3431 = vmatpush1.bf16.msra.mxu0 %v3396
        %3432 = vmatprep.subr.bf16.mxu0 0
        %3433 = vmatpush1.bf16.msra.mxu0 %v3397
        %3434 = vmatprep.subr.bf16.mxu0 0
        %3435 = vmatpush1.bf16.msra.mxu0 %v3398
        %3436 = vmatprep.subr.bf16.mxu0 0
        %3437 = vmatpush1.bf16.msra.mxu0 %v3399
        %3438 = vmatprep.subr.bf16.mxu0 0
        %3439 = vmatpush1.bf16.msra.mxu0 %v3400
        %3440 = vmatprep.subr.bf16.mxu0 0
        %3441 = vmatpush1.bf16.msra.mxu0 %v3401
        %3442 = vmatprep.subr.bf16.mxu0 0
        %3443 = vmatpush1.bf16.msra.mxu0 %v3402
        %3444 = vmatprep.subr.bf16.mxu0 0
        %3445 = vmatpush1.bf16.msra.mxu0 %v3403
        %3446 = vmatprep.subr.bf16.mxu0 0
        %3447 = vmatpush1.bf16.msra.mxu0 %v3404
        %3448 = vmatprep.subr.bf16.mxu0 0
        %3449 = vmatpush1.bf16.msra.mxu0 %v3405
        %3450 = vmatprep.subr.bf16.mxu0 0
        %3451 = vmatpush1.bf16.msra.mxu0 %v3406
        %3452 = vmatprep.subr.bf16.mxu0 0
        %3453 = vmatpush1.bf16.msra.mxu0 0
        %3454 = vmatprep.subr.bf16.mxu0 0
        %3455 = vmatpush1.bf16.msra.mxu0 0
        %3456 = vmatprep.mubr.bf16.mxu0 %v3422
        %3457 = vmatmul.mubr.bf16.gmra.mrb[0].mxu0 %v3306
        %v3458 = vpop.f32.mrb[0].mxu0
        %v3459 = vadd.f32 0.0, %v3458
        %v3460 = vpop.f32.mrb[0].mxu0
        %v3461 = vpop.f32.mrb[0].mxu0
        %v3462 = vpop.f32.mrb[0].mxu0
        %3463 = vdwg.mxu0
        %v3492 = vunpack.c.l.b16 %v3267
        %v3493 = vunpack.c.l.b16 %v3268
        %v3494 = vunpack.c.l.b16 %v3269
        %v3495 = vunpack.c.l.b16 %v3270
        %v3496 = vunpack.c.l.b16 %v3271
        %v3497 = vunpack.c.l.b16 %v3272
        %v3498 = vunpack.c.l.b16 %v3273
        %v3499 = vunpack.c.l.b16 %v3274
        %v3500 = vunpack.c.l.b16 %v3275
        %v3501 = vunpack.c.l.b16 %v3276
        %v3502 = vunpack.c.l.b16 %v3277
        %v3503 = vunpack.c.l.b16 %v3278
        %v3504 = vunpack.c.l.b16 %v3279
        %v3505 = vunpack.c.l.b16 %v3280
        %v3506 = vunpack.c.l.b16 %v3281
        %v3507 = vunpack.c.l.b16 %v3282
        %v3508 = vunpack.c.l.b16 %v3283
        %v3509 = vunpack.c.l.b16 %v3284
        %v3510 = vunpack.c.l.b16 %v3285
        %v3511 = vunpack.c.l.b16 %v3286
        %v3512 = vunpack.c.l.b16 %v3287
        %v3513 = vunpack.c.l.b16 %v3288
        %v3514 = vunpack.c.l.b16 %v3289
        %v3515 = vunpack.c.l.b16 %v3290
        %v3516 = vunpack.c.l.b16 %v3291
        %v3517 = vunpack.c.l.b16 %v3292
        %v3518 = vunpack.c.l.b16 %v3293
        %v3519 = vunpack.c.l.b16 %v3294
        %v3520 = vpack.c.b16 %v3493, %v3492
        %v3521 = vpack.c.b16 %v3495, %v3494
        %v3522 = vpack.c.b16 %v3497, %v3496
        %v3523 = vpack.c.b16 %v3499, %v3498
        %v3524 = vpack.c.b16 %v3501, %v3500
        %v3525 = vpack.c.b16 %v3503, %v3502
        %v3526 = vpack.c.b16 %v3505, %v3504
        %v3527 = vpack.c.b16 %v3507, %v3506
        %v3528 = vpack.c.b16 %v3509, %v3508
        %v3529 = vpack.c.b16 %v3511, %v3510
        %v3530 = vpack.c.b16 %v3513, %v3512
        %v3531 = vpack.c.b16 %v3515, %v3514
        %v3532 = vpack.c.b16 %v3517, %v3516
        %v3533 = vpack.c.b16 %v3519, %v3518
        %v3549 = vsel %vm2215, %v3266, 0
        %3551 = vmatprep.subr.bf16.mxu0 0
        %3552 = vmatpush1.bf16.msra.mxu0 %v3520
        %3553 = vmatprep.subr.bf16.mxu0 0
        %3554 = vmatpush1.bf16.msra.mxu0 %v3521
        %3555 = vmatprep.subr.bf16.mxu0 0
        %3556 = vmatpush1.bf16.msra.mxu0 %v3522
        %3557 = vmatprep.subr.bf16.mxu0 0
        %3558 = vmatpush1.bf16.msra.mxu0 %v3523
        %3559 = vmatprep.subr.bf16.mxu0 0
        %3560 = vmatpush1.bf16.msra.mxu0 %v3524
        %3561 = vmatprep.subr.bf16.mxu0 0
        %3562 = vmatpush1.bf16.msra.mxu0 %v3525
        %3563 = vmatprep.subr.bf16.mxu0 0
        %3564 = vmatpush1.bf16.msra.mxu0 %v3526
        %3565 = vmatprep.subr.bf16.mxu0 0
        %3566 = vmatpush1.bf16.msra.mxu0 %v3527
        %3567 = vmatprep.subr.bf16.mxu0 0
        %3568 = vmatpush1.bf16.msra.mxu0 %v3528
        %3569 = vmatprep.subr.bf16.mxu0 0
        %3570 = vmatpush1.bf16.msra.mxu0 %v3529
        %3571 = vmatprep.subr.bf16.mxu0 0
        %3572 = vmatpush1.bf16.msra.mxu0 %v3530
        %3573 = vmatprep.subr.bf16.mxu0 0
        %3574 = vmatpush1.bf16.msra.mxu0 %v3531
        %3575 = vmatprep.subr.bf16.mxu0 0
        %3576 = vmatpush1.bf16.msra.mxu0 %v3532
        %3577 = vmatprep.subr.bf16.mxu0 0
        %3578 = vmatpush1.bf16.msra.mxu0 %v3533
        %3579 = vmatprep.subr.bf16.mxu0 0
        %3580 = vmatpush1.bf16.msra.mxu0 0
        %3581 = vmatprep.subr.bf16.mxu0 0
        %3582 = vmatpush1.bf16.msra.mxu0 0
        %3583 = vmatprep.mubr.bf16.mxu0 %v3549
        %3584 = vmatmul.mubr.bf16.gmra.mrb[0].mxu0 %v3265
        %v3585 = vpop.f32.mrb[0].mxu0
        %v3586 = vadd.f32 %v3459, %v3585
        %v3587 = vpop.f32.mrb[0].mxu0
        %v3588 = vpop.f32.mrb[0].mxu0
        %v3589 = vpop.f32.mrb[0].mxu0
        %3590 = vdwg.mxu0
        %v3592 = vlaneseq
        %v3593 = vshrl.u32 %v3592, 7
        %v3594 = vsub.s32 0, %v3593
        %v3595 = vrot.slane %v3249, %v3594
        %v3596 = vlaneseq
        %v3597 = vshrl.u32 %v3596, 7
        %v3598 = vsub.s32 2, %v3597
        %v3599 = vrot.slane %v3249, %v3598
        %v3602 = vpack.c.bf16 %v3595, %v3595
        %v3603 = vpack.c.bf16 %v3599, %v3599
        %s3604 = scalar_lea.vmem %s5, 224
        %v3605 = vld [vmem:[%s3604] sm:$0xf]
        %v3606 = vld [vmem:[%s3604 + $0x4] sm:$0xf]
        %v3607 = vld [vmem:[%s3604 + $0x8] sm:$0xf]
        %v3608 = vld [vmem:[%s3604 + $0xc] sm:$0xf]
        %v3609 = vld [vmem:[%s3604 + $0x10] sm:$0xf]
        %v3610 = vld [vmem:[%s3604 + $0x14] sm:$0xf]
        %v3611 = vld [vmem:[%s3604 + $0x18] sm:$0xf]
        %v3612 = vld [vmem:[%s3604 + $0x1c] sm:$0xf]
        %v3613 = vld [vmem:[%s3604 + $0x20] sm:$0xf]
        %v3614 = vld [vmem:[%s3604 + $0x24] sm:$0xf]
        %v3615 = vld [vmem:[%s3604 + $0x28] sm:$0xf]
        %v3616 = vld [vmem:[%s3604 + $0x2c] sm:$0xf]
        %v3617 = vld [vmem:[%s3604 + $0x30] sm:$0xf]
        %v3618 = vld [vmem:[%s3604 + $0x34] sm:$0xf]
        %v3619 = vld [vmem:[%s3604 + $0x38] sm:$0xf]
        %v3620 = vld [vmem:[%s3604 + $0x3c] sm:$0xf]
        %v3621 = vld [vmem:[%s3604 + $0x40] sm:$0xf]
        %v3622 = vld [vmem:[%s3604 + $0x44] sm:$0xf]
        %v3623 = vld [vmem:[%s3604 + $0x48] sm:$0xf]
        %v3624 = vld [vmem:[%s3604 + $0x4c] sm:$0xf]
        %v3625 = vld [vmem:[%s3604 + $0x50] sm:$0xf]
        %v3626 = vld [vmem:[%s3604 + $0x54] sm:$0xf]
        %v3627 = vld [vmem:[%s3604 + $0x58] sm:$0xf]
        %v3628 = vld [vmem:[%s3604 + $0x5c] sm:$0xf]
        %v3629 = vld [vmem:[%s3604 + $0x60] sm:$0xf]
        %v3630 = vld [vmem:[%s3604 + $0x64] sm:$0xf]
        %v3631 = vld [vmem:[%s3604 + $0x68] sm:$0xf]
        %v3632 = vld [vmem:[%s3604 + $0x6c] sm:$0xf]
        %v3661 = vunpack.c.l.b16 %v3605
        %v3662 = vunpack.c.l.b16 %v3606
        %v3663 = vunpack.c.l.b16 %v3607
        %v3664 = vunpack.c.l.b16 %v3608
        %v3665 = vunpack.c.l.b16 %v3609
        %v3666 = vunpack.c.l.b16 %v3610
        %v3667 = vunpack.c.l.b16 %v3611
        %v3668 = vunpack.c.l.b16 %v3612
        %v3669 = vunpack.c.l.b16 %v3613
        %v3670 = vunpack.c.l.b16 %v3614
        %v3671 = vunpack.c.l.b16 %v3615
        %v3672 = vunpack.c.l.b16 %v3616
        %v3673 = vunpack.c.l.b16 %v3617
        %v3674 = vunpack.c.l.b16 %v3618
        %v3675 = vunpack.c.l.b16 %v3619
        %v3676 = vunpack.c.l.b16 %v3620
        %v3677 = vunpack.c.l.b16 %v3621
        %v3678 = vunpack.c.l.b16 %v3622
        %v3679 = vunpack.c.l.b16 %v3623
        %v3680 = vunpack.c.l.b16 %v3624
        %v3681 = vunpack.c.l.b16 %v3625
        %v3682 = vunpack.c.l.b16 %v3626
        %v3683 = vunpack.c.l.b16 %v3627
        %v3684 = vunpack.c.l.b16 %v3628
        %v3685 = vunpack.c.l.b16 %v3629
        %v3686 = vunpack.c.l.b16 %v3630
        %v3687 = vunpack.c.l.b16 %v3631
        %v3688 = vunpack.c.l.b16 %v3632
        %v3689 = vpack.c.b16 %v3662, %v3661
        %v3690 = vpack.c.b16 %v3664, %v3663
        %v3691 = vpack.c.b16 %v3666, %v3665
        %v3692 = vpack.c.b16 %v3668, %v3667
        %v3693 = vpack.c.b16 %v3670, %v3669
        %v3694 = vpack.c.b16 %v3672, %v3671
        %v3695 = vpack.c.b16 %v3674, %v3673
        %v3696 = vpack.c.b16 %v3676, %v3675
        %v3697 = vpack.c.b16 %v3678, %v3677
        %v3698 = vpack.c.b16 %v3680, %v3679
        %v3699 = vpack.c.b16 %v3682, %v3681
        %v3700 = vpack.c.b16 %v3684, %v3683
        %v3701 = vpack.c.b16 %v3686, %v3685
        %v3702 = vpack.c.b16 %v3688, %v3687
        %v3718 = vsel %vm2215, %v3603, 0
        %3720 = vmatprep.subr.bf16.mxu0 0
        %3721 = vmatpush1.bf16.msra.mxu0 %v3689
        %3722 = vmatprep.subr.bf16.mxu0 0
        %3723 = vmatpush1.bf16.msra.mxu0 %v3690
        %3724 = vmatprep.subr.bf16.mxu0 0
        %3725 = vmatpush1.bf16.msra.mxu0 %v3691
        %3726 = vmatprep.subr.bf16.mxu0 0
        %3727 = vmatpush1.bf16.msra.mxu0 %v3692
        %3728 = vmatprep.subr.bf16.mxu0 0
        %3729 = vmatpush1.bf16.msra.mxu0 %v3693
        %3730 = vmatprep.subr.bf16.mxu0 0
        %3731 = vmatpush1.bf16.msra.mxu0 %v3694
        %3732 = vmatprep.subr.bf16.mxu0 0
        %3733 = vmatpush1.bf16.msra.mxu0 %v3695
        %3734 = vmatprep.subr.bf16.mxu0 0
        %3735 = vmatpush1.bf16.msra.mxu0 %v3696
        %3736 = vmatprep.subr.bf16.mxu0 0
        %3737 = vmatpush1.bf16.msra.mxu0 %v3697
        %3738 = vmatprep.subr.bf16.mxu0 0
        %3739 = vmatpush1.bf16.msra.mxu0 %v3698
        %3740 = vmatprep.subr.bf16.mxu0 0
        %3741 = vmatpush1.bf16.msra.mxu0 %v3699
        %3742 = vmatprep.subr.bf16.mxu0 0
        %3743 = vmatpush1.bf16.msra.mxu0 %v3700
        %3744 = vmatprep.subr.bf16.mxu0 0
        %3745 = vmatpush1.bf16.msra.mxu0 %v3701
        %3746 = vmatprep.subr.bf16.mxu0 0
        %3747 = vmatpush1.bf16.msra.mxu0 %v3702
        %3748 = vmatprep.subr.bf16.mxu0 0
        %3749 = vmatpush1.bf16.msra.mxu0 0
        %3750 = vmatprep.subr.bf16.mxu0 0
        %3751 = vmatpush1.bf16.msra.mxu0 0
        %3752 = vmatprep.mubr.bf16.mxu0 %v3718
        %3753 = vmatmul.mubr.bf16.gmra.mrb[0].mxu0 %v3602
        %v3754 = vpop.f32.mrb[0].mxu0
        %v3755 = vadd.f32 0.0, %v3754
        %v3756 = vpop.f32.mrb[0].mxu0
        %v3757 = vpop.f32.mrb[0].mxu0
        %v3758 = vpop.f32.mrb[0].mxu0
        %3759 = vdwg.mxu0
        %v3760 = vadd.f32 %v3586, %v3755
        %v3762 = vlaneseq
        %v3763 = vshrl.u32 %v3762, 7
        %v3764 = vsub.s32 0, %v3763
        %v3765 = vrot.slane %v3250, %v3764
        %v3766 = vlaneseq
        %v3767 = vshrl.u32 %v3766, 7
        %v3768 = vsub.s32 2, %v3767
        %v3769 = vrot.slane %v3250, %v3768
        %v3772 = vpack.c.bf16 %v3765, %v3765
        %v3773 = vpack.c.bf16 %v3769, %v3769
        %s3774 = scalar_lea.vmem %s5, 336
        %v3775 = vld [vmem:[%s3774] sm:$0xf]
        %v3776 = vld [vmem:[%s3774 + $0x4] sm:$0xf]
        %v3777 = vld [vmem:[%s3774 + $0x8] sm:$0xf]
        %v3778 = vld [vmem:[%s3774 + $0xc] sm:$0xf]
        %v3779 = vld [vmem:[%s3774 + $0x10] sm:$0xf]
        %v3780 = vld [vmem:[%s3774 + $0x14] sm:$0xf]
        %v3781 = vld [vmem:[%s3774 + $0x18] sm:$0xf]
        %v3782 = vld [vmem:[%s3774 + $0x1c] sm:$0xf]
        %v3783 = vld [vmem:[%s3774 + $0x20] sm:$0xf]
        %v3784 = vld [vmem:[%s3774 + $0x24] sm:$0xf]
        %v3785 = vld [vmem:[%s3774 + $0x28] sm:$0xf]
        %v3786 = vld [vmem:[%s3774 + $0x2c] sm:$0xf]
        %v3787 = vld [vmem:[%s3774 + $0x30] sm:$0xf]
        %v3788 = vld [vmem:[%s3774 + $0x34] sm:$0xf]
        %v3789 = vld [vmem:[%s3774 + $0x38] sm:$0xf]
        %v3790 = vld [vmem:[%s3774 + $0x3c] sm:$0xf]
        %v3791 = vld [vmem:[%s3774 + $0x40] sm:$0xf]
        %v3792 = vld [vmem:[%s3774 + $0x44] sm:$0xf]
        %v3793 = vld [vmem:[%s3774 + $0x48] sm:$0xf]
        %v3794 = vld [vmem:[%s3774 + $0x4c] sm:$0xf]
        %v3795 = vld [vmem:[%s3774 + $0x50] sm:$0xf]
        %v3796 = vld [vmem:[%s3774 + $0x54] sm:$0xf]
        %v3797 = vld [vmem:[%s3774 + $0x58] sm:$0xf]
        %v3798 = vld [vmem:[%s3774 + $0x5c] sm:$0xf]
        %v3799 = vld [vmem:[%s3774 + $0x60] sm:$0xf]
        %v3800 = vld [vmem:[%s3774 + $0x64] sm:$0xf]
        %v3801 = vld [vmem:[%s3774 + $0x68] sm:$0xf]
        %v3802 = vld [vmem:[%s3774 + $0x6c] sm:$0xf]
        %v3831 = vunpack.c.l.b16 %v3775
        %v3832 = vunpack.c.l.b16 %v3776
        %v3833 = vunpack.c.l.b16 %v3777
        %v3834 = vunpack.c.l.b16 %v3778
        %v3835 = vunpack.c.l.b16 %v3779
        %v3836 = vunpack.c.l.b16 %v3780
        %v3837 = vunpack.c.l.b16 %v3781
        %v3838 = vunpack.c.l.b16 %v3782
        %v3839 = vunpack.c.l.b16 %v3783
        %v3840 = vunpack.c.l.b16 %v3784
        %v3841 = vunpack.c.l.b16 %v3785
        %v3842 = vunpack.c.l.b16 %v3786
        %v3843 = vunpack.c.l.b16 %v3787
        %v3844 = vunpack.c.l.b16 %v3788
        %v3845 = vunpack.c.l.b16 %v3789
        %v3846 = vunpack.c.l.b16 %v3790
        %v3847 = vunpack.c.l.b16 %v3791
        %v3848 = vunpack.c.l.b16 %v3792
        %v3849 = vunpack.c.l.b16 %v3793
        %v3850 = vunpack.c.l.b16 %v3794
        %v3851 = vunpack.c.l.b16 %v3795
        %v3852 = vunpack.c.l.b16 %v3796
        %v3853 = vunpack.c.l.b16 %v3797
        %v3854 = vunpack.c.l.b16 %v3798
        %v3855 = vunpack.c.l.b16 %v3799
        %v3856 = vunpack.c.l.b16 %v3800
        %v3857 = vunpack.c.l.b16 %v3801
        %v3858 = vunpack.c.l.b16 %v3802
        %v3859 = vpack.c.b16 %v3832, %v3831
        %v3860 = vpack.c.b16 %v3834, %v3833
        %v3861 = vpack.c.b16 %v3836, %v3835
        %v3862 = vpack.c.b16 %v3838, %v3837
        %v3863 = vpack.c.b16 %v3840, %v3839
        %v3864 = vpack.c.b16 %v3842, %v3841
        %v3865 = vpack.c.b16 %v3844, %v3843
        %v3866 = vpack.c.b16 %v3846, %v3845
        %v3867 = vpack.c.b16 %v3848, %v3847
        %v3868 = vpack.c.b16 %v3850, %v3849
        %v3869 = vpack.c.b16 %v3852, %v3851
        %v3870 = vpack.c.b16 %v3854, %v3853
        %v3871 = vpack.c.b16 %v3856, %v3855
        %v3872 = vpack.c.b16 %v3858, %v3857
        %v3888 = vsel %vm2215, %v3773, 0
        %3890 = vmatprep.subr.bf16.mxu0 0
        %3891 = vmatpush1.bf16.msra.mxu0 %v3859
        %3892 = vmatprep.subr.bf16.mxu0 0
        %3893 = vmatpush1.bf16.msra.mxu0 %v3860
        %3894 = vmatprep.subr.bf16.mxu0 0
        %3895 = vmatpush1.bf16.msra.mxu0 %v3861
        %3896 = vmatprep.subr.bf16.mxu0 0
        %3897 = vmatpush1.bf16.msra.mxu0 %v3862
        %3898 = vmatprep.subr.bf16.mxu0 0
        %3899 = vmatpush1.bf16.msra.mxu0 %v3863
        %3900 = vmatprep.subr.bf16.mxu0 0
        %3901 = vmatpush1.bf16.msra.mxu0 %v3864
        %3902 = vmatprep.subr.bf16.mxu0 0
        %3903 = vmatpush1.bf16.msra.mxu0 %v3865
        %3904 = vmatprep.subr.bf16.mxu0 0
        %3905 = vmatpush1.bf16.msra.mxu0 %v3866
        %3906 = vmatprep.subr.bf16.mxu0 0
        %3907 = vmatpush1.bf16.msra.mxu0 %v3867
        %3908 = vmatprep.subr.bf16.mxu0 0
        %3909 = vmatpush1.bf16.msra.mxu0 %v3868
        %3910 = vmatprep.subr.bf16.mxu0 0
        %3911 = vmatpush1.bf16.msra.mxu0 %v3869
        %3912 = vmatprep.subr.bf16.mxu0 0
        %3913 = vmatpush1.bf16.msra.mxu0 %v3870
        %3914 = vmatprep.subr.bf16.mxu0 0
        %3915 = vmatpush1.bf16.msra.mxu0 %v3871
        %3916 = vmatprep.subr.bf16.mxu0 0
        %3917 = vmatpush1.bf16.msra.mxu0 %v3872
        %3918 = vmatprep.subr.bf16.mxu0 0
        %3919 = vmatpush1.bf16.msra.mxu0 0
        %3920 = vmatprep.subr.bf16.mxu0 0
        %3921 = vmatpush1.bf16.msra.mxu0 0
        %3922 = vmatprep.mubr.bf16.mxu0 %v3888
        %3923 = vmatmul.mubr.bf16.gmra.mrb[0].mxu0 %v3772
        %v3924 = vpop.f32.mrb[0].mxu0
        %v3925 = vadd.f32 0.0, %v3924
        %v3926 = vpop.f32.mrb[0].mxu0
        %v3927 = vpop.f32.mrb[0].mxu0
        %v3928 = vpop.f32.mrb[0].mxu0
        %3929 = vdwg.mxu0
        %v3930 = vadd.f32 %v3760, %v3925
        %v3932 = vlaneseq
        %v3933 = vshrl.u32 %v3932, 7
        %v3934 = vsub.s32 0, %v3933
        %v3935 = vrot.slane %v3251, %v3934
        %v3936 = vlaneseq
        %v3937 = vshrl.u32 %v3936, 7
        %v3938 = vsub.s32 2, %v3937
        %v3939 = vrot.slane %v3251, %v3938
        %v3942 = vpack.c.bf16 %v3935, %v3935
        %v3943 = vpack.c.bf16 %v3939, %v3939
        %s3944 = scalar_lea.vmem %s5, 448
        %v3945 = vld [vmem:[%s3944] sm:$0xf]
        %v3946 = vld [vmem:[%s3944 + $0x4] sm:$0xf]
        %v3947 = vld [vmem:[%s3944 + $0x8] sm:$0xf]
        %v3948 = vld [vmem:[%s3944 + $0xc] sm:$0xf]
        %v3949 = vld [vmem:[%s3944 + $0x10] sm:$0xf]
        %v3950 = vld [vmem:[%s3944 + $0x14] sm:$0xf]
        %v3951 = vld [vmem:[%s3944 + $0x18] sm:$0xf]
        %v3952 = vld [vmem:[%s3944 + $0x1c] sm:$0xf]
        %v3953 = vld [vmem:[%s3944 + $0x20] sm:$0xf]
        %v3954 = vld [vmem:[%s3944 + $0x24] sm:$0xf]
        %v3955 = vld [vmem:[%s3944 + $0x28] sm:$0xf]
        %v3956 = vld [vmem:[%s3944 + $0x2c] sm:$0xf]
        %v3957 = vld [vmem:[%s3944 + $0x30] sm:$0xf]
        %v3958 = vld [vmem:[%s3944 + $0x34] sm:$0xf]
        %v3959 = vld [vmem:[%s3944 + $0x38] sm:$0xf]
        %v3960 = vld [vmem:[%s3944 + $0x3c] sm:$0xf]
        %v3961 = vld [vmem:[%s3944 + $0x40] sm:$0xf]
        %v3962 = vld [vmem:[%s3944 + $0x44] sm:$0xf]
        %v3963 = vld [vmem:[%s3944 + $0x48] sm:$0xf]
        %v3964 = vld [vmem:[%s3944 + $0x4c] sm:$0xf]
        %v3965 = vld [vmem:[%s3944 + $0x50] sm:$0xf]
        %v3966 = vld [vmem:[%s3944 + $0x54] sm:$0xf]
        %v3967 = vld [vmem:[%s3944 + $0x58] sm:$0xf]
        %v3968 = vld [vmem:[%s3944 + $0x5c] sm:$0xf]
        %v3969 = vld [vmem:[%s3944 + $0x60] sm:$0xf]
        %v3970 = vld [vmem:[%s3944 + $0x64] sm:$0xf]
        %v3971 = vld [vmem:[%s3944 + $0x68] sm:$0xf]
        %v3972 = vld [vmem:[%s3944 + $0x6c] sm:$0xf]
        %v4001 = vunpack.c.l.b16 %v3945
        %v4002 = vunpack.c.l.b16 %v3946
        %v4003 = vunpack.c.l.b16 %v3947
        %v4004 = vunpack.c.l.b16 %v3948
        %v4005 = vunpack.c.l.b16 %v3949
        %v4006 = vunpack.c.l.b16 %v3950
        %v4007 = vunpack.c.l.b16 %v3951
        %v4008 = vunpack.c.l.b16 %v3952
        %v4009 = vunpack.c.l.b16 %v3953
        %v4010 = vunpack.c.l.b16 %v3954
        %v4011 = vunpack.c.l.b16 %v3955
        %v4012 = vunpack.c.l.b16 %v3956
        %v4013 = vunpack.c.l.b16 %v3957
        %v4014 = vunpack.c.l.b16 %v3958
        %v4015 = vunpack.c.l.b16 %v3959
        %v4016 = vunpack.c.l.b16 %v3960
        %v4017 = vunpack.c.l.b16 %v3961
        %v4018 = vunpack.c.l.b16 %v3962
        %v4019 = vunpack.c.l.b16 %v3963
        %v4020 = vunpack.c.l.b16 %v3964
        %v4021 = vunpack.c.l.b16 %v3965
        %v4022 = vunpack.c.l.b16 %v3966
        %v4023 = vunpack.c.l.b16 %v3967
        %v4024 = vunpack.c.l.b16 %v3968
        %v4025 = vunpack.c.l.b16 %v3969
        %v4026 = vunpack.c.l.b16 %v3970
        %v4027 = vunpack.c.l.b16 %v3971
        %v4028 = vunpack.c.l.b16 %v3972
        %v4029 = vpack.c.b16 %v4002, %v4001
        %v4030 = vpack.c.b16 %v4004, %v4003
        %v4031 = vpack.c.b16 %v4006, %v4005
        %v4032 = vpack.c.b16 %v4008, %v4007
        %v4033 = vpack.c.b16 %v4010, %v4009
        %v4034 = vpack.c.b16 %v4012, %v4011
        %v4035 = vpack.c.b16 %v4014, %v4013
        %v4036 = vpack.c.b16 %v4016, %v4015
        %v4037 = vpack.c.b16 %v4018, %v4017
        %v4038 = vpack.c.b16 %v4020, %v4019
        %v4039 = vpack.c.b16 %v4022, %v4021
        %v4040 = vpack.c.b16 %v4024, %v4023
        %v4041 = vpack.c.b16 %v4026, %v4025
        %v4042 = vpack.c.b16 %v4028, %v4027
        %v4058 = vsel %vm2215, %v3943, 0
        %4060 = vmatprep.subr.bf16.mxu0 0
        %4061 = vmatpush1.bf16.msra.mxu0 %v4029
        %4062 = vmatprep.subr.bf16.mxu0 0
        %4063 = vmatpush1.bf16.msra.mxu0 %v4030
        %4064 = vmatprep.subr.bf16.mxu0 0
        %4065 = vmatpush1.bf16.msra.mxu0 %v4031
        %4066 = vmatprep.subr.bf16.mxu0 0
        %4067 = vmatpush1.bf16.msra.mxu0 %v4032
        %4068 = vmatprep.subr.bf16.mxu0 0
        %4069 = vmatpush1.bf16.msra.mxu0 %v4033
        %4070 = vmatprep.subr.bf16.mxu0 0
        %4071 = vmatpush1.bf16.msra.mxu0 %v4034
        %4072 = vmatprep.subr.bf16.mxu0 0
        %4073 = vmatpush1.bf16.msra.mxu0 %v4035
        %4074 = vmatprep.subr.bf16.mxu0 0
        %4075 = vmatpush1.bf16.msra.mxu0 %v4036
        %4076 = vmatprep.subr.bf16.mxu0 0
        %4077 = vmatpush1.bf16.msra.mxu0 %v4037
        %4078 = vmatprep.subr.bf16.mxu0 0
        %4079 = vmatpush1.bf16.msra.mxu0 %v4038
        %4080 = vmatprep.subr.bf16.mxu0 0
        %4081 = vmatpush1.bf16.msra.mxu0 %v4039
        %4082 = vmatprep.subr.bf16.mxu0 0
        %4083 = vmatpush1.bf16.msra.mxu0 %v4040
        %4084 = vmatprep.subr.bf16.mxu0 0
        %4085 = vmatpush1.bf16.msra.mxu0 %v4041
        %4086 = vmatprep.subr.bf16.mxu0 0
        %4087 = vmatpush1.bf16.msra.mxu0 %v4042
        %4088 = vmatprep.subr.bf16.mxu0 0
        %4089 = vmatpush1.bf16.msra.mxu0 0
        %4090 = vmatprep.subr.bf16.mxu0 0
        %4091 = vmatpush1.bf16.msra.mxu0 0
        %4092 = vmatprep.mubr.bf16.mxu0 %v4058
        %4093 = vmatmul.mubr.bf16.gmra.mrb[0].mxu0 %v3942
        %v4094 = vpop.f32.mrb[0].mxu0
        %v4095 = vadd.f32 0.0, %v4094
        %v4096 = vpop.f32.mrb[0].mxu0
        %v4097 = vpop.f32.mrb[0].mxu0
        %v4098 = vpop.f32.mrb[0].mxu0
        %4099 = vdwg.mxu0
        %v4100 = vadd.f32 %v3930, %v4095
        %v4102 = vlaneseq
        %v4103 = vshrl.u32 %v4102, 7
        %v4104 = vsub.s32 0, %v4103
        %v4105 = vrot.slane %v3252, %v4104
        %v4106 = vlaneseq
        %v4107 = vshrl.u32 %v4106, 7
        %v4108 = vsub.s32 2, %v4107
        %v4109 = vrot.slane %v3252, %v4108
        %v4112 = vpack.c.bf16 %v4105, %v4105
        %v4113 = vpack.c.bf16 %v4109, %v4109
        %s4114 = scalar_lea.vmem %s5, 560
        %v4115 = vld [vmem:[%s4114] sm:$0xf]
        %v4116 = vld [vmem:[%s4114 + $0x4] sm:$0xf]
        %v4117 = vld [vmem:[%s4114 + $0x8] sm:$0xf]
        %v4118 = vld [vmem:[%s4114 + $0xc] sm:$0xf]
        %v4119 = vld [vmem:[%s4114 + $0x10] sm:$0xf]
        %v4120 = vld [vmem:[%s4114 + $0x14] sm:$0xf]
        %v4121 = vld [vmem:[%s4114 + $0x18] sm:$0xf]
        %v4122 = vld [vmem:[%s4114 + $0x1c] sm:$0xf]
        %v4123 = vld [vmem:[%s4114 + $0x20] sm:$0xf]
        %v4124 = vld [vmem:[%s4114 + $0x24] sm:$0xf]
        %v4125 = vld [vmem:[%s4114 + $0x28] sm:$0xf]
        %v4126 = vld [vmem:[%s4114 + $0x2c] sm:$0xf]
        %v4127 = vld [vmem:[%s4114 + $0x30] sm:$0xf]
        %v4128 = vld [vmem:[%s4114 + $0x34] sm:$0xf]
        %v4129 = vld [vmem:[%s4114 + $0x38] sm:$0xf]
        %v4130 = vld [vmem:[%s4114 + $0x3c] sm:$0xf]
        %v4131 = vld [vmem:[%s4114 + $0x40] sm:$0xf]
        %v4132 = vld [vmem:[%s4114 + $0x44] sm:$0xf]
        %v4133 = vld [vmem:[%s4114 + $0x48] sm:$0xf]
        %v4134 = vld [vmem:[%s4114 + $0x4c] sm:$0xf]
        %v4135 = vld [vmem:[%s4114 + $0x50] sm:$0xf]
        %v4136 = vld [vmem:[%s4114 + $0x54] sm:$0xf]
        %v4137 = vld [vmem:[%s4114 + $0x58] sm:$0xf]
        %v4138 = vld [vmem:[%s4114 + $0x5c] sm:$0xf]
        %v4139 = vld [vmem:[%s4114 + $0x60] sm:$0xf]
        %v4140 = vld [vmem:[%s4114 + $0x64] sm:$0xf]
        %v4141 = vld [vmem:[%s4114 + $0x68] sm:$0xf]
        %v4142 = vld [vmem:[%s4114 + $0x6c] sm:$0xf]
        %v4171 = vunpack.c.l.b16 %v4115
        %v4172 = vunpack.c.l.b16 %v4116
        %v4173 = vunpack.c.l.b16 %v4117
        %v4174 = vunpack.c.l.b16 %v4118
        %v4175 = vunpack.c.l.b16 %v4119
        %v4176 = vunpack.c.l.b16 %v4120
        %v4177 = vunpack.c.l.b16 %v4121
        %v4178 = vunpack.c.l.b16 %v4122
        %v4179 = vunpack.c.l.b16 %v4123
        %v4180 = vunpack.c.l.b16 %v4124
        %v4181 = vunpack.c.l.b16 %v4125
        %v4182 = vunpack.c.l.b16 %v4126
        %v4183 = vunpack.c.l.b16 %v4127
        %v4184 = vunpack.c.l.b16 %v4128
        %v4185 = vunpack.c.l.b16 %v4129
        %v4186 = vunpack.c.l.b16 %v4130
        %v4187 = vunpack.c.l.b16 %v4131
        %v4188 = vunpack.c.l.b16 %v4132
        %v4189 = vunpack.c.l.b16 %v4133
        %v4190 = vunpack.c.l.b16 %v4134
        %v4191 = vunpack.c.l.b16 %v4135
        %v4192 = vunpack.c.l.b16 %v4136
        %v4193 = vunpack.c.l.b16 %v4137
        %v4194 = vunpack.c.l.b16 %v4138
        %v4195 = vunpack.c.l.b16 %v4139
        %v4196 = vunpack.c.l.b16 %v4140
        %v4197 = vunpack.c.l.b16 %v4141
        %v4198 = vunpack.c.l.b16 %v4142
        %v4199 = vpack.c.b16 %v4172, %v4171
        %v4200 = vpack.c.b16 %v4174, %v4173
        %v4201 = vpack.c.b16 %v4176, %v4175
        %v4202 = vpack.c.b16 %v4178, %v4177
        %v4203 = vpack.c.b16 %v4180, %v4179
        %v4204 = vpack.c.b16 %v4182, %v4181
        %v4205 = vpack.c.b16 %v4184, %v4183
        %v4206 = vpack.c.b16 %v4186, %v4185
        %v4207 = vpack.c.b16 %v4188, %v4187
        %v4208 = vpack.c.b16 %v4190, %v4189
        %v4209 = vpack.c.b16 %v4192, %v4191
        %v4210 = vpack.c.b16 %v4194, %v4193
        %v4211 = vpack.c.b16 %v4196, %v4195
        %v4212 = vpack.c.b16 %v4198, %v4197
        %v4228 = vsel %vm2215, %v4113, 0
        %4230 = vmatprep.subr.bf16.mxu0 0
        %4231 = vmatpush1.bf16.msra.mxu0 %v4199
        %4232 = vmatprep.subr.bf16.mxu0 0
        %4233 = vmatpush1.bf16.msra.mxu0 %v4200
        %4234 = vmatprep.subr.bf16.mxu0 0
        %4235 = vmatpush1.bf16.msra.mxu0 %v4201
        %4236 = vmatprep.subr.bf16.mxu0 0
        %4237 = vmatpush1.bf16.msra.mxu0 %v4202
        %4238 = vmatprep.subr.bf16.mxu0 0
        %4239 = vmatpush1.bf16.msra.mxu0 %v4203
        %4240 = vmatprep.subr.bf16.mxu0 0
        %4241 = vmatpush1.bf16.msra.mxu0 %v4204
        %4242 = vmatprep.subr.bf16.mxu0 0
        %4243 = vmatpush1.bf16.msra.mxu0 %v4205
        %4244 = vmatprep.subr.bf16.mxu0 0
        %4245 = vmatpush1.bf16.msra.mxu0 %v4206
        %4246 = vmatprep.subr.bf16.mxu0 0
        %4247 = vmatpush1.bf16.msra.mxu0 %v4207
        %4248 = vmatprep.subr.bf16.mxu0 0
        %4249 = vmatpush1.bf16.msra.mxu0 %v4208
        %4250 = vmatprep.subr.bf16.mxu0 0
        %4251 = vmatpush1.bf16.msra.mxu0 %v4209
        %4252 = vmatprep.subr.bf16.mxu0 0
        %4253 = vmatpush1.bf16.msra.mxu0 %v4210
        %4254 = vmatprep.subr.bf16.mxu0 0
        %4255 = vmatpush1.bf16.msra.mxu0 %v4211
        %4256 = vmatprep.subr.bf16.mxu0 0
        %4257 = vmatpush1.bf16.msra.mxu0 %v4212
        %4258 = vmatprep.subr.bf16.mxu0 0
        %4259 = vmatpush1.bf16.msra.mxu0 0
        %4260 = vmatprep.subr.bf16.mxu0 0
        %4261 = vmatpush1.bf16.msra.mxu0 0
        %4262 = vmatprep.mubr.bf16.mxu0 %v4228
        %4263 = vmatmul.mubr.bf16.gmra.mrb[0].mxu0 %v4112
        %v4264 = vpop.f32.mrb[0].mxu0
        %v4265 = vadd.f32 0.0, %v4264
        %v4266 = vpop.f32.mrb[0].mxu0
        %v4267 = vpop.f32.mrb[0].mxu0
        %v4268 = vpop.f32.mrb[0].mxu0
        %4269 = vdwg.mxu0
        %v4270 = vadd.f32 %v4100, %v4265
        %v4272 = vlaneseq
        %v4273 = vshrl.u32 %v4272, 7
        %v4274 = vsub.s32 0, %v4273
        %v4275 = vrot.slane %v3253, %v4274
        %v4276 = vlaneseq
        %v4277 = vshrl.u32 %v4276, 7
        %v4278 = vsub.s32 2, %v4277
        %v4279 = vrot.slane %v3253, %v4278
        %v4282 = vpack.c.bf16 %v4275, %v4275
        %v4283 = vpack.c.bf16 %v4279, %v4279
        %s4284 = scalar_lea.vmem %s5, 672
        %v4285 = vld [vmem:[%s4284] sm:$0xf]
        %v4286 = vld [vmem:[%s4284 + $0x4] sm:$0xf]
        %v4287 = vld [vmem:[%s4284 + $0x8] sm:$0xf]
        %v4288 = vld [vmem:[%s4284 + $0xc] sm:$0xf]
        %v4289 = vld [vmem:[%s4284 + $0x10] sm:$0xf]
        %v4290 = vld [vmem:[%s4284 + $0x14] sm:$0xf]
        %v4291 = vld [vmem:[%s4284 + $0x18] sm:$0xf]
        %v4292 = vld [vmem:[%s4284 + $0x1c] sm:$0xf]
        %v4293 = vld [vmem:[%s4284 + $0x20] sm:$0xf]
        %v4294 = vld [vmem:[%s4284 + $0x24] sm:$0xf]
        %v4295 = vld [vmem:[%s4284 + $0x28] sm:$0xf]
        %v4296 = vld [vmem:[%s4284 + $0x2c] sm:$0xf]
        %v4297 = vld [vmem:[%s4284 + $0x30] sm:$0xf]
        %v4298 = vld [vmem:[%s4284 + $0x34] sm:$0xf]
        %v4299 = vld [vmem:[%s4284 + $0x38] sm:$0xf]
        %v4300 = vld [vmem:[%s4284 + $0x3c] sm:$0xf]
        %v4301 = vld [vmem:[%s4284 + $0x40] sm:$0xf]
        %v4302 = vld [vmem:[%s4284 + $0x44] sm:$0xf]
        %v4303 = vld [vmem:[%s4284 + $0x48] sm:$0xf]
        %v4304 = vld [vmem:[%s4284 + $0x4c] sm:$0xf]
        %v4305 = vld [vmem:[%s4284 + $0x50] sm:$0xf]
        %v4306 = vld [vmem:[%s4284 + $0x54] sm:$0xf]
        %v4307 = vld [vmem:[%s4284 + $0x58] sm:$0xf]
        %v4308 = vld [vmem:[%s4284 + $0x5c] sm:$0xf]
        %v4309 = vld [vmem:[%s4284 + $0x60] sm:$0xf]
        %v4310 = vld [vmem:[%s4284 + $0x64] sm:$0xf]
        %v4311 = vld [vmem:[%s4284 + $0x68] sm:$0xf]
        %v4312 = vld [vmem:[%s4284 + $0x6c] sm:$0xf]
        %v4341 = vunpack.c.l.b16 %v4285
        %v4342 = vunpack.c.l.b16 %v4286
        %v4343 = vunpack.c.l.b16 %v4287
        %v4344 = vunpack.c.l.b16 %v4288
        %v4345 = vunpack.c.l.b16 %v4289
        %v4346 = vunpack.c.l.b16 %v4290
        %v4347 = vunpack.c.l.b16 %v4291
        %v4348 = vunpack.c.l.b16 %v4292
        %v4349 = vunpack.c.l.b16 %v4293
        %v4350 = vunpack.c.l.b16 %v4294
        %v4351 = vunpack.c.l.b16 %v4295
        %v4352 = vunpack.c.l.b16 %v4296
        %v4353 = vunpack.c.l.b16 %v4297
        %v4354 = vunpack.c.l.b16 %v4298
        %v4355 = vunpack.c.l.b16 %v4299
        %v4356 = vunpack.c.l.b16 %v4300
        %v4357 = vunpack.c.l.b16 %v4301
        %v4358 = vunpack.c.l.b16 %v4302
        %v4359 = vunpack.c.l.b16 %v4303
        %v4360 = vunpack.c.l.b16 %v4304
        %v4361 = vunpack.c.l.b16 %v4305
        %v4362 = vunpack.c.l.b16 %v4306
        %v4363 = vunpack.c.l.b16 %v4307
        %v4364 = vunpack.c.l.b16 %v4308
        %v4365 = vunpack.c.l.b16 %v4309
        %v4366 = vunpack.c.l.b16 %v4310
        %v4367 = vunpack.c.l.b16 %v4311
        %v4368 = vunpack.c.l.b16 %v4312
        %v4369 = vpack.c.b16 %v4342, %v4341
        %v4370 = vpack.c.b16 %v4344, %v4343
        %v4371 = vpack.c.b16 %v4346, %v4345
        %v4372 = vpack.c.b16 %v4348, %v4347
        %v4373 = vpack.c.b16 %v4350, %v4349
        %v4374 = vpack.c.b16 %v4352, %v4351
        %v4375 = vpack.c.b16 %v4354, %v4353
        %v4376 = vpack.c.b16 %v4356, %v4355
        %v4377 = vpack.c.b16 %v4358, %v4357
        %v4378 = vpack.c.b16 %v4360, %v4359
        %v4379 = vpack.c.b16 %v4362, %v4361
        %v4380 = vpack.c.b16 %v4364, %v4363
        %v4381 = vpack.c.b16 %v4366, %v4365
        %v4382 = vpack.c.b16 %v4368, %v4367
        %v4398 = vsel %vm2215, %v4283, 0
        %4400 = vmatprep.subr.bf16.mxu0 0
        %4401 = vmatpush1.bf16.msra.mxu0 %v4369
        %4402 = vmatprep.subr.bf16.mxu0 0
        %4403 = vmatpush1.bf16.msra.mxu0 %v4370
        %4404 = vmatprep.subr.bf16.mxu0 0
        %4405 = vmatpush1.bf16.msra.mxu0 %v4371
        %4406 = vmatprep.subr.bf16.mxu0 0
        %4407 = vmatpush1.bf16.msra.mxu0 %v4372
        %4408 = vmatprep.subr.bf16.mxu0 0
        %4409 = vmatpush1.bf16.msra.mxu0 %v4373
        %4410 = vmatprep.subr.bf16.mxu0 0
        %4411 = vmatpush1.bf16.msra.mxu0 %v4374
        %4412 = vmatprep.subr.bf16.mxu0 0
        %4413 = vmatpush1.bf16.msra.mxu0 %v4375
        %4414 = vmatprep.subr.bf16.mxu0 0
        %4415 = vmatpush1.bf16.msra.mxu0 %v4376
        %4416 = vmatprep.subr.bf16.mxu0 0
        %4417 = vmatpush1.bf16.msra.mxu0 %v4377
        %4418 = vmatprep.subr.bf16.mxu0 0
        %4419 = vmatpush1.bf16.msra.mxu0 %v4378
        %4420 = vmatprep.subr.bf16.mxu0 0
        %4421 = vmatpush1.bf16.msra.mxu0 %v4379
        %4422 = vmatprep.subr.bf16.mxu0 0
        %4423 = vmatpush1.bf16.msra.mxu0 %v4380
        %4424 = vmatprep.subr.bf16.mxu0 0
        %4425 = vmatpush1.bf16.msra.mxu0 %v4381
        %4426 = vmatprep.subr.bf16.mxu0 0
        %4427 = vmatpush1.bf16.msra.mxu0 %v4382
        %4428 = vmatprep.subr.bf16.mxu0 0
        %4429 = vmatpush1.bf16.msra.mxu0 0
        %4430 = vmatprep.subr.bf16.mxu0 0
        %4431 = vmatpush1.bf16.msra.mxu0 0
        %4432 = vmatprep.mubr.bf16.mxu0 %v4398
        %4433 = vmatmul.mubr.bf16.gmra.mrb[0].mxu0 %v4282
        %v4434 = vpop.f32.mrb[0].mxu0
        %v4435 = vadd.f32 0.0, %v4434
        %v4436 = vpop.f32.mrb[0].mxu0
        %v4437 = vpop.f32.mrb[0].mxu0
        %v4438 = vpop.f32.mrb[0].mxu0
        %4439 = vdwg.mxu0
        %v4440 = vadd.f32 %v4270, %v4435
        %v4441 = vld [vmem:[%s6] sm:$0x1]
        %v4442 = vadd.f32 %v4440, %v4441
        %v4443 = vmax.f32 %v4442, 0.0
        %v4444 = vpack.c.bf16 %v4443, %v4443
        %v4445 = vld [vmem:[%s7] sm:$0xf]
        %v4446 = vld [vmem:[%s7 + $0x4] sm:$0xf]
        %v4447 = vld [vmem:[%s7 + $0x8] sm:$0xf]
        %v4448 = vld [vmem:[%s7 + $0xc] sm:$0xf]
        %v4449 = vld [vmem:[%s8] sm:$0x1]
        %v4454 = vunpack.c.l.b16 %v4445
        %v4455 = vunpack.c.l.b16 %v4446
        %v4456 = vunpack.c.l.b16 %v4447
        %v4457 = vunpack.c.l.b16 %v4448
        %v4458 = vpack.c.b16 %v4455, %v4454
        %v4459 = vpack.c.b16 %v4457, %v4456
        %v4463 = vsel %vm1336, %v4444, 0
        %4465 = vmatprep.subr.bf16.mxu0 0
        %4466 = vmatpush1.bf16.msra.mxu0 %v4458
        %4467 = vmatprep.subr.bf16.mxu0 0
        %4468 = vmatpush1.bf16.msra.mxu0 %v4459
        %4469 = vmatprep.subr.bf16.mxu0 0
        %4470 = vmatpush1.bf16.msra.mxu0 0
        %4471 = vmatprep.subr.bf16.mxu0 0
        %4472 = vmatpush1.bf16.msra.mxu0 0
        %4473 = vmatprep.subr.bf16.mxu0 0
        %4474 = vmatpush1.bf16.msra.mxu0 0
        %4475 = vmatprep.subr.bf16.mxu0 0
        %4476 = vmatpush1.bf16.msra.mxu0 0
        %4477 = vmatprep.subr.bf16.mxu0 0
        %4478 = vmatpush1.bf16.msra.mxu0 0
        %4479 = vmatprep.subr.bf16.mxu0 0
        %4480 = vmatpush1.bf16.msra.mxu0 0
        %4481 = vmatprep.subr.bf16.mxu0 0
        %4482 = vmatpush1.bf16.msra.mxu0 0
        %4483 = vmatprep.subr.bf16.mxu0 0
        %4484 = vmatpush1.bf16.msra.mxu0 0
        %4485 = vmatprep.subr.bf16.mxu0 0
        %4486 = vmatpush1.bf16.msra.mxu0 0
        %4487 = vmatprep.subr.bf16.mxu0 0
        %4488 = vmatpush1.bf16.msra.mxu0 0
        %4489 = vmatprep.subr.bf16.mxu0 0
        %4490 = vmatpush1.bf16.msra.mxu0 0
        %4491 = vmatprep.subr.bf16.mxu0 0
        %4492 = vmatpush1.bf16.msra.mxu0 0
        %4493 = vmatprep.subr.bf16.mxu0 0
        %4494 = vmatpush1.bf16.msra.mxu0 0
        %4495 = vmatprep.subr.bf16.mxu0 0
        %4496 = vmatpush1.bf16.msra.mxu0 0
        %4497 = vmatprep.mubr.bf16.mxu0 0
        %4498 = vmatmul.mubr.bf16.gmra.mrb[0].mxu0 %v4463
        %v4499 = vpop.f32.mrb[0].mxu0
        %v4500 = vadd.f32 %v4449, %v4499
        %v4501 = vpop.f32.mrb[0].mxu0
        %v4502 = vpop.f32.mrb[0].mxu0
        %v4503 = vpop.f32.mrb[0].mxu0
        %4504 = vdwg.mxu0
        %v4505 = vmax.f32 %v4500, 0.0
        %v4506 = vpack.c.bf16 %v4505, %v4505
        %v4507 = vld [vmem:[%s9] sm:$0xf]
        %v4508 = vld [vmem:[%s9 + $0x4] sm:$0xf]
        %v4509 = vld [vmem:[%s10] sm:$0x1]
        %v4512 = vunpack.c.l.b16 %v4507
        %v4513 = vunpack.c.l.b16 %v4508
        %v4514 = vpack.c.b16 %v4513, %v4512
        %vm4516 = vcmask 130048
        %v4518 = vsel %vm4516, %v4506, 0
        %4520 = vmatprep.subr.bf16.mxu0 0
        %4521 = vmatpush1.bf16.msra.mxu0 %v4514
        %4522 = vmatprep.subr.bf16.mxu0 0
        %4523 = vmatpush1.bf16.msra.mxu0 0
        %4524 = vmatprep.subr.bf16.mxu0 0
        %4525 = vmatpush1.bf16.msra.mxu0 0
        %4526 = vmatprep.subr.bf16.mxu0 0
        %4527 = vmatpush1.bf16.msra.mxu0 0
        %4528 = vmatprep.subr.bf16.mxu0 0
        %4529 = vmatpush1.bf16.msra.mxu0 0
        %4530 = vmatprep.subr.bf16.mxu0 0
        %4531 = vmatpush1.bf16.msra.mxu0 0
        %4532 = vmatprep.subr.bf16.mxu0 0
        %4533 = vmatpush1.bf16.msra.mxu0 0
        %4534 = vmatprep.subr.bf16.mxu0 0
        %4535 = vmatpush1.bf16.msra.mxu0 0
        %4536 = vmatprep.subr.bf16.mxu0 0
        %4537 = vmatpush1.bf16.msra.mxu0 0
        %4538 = vmatprep.subr.bf16.mxu0 0
        %4539 = vmatpush1.bf16.msra.mxu0 0
        %4540 = vmatprep.subr.bf16.mxu0 0
        %4541 = vmatpush1.bf16.msra.mxu0 0
        %4542 = vmatprep.subr.bf16.mxu0 0
        %4543 = vmatpush1.bf16.msra.mxu0 0
        %4544 = vmatprep.subr.bf16.mxu0 0
        %4545 = vmatpush1.bf16.msra.mxu0 0
        %4546 = vmatprep.subr.bf16.mxu0 0
        %4547 = vmatpush1.bf16.msra.mxu0 0
        %4548 = vmatprep.subr.bf16.mxu0 0
        %4549 = vmatpush1.bf16.msra.mxu0 0
        %4550 = vmatprep.subr.bf16.mxu0 0
        %4551 = vmatpush1.bf16.msra.mxu0 0
        %4552 = vmatprep.mubr.bf16.mxu0 0
        %4553 = vmatmul.mubr.bf16.gmra.mrb[0].mxu0 %v4518
        %v4554 = vpop.f32.mrb[0].mxu0
        %v4555 = vadd.f32 %v4509, %v4554
        %v4556 = vpop.f32.mrb[0].mxu0
        %v4557 = vpop.f32.mrb[0].mxu0
        %v4558 = vpop.f32.mrb[0].mxu0
        %4559 = vdwg.mxu0
        %vm4560 = vcmask 24576
        %4561 = vst.msk [vmem:[%s393] sm:$0x1] %vm4560, %v4555
        %s4562 = sand.u32 %s270, 1
        %s4563 = scalar_lea.sflag [#allocation4], %s4562
        %s4564 = sand.u32 %s270, 1
        %s4565 = scalar_lea.vmem [#allocation5], %s4564
        // Predicated region
        $region69: #{forward.1} parent=63 // pred_check
          %p4566 = pneg %p280
        $region70: #{forward.1} parent=63 // pred_check_branch
          %4568 = sbr.rel (%p4566) target = $region72
        $region71: #{forward.1} parent=63 // pred_region
          %s4570 = ssub.s32 16, 16
          %4571 = vsyncadd %s4563, %s4570
          %s4572 = smul.addr %s26, 16
          %s4573 = scalar_lea.hbm %s11, %s4572
          %s4575 = sshll.u32 %s4565, 4
          %s4576 = int_to_ptr.vmem [resolvable:$true] %s4575
          %4578 = dma.vmem_to_hbm [thread:$0]  %s4576, 16, %s4573, %s4563
        $region72: #{forward.1} parent=63 // pred_fallthru
          _
      $region64: #{forward.1} parent=5 // pred_fallthru
        _
      %p4579 = scmp.le.s32.totalorder 2, %s21
      // Predicated region
      $region73: #{forward.1} parent=5 // pred_check
        %p4580 = pneg %p4579
      $region74: #{forward.1} parent=5 // pred_check_branch
        %4582 = sbr.rel (%p4580) target = $region76
      $region75: #{forward.1} parent=5 // pred_region
        %s4583 = ssub.s32 %s21, 2
        // Predicated region
        $region77: #{forward.1} parent=75 // pred_check
          %p4584 = pneg %p286
        $region78: #{forward.1} parent=75 // pred_check_branch
          %4586 = sbr.rel (%p4584) target = $region80
        $region79: #{forward.1} parent=75 // pred_region
          %s4587 = sand.u32 %s271, 1
          %s4588 = scalar_lea.sflag [#allocation4], %s4587
          %s4589 = sand.u32 %s271, 1
          %s4590 = scalar_lea.vmem [#allocation5], %s4589
          %4591 = dma.done %s4588, 16
        $region80: #{forward.1} parent=75 // pred_fallthru
          _
      $region76: #{forward.1} parent=5 // pred_fallthru
        _
    $region6: #{forward.1} parent=1 // loop_footer
      %s25 = sadd.s32 1, %s21
    $region7: #{forward.1} parent=1 // loop_footer_branch
      %20 = sbr.rel target = $region3
    $region8: #{forward.1} parent=1 // loop_exit
      _
    %4592 = vsyncpa [#allocation3], 1
    %s4593 = scalar_lea.sflag [#allocation3], 1
    %4594 = vsyncpa %s4593, 1
    %4595 = vsyncpa [#allocation4], 1
    %s4596 = scalar_lea.sflag [#allocation4], 1
    %4597 = vsyncpa %s4596, 1

</llo_original>
